<compile_context>
chip_gen: v5e
topology: v5e:2x2
jax: 0.10.0
libtpu: 0.0.40
codegen_flags: <defaults>
</compile_context>

<pallas_src>
import jax
import jax.numpy as jnp
from jax.experimental import pallas as pl
from jax.experimental.pallas import tpu as pltpu


# ---------------------------------------------------------------------------
# Fixed layer dimensions (implied by the PyTorch module: Linear(21*10) forces L=100)
# ---------------------------------------------------------------------------
L_IN = 100                      # input length
K = 7                           # conv kernel size
C1 = 10                         # conv1 out channels
C2 = 10                         # conv2 out channels
T1 = (L_IN - K) // 2 + 1        # 47
T2 = (T1 - K) // 2 + 1          # 21
D_FLAT = T2 * C2                # 210
D_OUT = 2

# Padded (lane-friendly) folded dims: 470 -> 512, 210 -> 256.
D1_PAD = 512
D2_PAD = 256

# Batch tile: multiple of 256 (v6e/v7x MXU M granularity) and of 128 (v5e).
# Per-step VMEM footprint (~3 MB) fits every generation's scoped-VMEM default.
TM = 512


# ---------------------------------------------------------------------------
# Fused per-tile kernel: three MXU matmuls + bias + ReLU, all VMEM-resident
# ---------------------------------------------------------------------------
def _fused_forward_kernel(x_ref, a1_ref, b1_ref, a2_ref, b2_ref, wl_ref, bl_ref, o_ref):
    """
    x_ref : (TM, 100)      f32 input tile (channel dim squeezed)
    a1_ref: (100, 512)     bf16 conv1 as dense matmul, cols ordered (t, cout), zero-padded
    b1_ref: (1, 512)       f32
    a2_ref: (512, 256)     bf16 conv2 as dense matmul, cols ordered (t, cout), zero-padded
    b2_ref: (1, 256)       f32
    wl_ref: (256, 2)       bf16 Linear weight, rows permuted to (t, cout) order, zero-padded
    bl_ref: (1, 2)         f32
    o_ref : (TM, 2)        f32 output tile
    """
    xb = x_ref[...].astype(jnp.bfloat16)

    h1 = jnp.dot(xb, a1_ref[...], preferred_element_type=jnp.float32) + b1_ref[...]
    h1 = jnp.maximum(h1, 0.0).astype(jnp.bfloat16)          # f32 bias+ReLU, bf16 for next dot

    h2 = jnp.dot(h1, a2_ref[...], preferred_element_type=jnp.float32) + b2_ref[...]
    h2 = jnp.maximum(h2, 0.0).astype(jnp.bfloat16)

    y = jnp.dot(h2, wl_ref[...], preferred_element_type=jnp.float32) + bl_ref[...]
    o_ref[...] = y.astype(o_ref.dtype)


@jax.jit
def model_nonlinear_forward(x, packed):
    """x: (N, 1, 100) NCW input; packed: output of prepare_params()."""
    a1, b1f, a2, b2f, wlp, blf = packed
    n, cin, length = x.shape
    if cin != 1 or length != L_IN:
        raise ValueError(f"expected input (N, 1, {L_IN}), got {x.shape}")

    xw = x.reshape(n, length)                     # (N,1,100) -> (N,100): metadata-only

    # Pad batch to a multiple of TM (trace-time branch; no-op when already aligned).
    n_pad = int(pl.cdiv(n, TM)) * TM
    if n_pad != n:
        xw = jnp.pad(xw, ((0, n_pad - n), (0, 0)))
    n_blocks = n_pad // TM

    weight_bytes = (L_IN * D1_PAD + D1_PAD * D2_PAD + D2_PAD * D_OUT) * 2 \
                   + (D1_PAD + D2_PAD + D_OUT) * 4
    cost = pl.CostEstimate(
        flops=2 * n_pad * (L_IN * D1_PAD + D1_PAD * D2_PAD + D2_PAD * D_OUT),
        transcendentals=0,
        bytes_accessed=n_pad * (L_IN * 4 + D_OUT * 4) + weight_bytes,
    )

    out = pl.pallas_call(
        _fused_forward_kernel,
        out_shape=jax.ShapeDtypeStruct((n_pad, D_OUT), jnp.float32),
        grid=(n_blocks,),
        in_specs=[
            pl.BlockSpec((TM, L_IN), lambda i: (i, 0)),          # streamed x tile
            pl.BlockSpec((L_IN, D1_PAD), lambda i: (0, 0)),      # weights: constant index map
            pl.BlockSpec((1, D1_PAD), lambda i: (0, 0)),         #  -> DMA'd once, VMEM-resident
            pl.BlockSpec((D1_PAD, D2_PAD), lambda i: (0, 0)),
            pl.BlockSpec((1, D2_PAD), lambda i: (0, 0)),
            pl.BlockSpec((D2_PAD, D_OUT), lambda i: (0, 0)),
            pl.BlockSpec((1, D_OUT), lambda i: (0, 0)),
        ],
        out_specs=pl.BlockSpec((TM, D_OUT), lambda i: (i, 0)),
        compiler_params=pltpu.CompilerParams(dimension_semantics=("parallel",)),
        cost_estimate=cost,
    )(xw, a1, b1f, a2, b2f, wlp, blf)

    if n_pad != n:
        out = out[:n]
    return out


# ---------------------------------------------------------------------------
# One-time parameter repacking (hoisted out of the hot path)
# ---------------------------------------------------------------------------
def prepare_params(w1, b1, w2, b2, wl, bl):
    """Lower both convs to dense matrices, fold the flatten permutation into wl,
    zero-pad to lane-friendly widths (512 / 256), and cast weights to bf16.

    Column layout of both conv matrices is (t * C + cout); the Linear weight rows
    are permuted from PyTorch's (cout * T2 + t) to match, so no activation
    transpose/reshape is ever needed at inference time.  Padded rows/cols are zero
    (and the padded bias entries are zero), so ReLU(0)=0 and the padding contributes
    nothing — results match the unpadded math exactly.
    """
    w1 = w1.astype(jnp.float32)
    w2 = w2.astype(jnp.float32)
    wl = wl.astype(jnp.float32)

    # A1[2t+k, t*C1 + c] = w1[c, 0, k]
    tt, kk, cc = jnp.meshgrid(jnp.arange(T1), jnp.arange(K), jnp.arange(C1), indexing="ij")
    a1 = (jnp.zeros((L_IN, D1_PAD), jnp.float32)
          .at[2 * tt + kk, tt * C1 + cc].set(w1[cc, 0, kk]))
    b1f = (jnp.zeros((1, D1_PAD), jnp.float32)
           .at[0, :T1 * C1].set(jnp.tile(b1.astype(jnp.float32), T1)))

    # A2[(2s+k)*C1 + cin, s*C2 + cout] = w2[cout, cin, k]
    ss, kk2, ci, co = jnp.meshgrid(
        jnp.arange(T2), jnp.arange(K), jnp.arange(C1), jnp.arange(C2), indexing="ij")
    a2 = (jnp.zeros((D1_PAD, D2_PAD), jnp.float32)
          .at[(2 * ss + kk2) * C1 + ci, ss * C2 + co].set(w2[co, ci, kk2]))
    b2f = (jnp.zeros((1, D2_PAD), jnp.float32)
           .at[0, :T2 * C2].set(jnp.tile(b2.astype(jnp.float32), T2)))

    # WL[s*C2 + cout, j] = wl[j, cout*T2 + s]   (folds PyTorch (C, T) flatten order)
    ss2, co2, jj = jnp.meshgrid(jnp.arange(T2), jnp.arange(C2), jnp.arange(D_OUT), indexing="ij")
    wlp = (jnp.zeros((D2_PAD, D_OUT), jnp.float32)
           .at[ss2 * C2 + co2, jj].set(wl[jj, co2 * T2 + ss2]))
    blf = bl.astype(jnp.float32).reshape(1, D_OUT)

    return (a1.astype(jnp.bfloat16), b1f,
            a2.astype(jnp.bfloat16), b2f,
            wlp.astype(jnp.bfloat16), blf)


# ---------------------------------------------------------------------------
# Pure-JAX reference (lax.conv, f32) for a semantics check against raw parameters
# ---------------------------------------------------------------------------
def reference_forward(x, params):
    w1, b1, w2, b2, wl, bl = params
    dn1 = jax.lax.conv_dimension_numbers(x.shape, w1.shape, ("NCH", "OIH", "NCH"))
    h1 = jax.lax.conv_general_dilated(x, w1, (2,), "VALID", dimension_numbers=dn1)
    h1 = jnp.maximum(h1 + b1[None, :, None], 0.0)
    dn2 = jax.lax.conv_dimension_numbers(h1.shape, w2.shape, ("NCH", "OIH", "NCH"))
    h2 = jax.lax.conv_general_dilated(h1, w2, (2,), "VALID", dimension_numbers=dn2)
    h2 = jnp.maximum(h2 + b2[None, :, None], 0.0)
    flat = h2.reshape(x.shape[0], -1)
    return flat @ wl.T + bl


if __name__ == "__main__":
    key = jax.random.PRNGKey(0)
    ks = jax.random.split(key, 8)

    # Deterministic synthetic parameters (shapes from the nn.Module __init__).
    w1 = jax.random.normal(ks[1], (C1, 1, K), jnp.float32) * 0.3    # Conv1d(1, 10, 7)
    b1 = jax.random.normal(ks[2], (C1,), jnp.float32) * 0.1
    w2 = jax.random.normal(ks[3], (C2, C1, K), jnp.float32) * 0.1   # Conv1d(10, 10, 7)
    b2 = jax.random.normal(ks[4], (C2,), jnp.float32) * 0.1
    wl = jax.random.normal(ks[5], (D_OUT, D_FLAT), jnp.float32) * 0.05  # Linear(210, 2)
    bl = jax.random.normal(ks[6], (D_OUT,), jnp.float32) * 0.1
    params = (w1, b1, w2, b2, wl, bl)

    packed = jax.block_until_ready(prepare_params(*params))   # one-time repack

    # Two batch sizes: tiny (tail-padded single block) and >TM (multi-block grid + tail).
    for n, xkey in ((2, ks[0]), (700, ks[7])):
        x = jax.random.normal(xkey, (n, 1, L_IN), jnp.float32)
        y = jax.block_until_ready(model_nonlinear_forward(x, packed))
        y_ref = jax.block_until_ready(reference_forward(x, params))
        assert y.shape == (n, D_OUT) and y.dtype == jnp.float32
        # bf16 weights / activations with f32 accumulation: ~1e-3 typical error.
        assert jnp.allclose(y, y_ref, atol=2e-2, rtol=2e-2), (n, y[:4], y_ref[:4])

    print("KERNEL_OK")
</pallas_src>

<mosaic_0001>
module attributes {stable_mosaic.version = 11 : i64} {
  func.func @_fused_forward_kernel(%arg0: i32, %arg1: memref<512x100xf32, #tpu.memory_space<vmem>>, %arg2: memref<100x512xbf16, #tpu.memory_space<vmem>>, %arg3: memref<1x512xf32, #tpu.memory_space<vmem>>, %arg4: memref<512x256xbf16, #tpu.memory_space<vmem>>, %arg5: memref<1x256xf32, #tpu.memory_space<vmem>>, %arg6: memref<256x2xbf16, #tpu.memory_space<vmem>>, %arg7: memref<1x2xf32, #tpu.memory_space<vmem>>, %arg8: memref<512x2xf32, #tpu.memory_space<vmem>>) attributes {dimension_semantics = [#tpu.dimension_semantics<parallel>], iteration_bounds = array<i64: 1>, scalar_prefetch = 0 : i64, scratch_operands = 0 : i64, tpu.core_type = #tpu.core_type<tc>, window_params = [{transform_indices = @transform_0, window_bounds = array<i64: 512, 100>}, {pipeline_mode = #tpu.pipeline_mode<synchronous>, transform_indices = @transform_1, window_bounds = array<i64: 100, 512>}, {pipeline_mode = #tpu.pipeline_mode<synchronous>, transform_indices = @transform_2, window_bounds = array<i64: 1, 512>}, {pipeline_mode = #tpu.pipeline_mode<synchronous>, transform_indices = @transform_3, window_bounds = array<i64: 512, 256>}, {pipeline_mode = #tpu.pipeline_mode<synchronous>, transform_indices = @transform_4, window_bounds = array<i64: 1, 256>}, {pipeline_mode = #tpu.pipeline_mode<synchronous>, transform_indices = @transform_5, window_bounds = array<i64: 256, 2>}, {pipeline_mode = #tpu.pipeline_mode<synchronous>, transform_indices = @transform_6, window_bounds = array<i64: 1, 2>}, {transform_indices = @transform_7, window_bounds = array<i64: 512, 2>}]} {
    %c0 = arith.constant 0 : index
    %c0_0 = arith.constant 0 : index
    %0 = vector.load %arg1[%c0, %c0_0] : memref<512x100xf32, #tpu.memory_space<vmem>>, vector<512x100xf32>
    %1 = arith.truncf %0 : vector<512x100xf32> to vector<512x100xbf16>
    %c0_1 = arith.constant 0 : index
    %c0_2 = arith.constant 0 : index
    %2 = vector.load %arg2[%c0_1, %c0_2] : memref<100x512xbf16, #tpu.memory_space<vmem>>, vector<100x512xbf16>
    %cst = arith.constant dense<0.000000e+00> : vector<512x512xf32>
    %3 = tpu.matmul %1, %2, %cst {dimension_numbers = #tpu.dot_dimension_numbers<[1], [0], [0], [1], [0, 0, 1, 1], [], []>} : vector<512x100xbf16>, vector<100x512xbf16>, vector<512x512xf32> -> vector<512x512xf32>
    %c0_3 = arith.constant 0 : index
    %c0_4 = arith.constant 0 : index
    %4 = vector.load %arg3[%c0_3, %c0_4] : memref<1x512xf32, #tpu.memory_space<vmem>>, vector<1x512xf32>
    %5 = vector.broadcast %4 : vector<1x512xf32> to vector<512x512xf32>
    %6 = arith.addf %3, %5 : vector<512x512xf32>
    %cst_5 = arith.constant 0.000000e+00 : f32
    %7 = vector.broadcast %cst_5 : f32 to vector<512x512xf32>
    %8 = arith.maximumf %6, %7 : vector<512x512xf32>
    %9 = arith.truncf %8 : vector<512x512xf32> to vector<512x512xbf16>
    %c0_6 = arith.constant 0 : index
    %c0_7 = arith.constant 0 : index
    %10 = vector.load %arg4[%c0_6, %c0_7] : memref<512x256xbf16, #tpu.memory_space<vmem>>, vector<512x256xbf16>
    %cst_8 = arith.constant dense<0.000000e+00> : vector<512x256xf32>
    %11 = tpu.matmul %9, %10, %cst_8 {dimension_numbers = #tpu.dot_dimension_numbers<[1], [0], [0], [1], [0, 0, 1, 1], [], []>} : vector<512x512xbf16>, vector<512x256xbf16>, vector<512x256xf32> -> vector<512x256xf32>
    %c0_9 = arith.constant 0 : index
    %c0_10 = arith.constant 0 : index
    %12 = vector.load %arg5[%c0_9, %c0_10] : memref<1x256xf32, #tpu.memory_space<vmem>>, vector<1x256xf32>
    %13 = vector.broadcast %12 : vector<1x256xf32> to vector<512x256xf32>
    %14 = arith.addf %11, %13 : vector<512x256xf32>
    %cst_11 = arith.constant 0.000000e+00 : f32
    %15 = vector.broadcast %cst_11 : f32 to vector<512x256xf32>
    %16 = arith.maximumf %14, %15 : vector<512x256xf32>
    %17 = arith.truncf %16 : vector<512x256xf32> to vector<512x256xbf16>
    %c0_12 = arith.constant 0 : index
    %c0_13 = arith.constant 0 : index
    %18 = vector.load %arg6[%c0_12, %c0_13] : memref<256x2xbf16, #tpu.memory_space<vmem>>, vector<256x2xbf16>
    %cst_14 = arith.constant dense<0.000000e+00> : vector<512x2xf32>
    %19 = tpu.matmul %17, %18, %cst_14 {dimension_numbers = #tpu.dot_dimension_numbers<[1], [0], [0], [1], [0, 0, 1, 1], [], []>} : vector<512x256xbf16>, vector<256x2xbf16>, vector<512x2xf32> -> vector<512x2xf32>
    %c0_15 = arith.constant 0 : index
    %c0_16 = arith.constant 0 : index
    %20 = vector.load %arg7[%c0_15, %c0_16] : memref<1x2xf32, #tpu.memory_space<vmem>>, vector<1x2xf32>
    %21 = vector.broadcast %20 : vector<1x2xf32> to vector<512x2xf32>
    %22 = arith.addf %19, %21 : vector<512x2xf32>
    %c0_17 = arith.constant 0 : index
    %c0_18 = arith.constant 0 : index
    %23 = vector.load %arg8[%c0_17, %c0_18] : memref<512x2xf32, #tpu.memory_space<vmem>>, vector<512x2xf32>
    tpu.vector_store %arg8[%c0_17, %c0_18], %22 {strides = array<i32>} : memref<512x2xf32, #tpu.memory_space<vmem>>, vector<512x2xf32>,
    return
  }
  func.func @transform_0(%arg0: i32) -> (i32, i32) {
    %c0_i32 = arith.constant 0 : i32
    %c0_i32_0 = arith.constant 0 : i32
    return %arg0, %c0_i32 : i32, i32
  }
  func.func @transform_1(%arg0: i32) -> (i32, i32) {
    %c0_i32 = arith.constant 0 : i32
    %c0_i32_0 = arith.constant 0 : i32
    %c0_i32_1 = arith.constant 0 : i32
    return %c0_i32, %c0_i32_0 : i32, i32
  }
  func.func @transform_2(%arg0: i32) -> (i32, i32) {
    %c0_i32 = arith.constant 0 : i32
    %c0_i32_0 = arith.constant 0 : i32
    %c0_i32_1 = arith.constant 0 : i32
    return %c0_i32, %c0_i32_0 : i32, i32
  }
  func.func @transform_3(%arg0: i32) -> (i32, i32) {
    %c0_i32 = arith.constant 0 : i32
    %c0_i32_0 = arith.constant 0 : i32
    %c0_i32_1 = arith.constant 0 : i32
    return %c0_i32, %c0_i32_0 : i32, i32
  }
  func.func @transform_4(%arg0: i32) -> (i32, i32) {
    %c0_i32 = arith.constant 0 : i32
    %c0_i32_0 = arith.constant 0 : i32
    %c0_i32_1 = arith.constant 0 : i32
    return %c0_i32, %c0_i32_0 : i32, i32
  }
  func.func @transform_5(%arg0: i32) -> (i32, i32) {
    %c0_i32 = arith.constant 0 : i32
    %c0_i32_0 = arith.constant 0 : i32
    %c0_i32_1 = arith.constant 0 : i32
    return %c0_i32, %c0_i32_0 : i32, i32
  }
  func.func @transform_6(%arg0: i32) -> (i32, i32) {
    %c0_i32 = arith.constant 0 : i32
    %c0_i32_0 = arith.constant 0 : i32
    %c0_i32_1 = arith.constant 0 : i32
    return %c0_i32, %c0_i32_0 : i32, i32
  }
  func.func @transform_7(%arg0: i32) -> (i32, i32) {
    %c0_i32 = arith.constant 0 : i32
    %c0_i32_0 = arith.constant 0 : i32
    return %arg0, %c0_i32 : i32, i32
  }
}

</mosaic_0001>

<llo_original>
// kernel: model_nonlinear_forward.1
$region0: #{model_nonlinear_forward.1}
  #allocation0 [shape = 'u32[]', space=smem, size = 0x4, offset = 0x4, fixed_abs, tag = 'smem constant byte address 0x4 - core index']
  #allocation1 [shape = 'u32[72,128]{1,0:T(1,128)}', space=vmem, size = 0x9000, scoped, tag = 'internal scratch']
  %s0 = inlined_call_operand.vmem [shape: f32[512,100], index: 0, kind: input, shape index: {}]
  %s1 = inlined_call_operand.hbm [shape: bf16[100,512], index: 1, kind: input, shape index: {}]
  %s2 = inlined_call_operand.vmem [shape: f32[1,512], index: 2, kind: input, shape index: {}]
  %s3 = inlined_call_operand.vmem [shape: bf16[512,256], index: 3, kind: input, shape index: {}]
  %s4 = inlined_call_operand.vmem [shape: f32[1,256], index: 4, kind: input, shape index: {}]
  %s5 = inlined_call_operand.vmem [shape: bf16[256,2], index: 5, kind: input, shape index: {}]
  %s6 = inlined_call_operand.vmem [shape: f32[1,2], index: 6, kind: input, shape index: {}]
  %s7 = inlined_call_operand.vmem [shape: f32[512,2], index: 7, kind: output, shape index: {}]
  %s8 = sld [smem:[#allocation0]]
  $region42: #{model_nonlinear_forward.1} parent=0
    _
  %s10 = ssub.s32 1, %s8
  %s11 = scalar_select 0, %s10, %s8
  $region1: #{model_nonlinear_forward.1} parent=0
    #allocation2 [shape = 'u8[106496]{0}', space=vmem, size = 0x1a000, scoped, tag = 'input window, operand 1, single buffered']
    #allocation3 [shape = 's32[1]{0}', space=sflag, size = 0x4, scoped, tag = 'scoped memory for model_nonlinear_forward.1']
    %12 = vsyncpa [#allocation3], 0
    // Predicated region
    $region2: #{model_nonlinear_forward.1} parent=1 // pred_check
      _
    $region3: #{model_nonlinear_forward.1} parent=1 // pred_check_branch
      %14 = sbr.rel (0) target = $region5
    $region4: #{model_nonlinear_forward.1} parent=1 // pred_region
      _
    $region5: #{model_nonlinear_forward.1} parent=1 // pred_fallthru
      _
    // Predicated region
    $region6: #{model_nonlinear_forward.1} parent=1 // pred_check
      _
    $region7: #{model_nonlinear_forward.1} parent=1 // pred_check_branch
      %16 = sbr.rel (0) target = $region9
    $region8: #{model_nonlinear_forward.1} parent=1 // pred_region
      %18 = vsyncadd [#allocation3], 0
      %s19 = sshll.u32 %s1, 4
      %s20 = int_to_ptr.hbm [resolvable:$true] %s19
      %s21 = sshll.u32 [#allocation2], 4
      %s22 = int_to_ptr.vmem [resolvable:$true] %s21
      %27 = dma.hbm_to_vmem [thread:$0]  %s20, 3328, %s22, [#allocation3], 256, 256, 16
    $region9: #{model_nonlinear_forward.1} parent=1 // pred_fallthru
      _
    // Predicated region
    $region10: #{model_nonlinear_forward.1} parent=1 // pred_check
      _
    $region11: #{model_nonlinear_forward.1} parent=1 // pred_check_branch
      %29 = sbr.rel (0) target = $region13
    $region12: #{model_nonlinear_forward.1} parent=1 // pred_region
      _
    $region13: #{model_nonlinear_forward.1} parent=1 // pred_fallthru
      _
    // Predicated region
    $region14: #{model_nonlinear_forward.1} parent=1 // pred_check
      _
    $region15: #{model_nonlinear_forward.1} parent=1 // pred_check_branch
      %31 = sbr.rel (0) target = $region17
    $region16: #{model_nonlinear_forward.1} parent=1 // pred_region
      _
    $region17: #{model_nonlinear_forward.1} parent=1 // pred_fallthru
      _
    // Predicated region
    $region18: #{model_nonlinear_forward.1} parent=1 // pred_check
      _
    $region19: #{model_nonlinear_forward.1} parent=1 // pred_check_branch
      %33 = sbr.rel (0) target = $region21
    $region20: #{model_nonlinear_forward.1} parent=1 // pred_region
      _
    $region21: #{model_nonlinear_forward.1} parent=1 // pred_fallthru
      _
    // Predicated region
    $region22: #{model_nonlinear_forward.1} parent=1 // pred_check
      _
    $region23: #{model_nonlinear_forward.1} parent=1 // pred_check_branch
      %35 = sbr.rel (0) target = $region25
    $region24: #{model_nonlinear_forward.1} parent=1 // pred_region
      _
    $region25: #{model_nonlinear_forward.1} parent=1 // pred_fallthru
      _
    // Predicated region
    $region26: #{model_nonlinear_forward.1} parent=1 // pred_check
      _
    $region27: #{model_nonlinear_forward.1} parent=1 // pred_check_branch
      %37 = sbr.rel (0) target = $region29
    $region28: #{model_nonlinear_forward.1} parent=1 // pred_region
      _
    $region29: #{model_nonlinear_forward.1} parent=1 // pred_fallthru
      _
    // Predicated region
    $region30: #{model_nonlinear_forward.1} parent=1 // pred_check
      _
    $region31: #{model_nonlinear_forward.1} parent=1 // pred_check_branch
      %39 = sbr.rel (0) target = $region33
    $region32: #{model_nonlinear_forward.1} parent=1 // pred_region
      %41 = dma.done [#allocation3], 3328
    $region33: #{model_nonlinear_forward.1} parent=1 // pred_fallthru
      _
    %v43 = vld [vmem:[%s0] sm:$0xff]
    %v44 = vld [vmem:[%s0 + $0x8] sm:$0xff]
    %v45 = vld [vmem:[%s0 + $0x10] sm:$0xff]
    %v46 = vld [vmem:[%s0 + $0x18] sm:$0xff]
    %v47 = vld [vmem:[%s0 + $0x20] sm:$0xff]
    %v48 = vld [vmem:[%s0 + $0x28] sm:$0xff]
    %v49 = vld [vmem:[%s0 + $0x30] sm:$0xff]
    %v50 = vld [vmem:[%s0 + $0x38] sm:$0xff]
    %v51 = vld [vmem:[%s0 + $0x40] sm:$0xff]
    %v52 = vld [vmem:[%s0 + $0x48] sm:$0xff]
    %v53 = vld [vmem:[%s0 + $0x50] sm:$0xff]
    %v54 = vld [vmem:[%s0 + $0x58] sm:$0xff]
    %v55 = vld [vmem:[%s0 + $0x60] sm:$0xff]
    %v56 = vld [vmem:[%s0 + $0x68] sm:$0xff]
    %v57 = vld [vmem:[%s0 + $0x70] sm:$0xff]
    %v58 = vld [vmem:[%s0 + $0x78] sm:$0xff]
    %v59 = vld [vmem:[%s0 + $0x80] sm:$0xff]
    %v60 = vld [vmem:[%s0 + $0x88] sm:$0xff]
    %v61 = vld [vmem:[%s0 + $0x90] sm:$0xff]
    %v62 = vld [vmem:[%s0 + $0x98] sm:$0xff]
    %v63 = vld [vmem:[%s0 + $0xa0] sm:$0xff]
    %v64 = vld [vmem:[%s0 + $0xa8] sm:$0xff]
    %v65 = vld [vmem:[%s0 + $0xb0] sm:$0xff]
    %v66 = vld [vmem:[%s0 + $0xb8] sm:$0xff]
    %v67 = vld [vmem:[%s0 + $0xc0] sm:$0xff]
    %v68 = vld [vmem:[%s0 + $0xc8] sm:$0xff]
    %v69 = vld [vmem:[%s0 + $0xd0] sm:$0xff]
    %v70 = vld [vmem:[%s0 + $0xd8] sm:$0xff]
    %v71 = vld [vmem:[%s0 + $0xe0] sm:$0xff]
    %v72 = vld [vmem:[%s0 + $0xe8] sm:$0xff]
    %v73 = vld [vmem:[%s0 + $0xf0] sm:$0xff]
    %v74 = vld [vmem:[%s0 + $0xf8] sm:$0xff]
    %v75 = vld [vmem:[%s0 + $0x100] sm:$0xff]
    %v76 = vld [vmem:[%s0 + $0x108] sm:$0xff]
    %v77 = vld [vmem:[%s0 + $0x110] sm:$0xff]
    %v78 = vld [vmem:[%s0 + $0x118] sm:$0xff]
    %v79 = vld [vmem:[%s0 + $0x120] sm:$0xff]
    %v80 = vld [vmem:[%s0 + $0x128] sm:$0xff]
    %v81 = vld [vmem:[%s0 + $0x130] sm:$0xff]
    %v82 = vld [vmem:[%s0 + $0x138] sm:$0xff]
    %v83 = vld [vmem:[%s0 + $0x140] sm:$0xff]
    %v84 = vld [vmem:[%s0 + $0x148] sm:$0xff]
    %v85 = vld [vmem:[%s0 + $0x150] sm:$0xff]
    %v86 = vld [vmem:[%s0 + $0x158] sm:$0xff]
    %v87 = vld [vmem:[%s0 + $0x160] sm:$0xff]
    %v88 = vld [vmem:[%s0 + $0x168] sm:$0xff]
    %v89 = vld [vmem:[%s0 + $0x170] sm:$0xff]
    %v90 = vld [vmem:[%s0 + $0x178] sm:$0xff]
    %v91 = vld [vmem:[%s0 + $0x180] sm:$0xff]
    %v92 = vld [vmem:[%s0 + $0x188] sm:$0xff]
    %v93 = vld [vmem:[%s0 + $0x190] sm:$0xff]
    %v94 = vld [vmem:[%s0 + $0x198] sm:$0xff]
    %v95 = vld [vmem:[%s0 + $0x1a0] sm:$0xff]
    %v96 = vld [vmem:[%s0 + $0x1a8] sm:$0xff]
    %v97 = vld [vmem:[%s0 + $0x1b0] sm:$0xff]
    %v98 = vld [vmem:[%s0 + $0x1b8] sm:$0xff]
    %v99 = vld [vmem:[%s0 + $0x1c0] sm:$0xff]
    %v100 = vld [vmem:[%s0 + $0x1c8] sm:$0xff]
    %v101 = vld [vmem:[%s0 + $0x1d0] sm:$0xff]
    %v102 = vld [vmem:[%s0 + $0x1d8] sm:$0xff]
    %v103 = vld [vmem:[%s0 + $0x1e0] sm:$0xff]
    %v104 = vld [vmem:[%s0 + $0x1e8] sm:$0xff]
    %v105 = vld [vmem:[%s0 + $0x1f0] sm:$0xff]
    %v106 = vld [vmem:[%s0 + $0x1f8] sm:$0xff]
    %v107 = vpack.c.bf16 %v44, %v43
    %v108 = vpack.c.bf16 %v46, %v45
    %v109 = vpack.c.bf16 %v48, %v47
    %v110 = vpack.c.bf16 %v50, %v49
    %v111 = vpack.c.bf16 %v52, %v51
    %v112 = vpack.c.bf16 %v54, %v53
    %v113 = vpack.c.bf16 %v56, %v55
    %v114 = vpack.c.bf16 %v58, %v57
    %v115 = vpack.c.bf16 %v60, %v59
    %v116 = vpack.c.bf16 %v62, %v61
    %v117 = vpack.c.bf16 %v64, %v63
    %v118 = vpack.c.bf16 %v66, %v65
    %v119 = vpack.c.bf16 %v68, %v67
    %v120 = vpack.c.bf16 %v70, %v69
    %v121 = vpack.c.bf16 %v72, %v71
    %v122 = vpack.c.bf16 %v74, %v73
    %v123 = vpack.c.bf16 %v76, %v75
    %v124 = vpack.c.bf16 %v78, %v77
    %v125 = vpack.c.bf16 %v80, %v79
    %v126 = vpack.c.bf16 %v82, %v81
    %v127 = vpack.c.bf16 %v84, %v83
    %v128 = vpack.c.bf16 %v86, %v85
    %v129 = vpack.c.bf16 %v88, %v87
    %v130 = vpack.c.bf16 %v90, %v89
    %v131 = vpack.c.bf16 %v92, %v91
    %v132 = vpack.c.bf16 %v94, %v93
    %v133 = vpack.c.bf16 %v96, %v95
    %v134 = vpack.c.bf16 %v98, %v97
    %v135 = vpack.c.bf16 %v100, %v99
    %v136 = vpack.c.bf16 %v102, %v101
    %v137 = vpack.c.bf16 %v104, %v103
    %v138 = vpack.c.bf16 %v106, %v105
    %v139 = vld [vmem:[#allocation2] sm:$0xff]
    %v140 = vld [vmem:[#allocation2 + $0x8] sm:$0xff]
    %v141 = vld [vmem:[#allocation2 + $0x10] sm:$0xff]
    %v142 = vld [vmem:[#allocation2 + $0x18] sm:$0xff]
    %v143 = vld [vmem:[#allocation2 + $0x20] sm:$0xff]
    %v144 = vld [vmem:[#allocation2 + $0x28] sm:$0xff]
    %v145 = vld [vmem:[#allocation2 + $0x30] sm:$0xff]
    %v146 = vld [vmem:[#allocation2 + $0x38] sm:$0xff]
    %v147 = vld [vmem:[#allocation2 + $0x40] sm:$0xff]
    %v148 = vld [vmem:[#allocation2 + $0x48] sm:$0xff]
    %v149 = vld [vmem:[#allocation2 + $0x50] sm:$0xff]
    %v150 = vld [vmem:[#allocation2 + $0x58] sm:$0xff]
    %v151 = vld [vmem:[#allocation2 + $0x60] sm:$0xff]
    %v152 = vld [vmem:[#allocation2 + $0x68] sm:$0xff]
    %v153 = vld [vmem:[#allocation2 + $0x70] sm:$0xff]
    %v154 = vld [vmem:[#allocation2 + $0x78] sm:$0xff]
    %v155 = vld [vmem:[#allocation2 + $0x80] sm:$0xff]
    %v156 = vld [vmem:[#allocation2 + $0x88] sm:$0xff]
    %v157 = vld [vmem:[#allocation2 + $0x90] sm:$0xff]
    %v158 = vld [vmem:[#allocation2 + $0x98] sm:$0xff]
    %v159 = vld [vmem:[#allocation2 + $0xa0] sm:$0xff]
    %v160 = vld [vmem:[#allocation2 + $0xa8] sm:$0xff]
    %v161 = vld [vmem:[#allocation2 + $0xb0] sm:$0xff]
    %v162 = vld [vmem:[#allocation2 + $0xb8] sm:$0xff]
    %v163 = vld [vmem:[#allocation2 + $0xc0] sm:$0x33]
    %v164 = vld [vmem:[#allocation2 + $0xc8] sm:$0x33]
    %v165 = vld [vmem:[%s2] sm:$0xf]
    %v167 = vperm.slane %v165, 0
    %v168 = vperm.slane %v165, 1
    %v169 = vperm.slane %v165, 2
    %v170 = vperm.slane %v165, 3
    %v201 = vunpack.c.l.b16 %v139
    %v202 = vunpack.c.h.b16 %v139
    %v203 = vunpack.c.l.b16 %v140
    %v204 = vunpack.c.h.b16 %v140
    %v205 = vunpack.c.l.b16 %v141
    %v206 = vunpack.c.h.b16 %v141
    %v207 = vunpack.c.l.b16 %v142
    %v208 = vunpack.c.h.b16 %v142
    %v209 = vunpack.c.l.b16 %v143
    %v210 = vunpack.c.h.b16 %v143
    %v211 = vunpack.c.l.b16 %v144
    %v212 = vunpack.c.h.b16 %v144
    %v213 = vunpack.c.l.b16 %v145
    %v214 = vunpack.c.h.b16 %v145
    %v215 = vunpack.c.l.b16 %v146
    %v216 = vunpack.c.h.b16 %v146
    %v217 = vunpack.c.l.b16 %v147
    %v218 = vunpack.c.h.b16 %v147
    %v219 = vunpack.c.l.b16 %v148
    %v220 = vunpack.c.h.b16 %v148
    %v221 = vunpack.c.l.b16 %v149
    %v222 = vunpack.c.h.b16 %v149
    %v223 = vunpack.c.l.b16 %v150
    %v224 = vunpack.c.h.b16 %v150
    %v225 = vunpack.c.l.b16 %v151
    %v226 = vunpack.c.h.b16 %v151
    %v227 = vunpack.c.l.b16 %v152
    %v228 = vunpack.c.h.b16 %v152
    %v229 = vunpack.c.l.b16 %v153
    %v230 = vunpack.c.h.b16 %v153
    %v231 = vunpack.c.l.b16 %v154
    %v232 = vunpack.c.h.b16 %v154
    %v233 = vunpack.c.l.b16 %v155
    %v234 = vunpack.c.h.b16 %v155
    %v235 = vunpack.c.l.b16 %v156
    %v236 = vunpack.c.h.b16 %v156
    %v237 = vunpack.c.l.b16 %v157
    %v238 = vunpack.c.h.b16 %v157
    %v239 = vunpack.c.l.b16 %v158
    %v240 = vunpack.c.h.b16 %v158
    %v241 = vunpack.c.l.b16 %v159
    %v242 = vunpack.c.h.b16 %v159
    %v243 = vunpack.c.l.b16 %v160
    %v244 = vunpack.c.h.b16 %v160
    %v245 = vunpack.c.l.b16 %v161
    %v246 = vunpack.c.h.b16 %v161
    %v247 = vunpack.c.l.b16 %v162
    %v248 = vunpack.c.h.b16 %v162
    %v249 = vunpack.c.l.b16 %v163
    %v250 = vunpack.c.h.b16 %v163
    %v251 = vunpack.c.l.b16 %v164
    %v252 = vunpack.c.h.b16 %v164
    %v253 = vpack.c.b16 %v205, %v201
    %v254 = vpack.c.b16 %v206, %v202
    %v255 = vpack.c.b16 %v207, %v203
    %v256 = vpack.c.b16 %v208, %v204
    %v257 = vpack.c.b16 %v213, %v209
    %v258 = vpack.c.b16 %v214, %v210
    %v259 = vpack.c.b16 %v215, %v211
    %v260 = vpack.c.b16 %v216, %v212
    %v261 = vpack.c.b16 %v221, %v217
    %v262 = vpack.c.b16 %v222, %v218
    %v263 = vpack.c.b16 %v223, %v219
    %v264 = vpack.c.b16 %v224, %v220
    %v265 = vpack.c.b16 %v229, %v225
    %v266 = vpack.c.b16 %v230, %v226
    %v267 = vpack.c.b16 %v231, %v227
    %v268 = vpack.c.b16 %v232, %v228
    %v269 = vpack.c.b16 %v237, %v233
    %v270 = vpack.c.b16 %v238, %v234
    %v271 = vpack.c.b16 %v239, %v235
    %v272 = vpack.c.b16 %v240, %v236
    %v273 = vpack.c.b16 %v245, %v241
    %v274 = vpack.c.b16 %v246, %v242
    %v275 = vpack.c.b16 %v247, %v243
    %v276 = vpack.c.b16 %v248, %v244
    %v277 = vpack.c.b16 %v249, %v249
    %v278 = vpack.c.b16 %v250, %v250
    %v279 = vpack.c.b16 %v251, %v251
    %v280 = vpack.c.b16 %v252, %v252
    %vm305 = vcmask 818176
    %v307 = vsel %vm305, %v107, 0
    %v310 = vsel %vm305, %v108, 0
    %v313 = vsel %vm305, %v109, 0
    %v316 = vsel %vm305, %v110, 0
    %v319 = vsel %vm305, %v111, 0
    %v322 = vsel %vm305, %v112, 0
    %v325 = vsel %vm305, %v113, 0
    %v328 = vsel %vm305, %v114, 0
    %v331 = vsel %vm305, %v115, 0
    %v334 = vsel %vm305, %v116, 0
    %v337 = vsel %vm305, %v117, 0
    %v340 = vsel %vm305, %v118, 0
    %v343 = vsel %vm305, %v119, 0
    %v346 = vsel %vm305, %v120, 0
    %v349 = vsel %vm305, %v121, 0
    %v352 = vsel %vm305, %v122, 0
    %v355 = vsel %vm305, %v123, 0
    %v358 = vsel %vm305, %v124, 0
    %v361 = vsel %vm305, %v125, 0
    %v364 = vsel %vm305, %v126, 0
    %v367 = vsel %vm305, %v127, 0
    %v370 = vsel %vm305, %v128, 0
    %v373 = vsel %vm305, %v129, 0
    %v376 = vsel %vm305, %v130, 0
    %v379 = vsel %vm305, %v131, 0
    %v382 = vsel %vm305, %v132, 0
    %v385 = vsel %vm305, %v133, 0
    %v388 = vsel %vm305, %v134, 0
    %v391 = vsel %vm305, %v135, 0
    %v394 = vsel %vm305, %v136, 0
    %v397 = vsel %vm305, %v137, 0
    %v400 = vsel %vm305, %v138, 0
    %vm402 = vcmask 1041408
    %v404 = vsel %vm402, %v277, 0
    %v407 = vsel %vm402, %v278, 0
    %v410 = vsel %vm402, %v279, 0
    %v413 = vsel %vm402, %v280, 0
    %415 = vmatpush.bf16.msra.mxu0 0
    %416 = vmatpush.bf16.msra.mxu0 %v404
    %417 = vmatpush.bf16.msra.mxu0 %v273
    %418 = vmatpush.bf16.msra.mxu0 %v269
    %419 = vmatpush.bf16.msra.mxu0 %v265
    %420 = vmatpush.bf16.msra.mxu0 %v261
    %421 = vmatpush.bf16.msra.mxu0 %v257
    %422 = vmatpush.bf16.msra.mxu0 %v253
    %423 = vmatmul.bf16.gmra.mxu0 %v307
    %v424 = vpop.f32.mrf.mxu0
    %v425 = vadd.f32 %v167, %v424
    %v426 = vpop.f32.mrf.mxu0
    %v427 = vadd.f32 %v167, %v426
    %428 = vmatmul.bf16.gmra.mxu0 %v310
    %v429 = vpop.f32.mrf.mxu0
    %v430 = vadd.f32 %v167, %v429
    %v431 = vpop.f32.mrf.mxu0
    %v432 = vadd.f32 %v167, %v431
    %433 = vmatmul.bf16.gmra.mxu0 %v313
    %v434 = vpop.f32.mrf.mxu0
    %v435 = vadd.f32 %v167, %v434
    %v436 = vpop.f32.mrf.mxu0
    %v437 = vadd.f32 %v167, %v436
    %438 = vmatmul.bf16.gmra.mxu0 %v316
    %v439 = vpop.f32.mrf.mxu0
    %v440 = vadd.f32 %v167, %v439
    %v441 = vpop.f32.mrf.mxu0
    %v442 = vadd.f32 %v167, %v441
    %443 = vmatmul.bf16.gmra.mxu0 %v319
    %v444 = vpop.f32.mrf.mxu0
    %v445 = vadd.f32 %v167, %v444
    %v446 = vpop.f32.mrf.mxu0
    %v447 = vadd.f32 %v167, %v446
    %448 = vmatmul.bf16.gmra.mxu0 %v322
    %v449 = vpop.f32.mrf.mxu0
    %v450 = vadd.f32 %v167, %v449
    %v451 = vpop.f32.mrf.mxu0
    %v452 = vadd.f32 %v167, %v451
    %453 = vmatmul.bf16.gmra.mxu0 %v325
    %v454 = vpop.f32.mrf.mxu0
    %v455 = vadd.f32 %v167, %v454
    %v456 = vpop.f32.mrf.mxu0
    %v457 = vadd.f32 %v167, %v456
    %458 = vmatmul.bf16.gmra.mxu0 %v328
    %v459 = vpop.f32.mrf.mxu0
    %v460 = vadd.f32 %v167, %v459
    %v461 = vpop.f32.mrf.mxu0
    %v462 = vadd.f32 %v167, %v461
    %463 = vmatmul.bf16.gmra.mxu0 %v331
    %v464 = vpop.f32.mrf.mxu0
    %v465 = vadd.f32 %v167, %v464
    %v466 = vpop.f32.mrf.mxu0
    %v467 = vadd.f32 %v167, %v466
    %468 = vmatmul.bf16.gmra.mxu0 %v334
    %v469 = vpop.f32.mrf.mxu0
    %v470 = vadd.f32 %v167, %v469
    %v471 = vpop.f32.mrf.mxu0
    %v472 = vadd.f32 %v167, %v471
    %473 = vmatmul.bf16.gmra.mxu0 %v337
    %v474 = vpop.f32.mrf.mxu0
    %v475 = vadd.f32 %v167, %v474
    %v476 = vpop.f32.mrf.mxu0
    %v477 = vadd.f32 %v167, %v476
    %478 = vmatmul.bf16.gmra.mxu0 %v340
    %v479 = vpop.f32.mrf.mxu0
    %v480 = vadd.f32 %v167, %v479
    %v481 = vpop.f32.mrf.mxu0
    %v482 = vadd.f32 %v167, %v481
    %483 = vmatmul.bf16.gmra.mxu0 %v343
    %v484 = vpop.f32.mrf.mxu0
    %v485 = vadd.f32 %v167, %v484
    %v486 = vpop.f32.mrf.mxu0
    %v487 = vadd.f32 %v167, %v486
    %488 = vmatmul.bf16.gmra.mxu0 %v346
    %v489 = vpop.f32.mrf.mxu0
    %v490 = vadd.f32 %v167, %v489
    %v491 = vpop.f32.mrf.mxu0
    %v492 = vadd.f32 %v167, %v491
    %493 = vmatmul.bf16.gmra.mxu0 %v349
    %v494 = vpop.f32.mrf.mxu0
    %v495 = vadd.f32 %v167, %v494
    %v496 = vpop.f32.mrf.mxu0
    %v497 = vadd.f32 %v167, %v496
    %498 = vmatmul.bf16.gmra.mxu0 %v352
    %v499 = vpop.f32.mrf.mxu0
    %v500 = vadd.f32 %v167, %v499
    %v501 = vpop.f32.mrf.mxu0
    %v502 = vadd.f32 %v167, %v501
    %503 = vmatmul.bf16.gmra.mxu0 %v355
    %v504 = vpop.f32.mrf.mxu0
    %v505 = vadd.f32 %v167, %v504
    %v506 = vpop.f32.mrf.mxu0
    %v507 = vadd.f32 %v167, %v506
    %508 = vmatmul.bf16.gmra.mxu0 %v358
    %v509 = vpop.f32.mrf.mxu0
    %v510 = vadd.f32 %v167, %v509
    %v511 = vpop.f32.mrf.mxu0
    %v512 = vadd.f32 %v167, %v511
    %513 = vmatmul.bf16.gmra.mxu0 %v361
    %v514 = vpop.f32.mrf.mxu0
    %v515 = vadd.f32 %v167, %v514
    %v516 = vpop.f32.mrf.mxu0
    %v517 = vadd.f32 %v167, %v516
    %518 = vmatmul.bf16.gmra.mxu0 %v364
    %v519 = vpop.f32.mrf.mxu0
    %v520 = vadd.f32 %v167, %v519
    %v521 = vpop.f32.mrf.mxu0
    %v522 = vadd.f32 %v167, %v521
    %523 = vmatmul.bf16.gmra.mxu0 %v367
    %v524 = vpop.f32.mrf.mxu0
    %v525 = vadd.f32 %v167, %v524
    %v526 = vpop.f32.mrf.mxu0
    %v527 = vadd.f32 %v167, %v526
    %528 = vmatmul.bf16.gmra.mxu0 %v370
    %v529 = vpop.f32.mrf.mxu0
    %v530 = vadd.f32 %v167, %v529
    %v531 = vpop.f32.mrf.mxu0
    %v532 = vadd.f32 %v167, %v531
    %533 = vmatmul.bf16.gmra.mxu0 %v373
    %v534 = vpop.f32.mrf.mxu0
    %v535 = vadd.f32 %v167, %v534
    %v536 = vpop.f32.mrf.mxu0
    %v537 = vadd.f32 %v167, %v536
    %538 = vmatmul.bf16.gmra.mxu0 %v376
    %v539 = vpop.f32.mrf.mxu0
    %v540 = vadd.f32 %v167, %v539
    %v541 = vpop.f32.mrf.mxu0
    %v542 = vadd.f32 %v167, %v541
    %543 = vmatmul.bf16.gmra.mxu0 %v379
    %v544 = vpop.f32.mrf.mxu0
    %v545 = vadd.f32 %v167, %v544
    %v546 = vpop.f32.mrf.mxu0
    %v547 = vadd.f32 %v167, %v546
    %548 = vmatmul.bf16.gmra.mxu0 %v382
    %v549 = vpop.f32.mrf.mxu0
    %v550 = vadd.f32 %v167, %v549
    %v551 = vpop.f32.mrf.mxu0
    %v552 = vadd.f32 %v167, %v551
    %553 = vmatmul.bf16.gmra.mxu0 %v385
    %v554 = vpop.f32.mrf.mxu0
    %v555 = vadd.f32 %v167, %v554
    %v556 = vpop.f32.mrf.mxu0
    %v557 = vadd.f32 %v167, %v556
    %558 = vmatmul.bf16.gmra.mxu0 %v388
    %v559 = vpop.f32.mrf.mxu0
    %v560 = vadd.f32 %v167, %v559
    %v561 = vpop.f32.mrf.mxu0
    %v562 = vadd.f32 %v167, %v561
    %563 = vmatmul.bf16.gmra.mxu0 %v391
    %v564 = vpop.f32.mrf.mxu0
    %v565 = vadd.f32 %v167, %v564
    %v566 = vpop.f32.mrf.mxu0
    %v567 = vadd.f32 %v167, %v566
    %568 = vmatmul.bf16.gmra.mxu0 %v394
    %v569 = vpop.f32.mrf.mxu0
    %v570 = vadd.f32 %v167, %v569
    %v571 = vpop.f32.mrf.mxu0
    %v572 = vadd.f32 %v167, %v571
    %573 = vmatmul.bf16.gmra.mxu0 %v397
    %v574 = vpop.f32.mrf.mxu0
    %v575 = vadd.f32 %v167, %v574
    %v576 = vpop.f32.mrf.mxu0
    %v577 = vadd.f32 %v167, %v576
    %578 = vmatmul.bf16.gmra.mxu0 %v400
    %v579 = vpop.f32.mrf.mxu0
    %v580 = vadd.f32 %v167, %v579
    %v581 = vpop.f32.mrf.mxu0
    %v582 = vadd.f32 %v167, %v581
    %583 = vdwg.mxu0
    %584 = vmatpush.bf16.msra.mxu0 0
    %585 = vmatpush.bf16.msra.mxu0 %v407
    %586 = vmatpush.bf16.msra.mxu0 %v274
    %587 = vmatpush.bf16.msra.mxu0 %v270
    %588 = vmatpush.bf16.msra.mxu0 %v266
    %589 = vmatpush.bf16.msra.mxu0 %v262
    %590 = vmatpush.bf16.msra.mxu0 %v258
    %591 = vmatpush.bf16.msra.mxu0 %v254
    %592 = vmatmul.bf16.gmra.mxu0 %v307
    %v593 = vpop.f32.mrf.mxu0
    %v594 = vadd.f32 %v168, %v593
    %v595 = vpop.f32.mrf.mxu0
    %v596 = vadd.f32 %v168, %v595
    %597 = vmatmul.bf16.gmra.mxu0 %v310
    %v598 = vpop.f32.mrf.mxu0
    %v599 = vadd.f32 %v168, %v598
    %v600 = vpop.f32.mrf.mxu0
    %v601 = vadd.f32 %v168, %v600
    %602 = vmatmul.bf16.gmra.mxu0 %v313
    %v603 = vpop.f32.mrf.mxu0
    %v604 = vadd.f32 %v168, %v603
    %v605 = vpop.f32.mrf.mxu0
    %v606 = vadd.f32 %v168, %v605
    %607 = vmatmul.bf16.gmra.mxu0 %v316
    %v608 = vpop.f32.mrf.mxu0
    %v609 = vadd.f32 %v168, %v608
    %v610 = vpop.f32.mrf.mxu0
    %v611 = vadd.f32 %v168, %v610
    %612 = vmatmul.bf16.gmra.mxu0 %v319
    %v613 = vpop.f32.mrf.mxu0
    %v614 = vadd.f32 %v168, %v613
    %v615 = vpop.f32.mrf.mxu0
    %v616 = vadd.f32 %v168, %v615
    %617 = vmatmul.bf16.gmra.mxu0 %v322
    %v618 = vpop.f32.mrf.mxu0
    %v619 = vadd.f32 %v168, %v618
    %v620 = vpop.f32.mrf.mxu0
    %v621 = vadd.f32 %v168, %v620
    %622 = vmatmul.bf16.gmra.mxu0 %v325
    %v623 = vpop.f32.mrf.mxu0
    %v624 = vadd.f32 %v168, %v623
    %v625 = vpop.f32.mrf.mxu0
    %v626 = vadd.f32 %v168, %v625
    %627 = vmatmul.bf16.gmra.mxu0 %v328
    %v628 = vpop.f32.mrf.mxu0
    %v629 = vadd.f32 %v168, %v628
    %v630 = vpop.f32.mrf.mxu0
    %v631 = vadd.f32 %v168, %v630
    %632 = vmatmul.bf16.gmra.mxu0 %v331
    %v633 = vpop.f32.mrf.mxu0
    %v634 = vadd.f32 %v168, %v633
    %v635 = vpop.f32.mrf.mxu0
    %v636 = vadd.f32 %v168, %v635
    %637 = vmatmul.bf16.gmra.mxu0 %v334
    %v638 = vpop.f32.mrf.mxu0
    %v639 = vadd.f32 %v168, %v638
    %v640 = vpop.f32.mrf.mxu0
    %v641 = vadd.f32 %v168, %v640
    %642 = vmatmul.bf16.gmra.mxu0 %v337
    %v643 = vpop.f32.mrf.mxu0
    %v644 = vadd.f32 %v168, %v643
    %v645 = vpop.f32.mrf.mxu0
    %v646 = vadd.f32 %v168, %v645
    %647 = vmatmul.bf16.gmra.mxu0 %v340
    %v648 = vpop.f32.mrf.mxu0
    %v649 = vadd.f32 %v168, %v648
    %v650 = vpop.f32.mrf.mxu0
    %v651 = vadd.f32 %v168, %v650
    %652 = vmatmul.bf16.gmra.mxu0 %v343
    %v653 = vpop.f32.mrf.mxu0
    %v654 = vadd.f32 %v168, %v653
    %v655 = vpop.f32.mrf.mxu0
    %v656 = vadd.f32 %v168, %v655
    %657 = vmatmul.bf16.gmra.mxu0 %v346
    %v658 = vpop.f32.mrf.mxu0
    %v659 = vadd.f32 %v168, %v658
    %v660 = vpop.f32.mrf.mxu0
    %v661 = vadd.f32 %v168, %v660
    %662 = vmatmul.bf16.gmra.mxu0 %v349
    %v663 = vpop.f32.mrf.mxu0
    %v664 = vadd.f32 %v168, %v663
    %v665 = vpop.f32.mrf.mxu0
    %v666 = vadd.f32 %v168, %v665
    %667 = vmatmul.bf16.gmra.mxu0 %v352
    %v668 = vpop.f32.mrf.mxu0
    %v669 = vadd.f32 %v168, %v668
    %v670 = vpop.f32.mrf.mxu0
    %v671 = vadd.f32 %v168, %v670
    %672 = vmatmul.bf16.gmra.mxu0 %v355
    %v673 = vpop.f32.mrf.mxu0
    %v674 = vadd.f32 %v168, %v673
    %v675 = vpop.f32.mrf.mxu0
    %v676 = vadd.f32 %v168, %v675
    %677 = vmatmul.bf16.gmra.mxu0 %v358
    %v678 = vpop.f32.mrf.mxu0
    %v679 = vadd.f32 %v168, %v678
    %v680 = vpop.f32.mrf.mxu0
    %v681 = vadd.f32 %v168, %v680
    %682 = vmatmul.bf16.gmra.mxu0 %v361
    %v683 = vpop.f32.mrf.mxu0
    %v684 = vadd.f32 %v168, %v683
    %v685 = vpop.f32.mrf.mxu0
    %v686 = vadd.f32 %v168, %v685
    %687 = vmatmul.bf16.gmra.mxu0 %v364
    %v688 = vpop.f32.mrf.mxu0
    %v689 = vadd.f32 %v168, %v688
    %v690 = vpop.f32.mrf.mxu0
    %v691 = vadd.f32 %v168, %v690
    %692 = vmatmul.bf16.gmra.mxu0 %v367
    %v693 = vpop.f32.mrf.mxu0
    %v694 = vadd.f32 %v168, %v693
    %v695 = vpop.f32.mrf.mxu0
    %v696 = vadd.f32 %v168, %v695
    %697 = vmatmul.bf16.gmra.mxu0 %v370
    %v698 = vpop.f32.mrf.mxu0
    %v699 = vadd.f32 %v168, %v698
    %v700 = vpop.f32.mrf.mxu0
    %v701 = vadd.f32 %v168, %v700
    %702 = vmatmul.bf16.gmra.mxu0 %v373
    %v703 = vpop.f32.mrf.mxu0
    %v704 = vadd.f32 %v168, %v703
    %v705 = vpop.f32.mrf.mxu0
    %v706 = vadd.f32 %v168, %v705
    %707 = vmatmul.bf16.gmra.mxu0 %v376
    %v708 = vpop.f32.mrf.mxu0
    %v709 = vadd.f32 %v168, %v708
    %v710 = vpop.f32.mrf.mxu0
    %v711 = vadd.f32 %v168, %v710
    %712 = vmatmul.bf16.gmra.mxu0 %v379
    %v713 = vpop.f32.mrf.mxu0
    %v714 = vadd.f32 %v168, %v713
    %v715 = vpop.f32.mrf.mxu0
    %v716 = vadd.f32 %v168, %v715
    %717 = vmatmul.bf16.gmra.mxu0 %v382
    %v718 = vpop.f32.mrf.mxu0
    %v719 = vadd.f32 %v168, %v718
    %v720 = vpop.f32.mrf.mxu0
    %v721 = vadd.f32 %v168, %v720
    %722 = vmatmul.bf16.gmra.mxu0 %v385
    %v723 = vpop.f32.mrf.mxu0
    %v724 = vadd.f32 %v168, %v723
    %v725 = vpop.f32.mrf.mxu0
    %v726 = vadd.f32 %v168, %v725
    %727 = vmatmul.bf16.gmra.mxu0 %v388
    %v728 = vpop.f32.mrf.mxu0
    %v729 = vadd.f32 %v168, %v728
    %v730 = vpop.f32.mrf.mxu0
    %v731 = vadd.f32 %v168, %v730
    %732 = vmatmul.bf16.gmra.mxu0 %v391
    %v733 = vpop.f32.mrf.mxu0
    %v734 = vadd.f32 %v168, %v733
    %v735 = vpop.f32.mrf.mxu0
    %v736 = vadd.f32 %v168, %v735
    %737 = vmatmul.bf16.gmra.mxu0 %v394
    %v738 = vpop.f32.mrf.mxu0
    %v739 = vadd.f32 %v168, %v738
    %v740 = vpop.f32.mrf.mxu0
    %v741 = vadd.f32 %v168, %v740
    %742 = vmatmul.bf16.gmra.mxu0 %v397
    %v743 = vpop.f32.mrf.mxu0
    %v744 = vadd.f32 %v168, %v743
    %v745 = vpop.f32.mrf.mxu0
    %v746 = vadd.f32 %v168, %v745
    %747 = vmatmul.bf16.gmra.mxu0 %v400
    %v748 = vpop.f32.mrf.mxu0
    %v749 = vadd.f32 %v168, %v748
    %v750 = vpop.f32.mrf.mxu0
    %v751 = vadd.f32 %v168, %v750
    %752 = vdwg.mxu0
    %753 = vmatpush.bf16.msra.mxu0 0
    %754 = vmatpush.bf16.msra.mxu0 %v410
    %755 = vmatpush.bf16.msra.mxu0 %v275
    %756 = vmatpush.bf16.msra.mxu0 %v271
    %757 = vmatpush.bf16.msra.mxu0 %v267
    %758 = vmatpush.bf16.msra.mxu0 %v263
    %759 = vmatpush.bf16.msra.mxu0 %v259
    %760 = vmatpush.bf16.msra.mxu0 %v255
    %761 = vmatmul.bf16.gmra.mxu0 %v307
    %v762 = vpop.f32.mrf.mxu0
    %v763 = vadd.f32 %v169, %v762
    %v764 = vpop.f32.mrf.mxu0
    %v765 = vadd.f32 %v169, %v764
    %766 = vmatmul.bf16.gmra.mxu0 %v310
    %v767 = vpop.f32.mrf.mxu0
    %v768 = vadd.f32 %v169, %v767
    %v769 = vpop.f32.mrf.mxu0
    %v770 = vadd.f32 %v169, %v769
    %771 = vmatmul.bf16.gmra.mxu0 %v313
    %v772 = vpop.f32.mrf.mxu0
    %v773 = vadd.f32 %v169, %v772
    %v774 = vpop.f32.mrf.mxu0
    %v775 = vadd.f32 %v169, %v774
    %776 = vmatmul.bf16.gmra.mxu0 %v316
    %v777 = vpop.f32.mrf.mxu0
    %v778 = vadd.f32 %v169, %v777
    %v779 = vpop.f32.mrf.mxu0
    %v780 = vadd.f32 %v169, %v779
    %781 = vmatmul.bf16.gmra.mxu0 %v319
    %v782 = vpop.f32.mrf.mxu0
    %v783 = vadd.f32 %v169, %v782
    %v784 = vpop.f32.mrf.mxu0
    %v785 = vadd.f32 %v169, %v784
    %786 = vmatmul.bf16.gmra.mxu0 %v322
    %v787 = vpop.f32.mrf.mxu0
    %v788 = vadd.f32 %v169, %v787
    %v789 = vpop.f32.mrf.mxu0
    %v790 = vadd.f32 %v169, %v789
    %791 = vmatmul.bf16.gmra.mxu0 %v325
    %v792 = vpop.f32.mrf.mxu0
    %v793 = vadd.f32 %v169, %v792
    %v794 = vpop.f32.mrf.mxu0
    %v795 = vadd.f32 %v169, %v794
    %796 = vmatmul.bf16.gmra.mxu0 %v328
    %v797 = vpop.f32.mrf.mxu0
    %v798 = vadd.f32 %v169, %v797
    %v799 = vpop.f32.mrf.mxu0
    %v800 = vadd.f32 %v169, %v799
    %801 = vmatmul.bf16.gmra.mxu0 %v331
    %v802 = vpop.f32.mrf.mxu0
    %v803 = vadd.f32 %v169, %v802
    %v804 = vpop.f32.mrf.mxu0
    %v805 = vadd.f32 %v169, %v804
    %806 = vmatmul.bf16.gmra.mxu0 %v334
    %v807 = vpop.f32.mrf.mxu0
    %v808 = vadd.f32 %v169, %v807
    %v809 = vpop.f32.mrf.mxu0
    %v810 = vadd.f32 %v169, %v809
    %811 = vmatmul.bf16.gmra.mxu0 %v337
    %v812 = vpop.f32.mrf.mxu0
    %v813 = vadd.f32 %v169, %v812
    %v814 = vpop.f32.mrf.mxu0
    %v815 = vadd.f32 %v169, %v814
    %816 = vmatmul.bf16.gmra.mxu0 %v340
    %v817 = vpop.f32.mrf.mxu0
    %v818 = vadd.f32 %v169, %v817
    %v819 = vpop.f32.mrf.mxu0
    %v820 = vadd.f32 %v169, %v819
    %821 = vmatmul.bf16.gmra.mxu0 %v343
    %v822 = vpop.f32.mrf.mxu0
    %v823 = vadd.f32 %v169, %v822
    %v824 = vpop.f32.mrf.mxu0
    %v825 = vadd.f32 %v169, %v824
    %826 = vmatmul.bf16.gmra.mxu0 %v346
    %v827 = vpop.f32.mrf.mxu0
    %v828 = vadd.f32 %v169, %v827
    %v829 = vpop.f32.mrf.mxu0
    %v830 = vadd.f32 %v169, %v829
    %831 = vmatmul.bf16.gmra.mxu0 %v349
    %v832 = vpop.f32.mrf.mxu0
    %v833 = vadd.f32 %v169, %v832
    %v834 = vpop.f32.mrf.mxu0
    %v835 = vadd.f32 %v169, %v834
    %836 = vmatmul.bf16.gmra.mxu0 %v352
    %v837 = vpop.f32.mrf.mxu0
    %v838 = vadd.f32 %v169, %v837
    %v839 = vpop.f32.mrf.mxu0
    %v840 = vadd.f32 %v169, %v839
    %841 = vmatmul.bf16.gmra.mxu0 %v355
    %v842 = vpop.f32.mrf.mxu0
    %v843 = vadd.f32 %v169, %v842
    %v844 = vpop.f32.mrf.mxu0
    %v845 = vadd.f32 %v169, %v844
    %846 = vmatmul.bf16.gmra.mxu0 %v358
    %v847 = vpop.f32.mrf.mxu0
    %v848 = vadd.f32 %v169, %v847
    %v849 = vpop.f32.mrf.mxu0
    %v850 = vadd.f32 %v169, %v849
    %851 = vmatmul.bf16.gmra.mxu0 %v361
    %v852 = vpop.f32.mrf.mxu0
    %v853 = vadd.f32 %v169, %v852
    %v854 = vpop.f32.mrf.mxu0
    %v855 = vadd.f32 %v169, %v854
    %856 = vmatmul.bf16.gmra.mxu0 %v364
    %v857 = vpop.f32.mrf.mxu0
    %v858 = vadd.f32 %v169, %v857
    %v859 = vpop.f32.mrf.mxu0
    %v860 = vadd.f32 %v169, %v859
    %861 = vmatmul.bf16.gmra.mxu0 %v367
    %v862 = vpop.f32.mrf.mxu0
    %v863 = vadd.f32 %v169, %v862
    %v864 = vpop.f32.mrf.mxu0
    %v865 = vadd.f32 %v169, %v864
    %866 = vmatmul.bf16.gmra.mxu0 %v370
    %v867 = vpop.f32.mrf.mxu0
    %v868 = vadd.f32 %v169, %v867
    %v869 = vpop.f32.mrf.mxu0
    %v870 = vadd.f32 %v169, %v869
    %871 = vmatmul.bf16.gmra.mxu0 %v373
    %v872 = vpop.f32.mrf.mxu0
    %v873 = vadd.f32 %v169, %v872
    %v874 = vpop.f32.mrf.mxu0
    %v875 = vadd.f32 %v169, %v874
    %876 = vmatmul.bf16.gmra.mxu0 %v376
    %v877 = vpop.f32.mrf.mxu0
    %v878 = vadd.f32 %v169, %v877
    %v879 = vpop.f32.mrf.mxu0
    %v880 = vadd.f32 %v169, %v879
    %881 = vmatmul.bf16.gmra.mxu0 %v379
    %v882 = vpop.f32.mrf.mxu0
    %v883 = vadd.f32 %v169, %v882
    %v884 = vpop.f32.mrf.mxu0
    %v885 = vadd.f32 %v169, %v884
    %886 = vmatmul.bf16.gmra.mxu0 %v382
    %v887 = vpop.f32.mrf.mxu0
    %v888 = vadd.f32 %v169, %v887
    %v889 = vpop.f32.mrf.mxu0
    %v890 = vadd.f32 %v169, %v889
    %891 = vmatmul.bf16.gmra.mxu0 %v385
    %v892 = vpop.f32.mrf.mxu0
    %v893 = vadd.f32 %v169, %v892
    %v894 = vpop.f32.mrf.mxu0
    %v895 = vadd.f32 %v169, %v894
    %896 = vmatmul.bf16.gmra.mxu0 %v388
    %v897 = vpop.f32.mrf.mxu0
    %v898 = vadd.f32 %v169, %v897
    %v899 = vpop.f32.mrf.mxu0
    %v900 = vadd.f32 %v169, %v899
    %901 = vmatmul.bf16.gmra.mxu0 %v391
    %v902 = vpop.f32.mrf.mxu0
    %v903 = vadd.f32 %v169, %v902
    %v904 = vpop.f32.mrf.mxu0
    %v905 = vadd.f32 %v169, %v904
    %906 = vmatmul.bf16.gmra.mxu0 %v394
    %v907 = vpop.f32.mrf.mxu0
    %v908 = vadd.f32 %v169, %v907
    %v909 = vpop.f32.mrf.mxu0
    %v910 = vadd.f32 %v169, %v909
    %911 = vmatmul.bf16.gmra.mxu0 %v397
    %v912 = vpop.f32.mrf.mxu0
    %v913 = vadd.f32 %v169, %v912
    %v914 = vpop.f32.mrf.mxu0
    %v915 = vadd.f32 %v169, %v914
    %916 = vmatmul.bf16.gmra.mxu0 %v400
    %v917 = vpop.f32.mrf.mxu0
    %v918 = vadd.f32 %v169, %v917
    %v919 = vpop.f32.mrf.mxu0
    %v920 = vadd.f32 %v169, %v919
    %921 = vdwg.mxu0
    %922 = vmatpush.bf16.msra.mxu0 0
    %923 = vmatpush.bf16.msra.mxu0 %v413
    %924 = vmatpush.bf16.msra.mxu0 %v276
    %925 = vmatpush.bf16.msra.mxu0 %v272
    %926 = vmatpush.bf16.msra.mxu0 %v268
    %927 = vmatpush.bf16.msra.mxu0 %v264
    %928 = vmatpush.bf16.msra.mxu0 %v260
    %929 = vmatpush.bf16.msra.mxu0 %v256
    %930 = vmatmul.bf16.gmra.mxu0 %v307
    %v931 = vpop.f32.mrf.mxu0
    %v932 = vadd.f32 %v170, %v931
    %v933 = vpop.f32.mrf.mxu0
    %v934 = vadd.f32 %v170, %v933
    %935 = vmatmul.bf16.gmra.mxu0 %v310
    %v936 = vpop.f32.mrf.mxu0
    %v937 = vadd.f32 %v170, %v936
    %v938 = vpop.f32.mrf.mxu0
    %v939 = vadd.f32 %v170, %v938
    %940 = vmatmul.bf16.gmra.mxu0 %v313
    %v941 = vpop.f32.mrf.mxu0
    %v942 = vadd.f32 %v170, %v941
    %v943 = vpop.f32.mrf.mxu0
    %v944 = vadd.f32 %v170, %v943
    %945 = vmatmul.bf16.gmra.mxu0 %v316
    %v946 = vpop.f32.mrf.mxu0
    %v947 = vadd.f32 %v170, %v946
    %v948 = vpop.f32.mrf.mxu0
    %v949 = vadd.f32 %v170, %v948
    %950 = vmatmul.bf16.gmra.mxu0 %v319
    %v951 = vpop.f32.mrf.mxu0
    %v952 = vadd.f32 %v170, %v951
    %v953 = vpop.f32.mrf.mxu0
    %v954 = vadd.f32 %v170, %v953
    %955 = vmatmul.bf16.gmra.mxu0 %v322
    %v956 = vpop.f32.mrf.mxu0
    %v957 = vadd.f32 %v170, %v956
    %v958 = vpop.f32.mrf.mxu0
    %v959 = vadd.f32 %v170, %v958
    %960 = vmatmul.bf16.gmra.mxu0 %v325
    %v961 = vpop.f32.mrf.mxu0
    %v962 = vadd.f32 %v170, %v961
    %v963 = vpop.f32.mrf.mxu0
    %v964 = vadd.f32 %v170, %v963
    %965 = vmatmul.bf16.gmra.mxu0 %v328
    %v966 = vpop.f32.mrf.mxu0
    %v967 = vadd.f32 %v170, %v966
    %v968 = vpop.f32.mrf.mxu0
    %v969 = vadd.f32 %v170, %v968
    %970 = vmatmul.bf16.gmra.mxu0 %v331
    %v971 = vpop.f32.mrf.mxu0
    %v972 = vadd.f32 %v170, %v971
    %v973 = vpop.f32.mrf.mxu0
    %v974 = vadd.f32 %v170, %v973
    %975 = vmatmul.bf16.gmra.mxu0 %v334
    %v976 = vpop.f32.mrf.mxu0
    %v977 = vadd.f32 %v170, %v976
    %v978 = vpop.f32.mrf.mxu0
    %v979 = vadd.f32 %v170, %v978
    %980 = vmatmul.bf16.gmra.mxu0 %v337
    %v981 = vpop.f32.mrf.mxu0
    %v982 = vadd.f32 %v170, %v981
    %v983 = vpop.f32.mrf.mxu0
    %v984 = vadd.f32 %v170, %v983
    %985 = vmatmul.bf16.gmra.mxu0 %v340
    %v986 = vpop.f32.mrf.mxu0
    %v987 = vadd.f32 %v170, %v986
    %v988 = vpop.f32.mrf.mxu0
    %v989 = vadd.f32 %v170, %v988
    %990 = vmatmul.bf16.gmra.mxu0 %v343
    %v991 = vpop.f32.mrf.mxu0
    %v992 = vadd.f32 %v170, %v991
    %v993 = vpop.f32.mrf.mxu0
    %v994 = vadd.f32 %v170, %v993
    %995 = vmatmul.bf16.gmra.mxu0 %v346
    %v996 = vpop.f32.mrf.mxu0
    %v997 = vadd.f32 %v170, %v996
    %v998 = vpop.f32.mrf.mxu0
    %v999 = vadd.f32 %v170, %v998
    %1000 = vmatmul.bf16.gmra.mxu0 %v349
    %v1001 = vpop.f32.mrf.mxu0
    %v1002 = vadd.f32 %v170, %v1001
    %v1003 = vpop.f32.mrf.mxu0
    %v1004 = vadd.f32 %v170, %v1003
    %1005 = vmatmul.bf16.gmra.mxu0 %v352
    %v1006 = vpop.f32.mrf.mxu0
    %v1007 = vadd.f32 %v170, %v1006
    %v1008 = vpop.f32.mrf.mxu0
    %v1009 = vadd.f32 %v170, %v1008
    %1010 = vmatmul.bf16.gmra.mxu0 %v355
    %v1011 = vpop.f32.mrf.mxu0
    %v1012 = vadd.f32 %v170, %v1011
    %v1013 = vpop.f32.mrf.mxu0
    %v1014 = vadd.f32 %v170, %v1013
    %1015 = vmatmul.bf16.gmra.mxu0 %v358
    %v1016 = vpop.f32.mrf.mxu0
    %v1017 = vadd.f32 %v170, %v1016
    %v1018 = vpop.f32.mrf.mxu0
    %v1019 = vadd.f32 %v170, %v1018
    %1020 = vmatmul.bf16.gmra.mxu0 %v361
    %v1021 = vpop.f32.mrf.mxu0
    %v1022 = vadd.f32 %v170, %v1021
    %v1023 = vpop.f32.mrf.mxu0
    %v1024 = vadd.f32 %v170, %v1023
    %1025 = vmatmul.bf16.gmra.mxu0 %v364
    %v1026 = vpop.f32.mrf.mxu0
    %v1027 = vadd.f32 %v170, %v1026
    %v1028 = vpop.f32.mrf.mxu0
    %v1029 = vadd.f32 %v170, %v1028
    %1030 = vmatmul.bf16.gmra.mxu0 %v367
    %v1031 = vpop.f32.mrf.mxu0
    %v1032 = vadd.f32 %v170, %v1031
    %v1033 = vpop.f32.mrf.mxu0
    %v1034 = vadd.f32 %v170, %v1033
    %1035 = vmatmul.bf16.gmra.mxu0 %v370
    %v1036 = vpop.f32.mrf.mxu0
    %v1037 = vadd.f32 %v170, %v1036
    %v1038 = vpop.f32.mrf.mxu0
    %v1039 = vadd.f32 %v170, %v1038
    %1040 = vmatmul.bf16.gmra.mxu0 %v373
    %v1041 = vpop.f32.mrf.mxu0
    %v1042 = vadd.f32 %v170, %v1041
    %v1043 = vpop.f32.mrf.mxu0
    %v1044 = vadd.f32 %v170, %v1043
    %1045 = vmatmul.bf16.gmra.mxu0 %v376
    %v1046 = vpop.f32.mrf.mxu0
    %v1047 = vadd.f32 %v170, %v1046
    %v1048 = vpop.f32.mrf.mxu0
    %v1049 = vadd.f32 %v170, %v1048
    %1050 = vmatmul.bf16.gmra.mxu0 %v379
    %v1051 = vpop.f32.mrf.mxu0
    %v1052 = vadd.f32 %v170, %v1051
    %v1053 = vpop.f32.mrf.mxu0
    %v1054 = vadd.f32 %v170, %v1053
    %1055 = vmatmul.bf16.gmra.mxu0 %v382
    %v1056 = vpop.f32.mrf.mxu0
    %v1057 = vadd.f32 %v170, %v1056
    %v1058 = vpop.f32.mrf.mxu0
    %v1059 = vadd.f32 %v170, %v1058
    %1060 = vmatmul.bf16.gmra.mxu0 %v385
    %v1061 = vpop.f32.mrf.mxu0
    %v1062 = vadd.f32 %v170, %v1061
    %v1063 = vpop.f32.mrf.mxu0
    %v1064 = vadd.f32 %v170, %v1063
    %1065 = vmatmul.bf16.gmra.mxu0 %v388
    %v1066 = vpop.f32.mrf.mxu0
    %v1067 = vadd.f32 %v170, %v1066
    %v1068 = vpop.f32.mrf.mxu0
    %v1069 = vadd.f32 %v170, %v1068
    %1070 = vmatmul.bf16.gmra.mxu0 %v391
    %v1071 = vpop.f32.mrf.mxu0
    %v1072 = vadd.f32 %v170, %v1071
    %v1073 = vpop.f32.mrf.mxu0
    %v1074 = vadd.f32 %v170, %v1073
    %1075 = vmatmul.bf16.gmra.mxu0 %v394
    %v1076 = vpop.f32.mrf.mxu0
    %v1077 = vadd.f32 %v170, %v1076
    %v1078 = vpop.f32.mrf.mxu0
    %v1079 = vadd.f32 %v170, %v1078
    %1080 = vmatmul.bf16.gmra.mxu0 %v397
    %v1081 = vpop.f32.mrf.mxu0
    %v1082 = vadd.f32 %v170, %v1081
    %v1083 = vpop.f32.mrf.mxu0
    %v1084 = vadd.f32 %v170, %v1083
    %1085 = vmatmul.bf16.gmra.mxu0 %v400
    %v1086 = vpop.f32.mrf.mxu0
    %v1087 = vadd.f32 %v170, %v1086
    %v1088 = vpop.f32.mrf.mxu0
    %v1089 = vadd.f32 %v170, %v1088
    %1090 = vdwg.mxu0
    %v1091 = vmax.f32 %v425, 0.0
    %v1092 = vmax.f32 %v594, 0.0
    %v1093 = vmax.f32 %v763, 0.0
    %v1094 = vmax.f32 %v932, 0.0
    %v1095 = vmax.f32 %v427, 0.0
    %v1096 = vmax.f32 %v596, 0.0
    %v1097 = vmax.f32 %v765, 0.0
    %v1098 = vmax.f32 %v934, 0.0
    %v1099 = vmax.f32 %v430, 0.0
    %v1100 = vmax.f32 %v599, 0.0
    %v1101 = vmax.f32 %v768, 0.0
    %v1102 = vmax.f32 %v937, 0.0
    %v1103 = vmax.f32 %v432, 0.0
    %v1104 = vmax.f32 %v601, 0.0
    %v1105 = vmax.f32 %v770, 0.0
    %v1106 = vmax.f32 %v939, 0.0
    %v1107 = vmax.f32 %v435, 0.0
    %v1108 = vmax.f32 %v604, 0.0
    %v1109 = vmax.f32 %v773, 0.0
    %v1110 = vmax.f32 %v942, 0.0
    %v1111 = vmax.f32 %v437, 0.0
    %v1112 = vmax.f32 %v606, 0.0
    %v1113 = vmax.f32 %v775, 0.0
    %v1114 = vmax.f32 %v944, 0.0
    %v1115 = vmax.f32 %v440, 0.0
    %v1116 = vmax.f32 %v609, 0.0
    %v1117 = vmax.f32 %v778, 0.0
    %v1118 = vmax.f32 %v947, 0.0
    %v1119 = vmax.f32 %v442, 0.0
    %v1120 = vmax.f32 %v611, 0.0
    %v1121 = vmax.f32 %v780, 0.0
    %v1122 = vmax.f32 %v949, 0.0
    %v1123 = vmax.f32 %v445, 0.0
    %v1124 = vmax.f32 %v614, 0.0
    %v1125 = vmax.f32 %v783, 0.0
    %v1126 = vmax.f32 %v952, 0.0
    %v1127 = vmax.f32 %v447, 0.0
    %v1128 = vmax.f32 %v616, 0.0
    %v1129 = vmax.f32 %v785, 0.0
    %v1130 = vmax.f32 %v954, 0.0
    %v1131 = vmax.f32 %v450, 0.0
    %v1132 = vmax.f32 %v619, 0.0
    %v1133 = vmax.f32 %v788, 0.0
    %v1134 = vmax.f32 %v957, 0.0
    %v1135 = vmax.f32 %v452, 0.0
    %v1136 = vmax.f32 %v621, 0.0
    %v1137 = vmax.f32 %v790, 0.0
    %v1138 = vmax.f32 %v959, 0.0
    %v1139 = vmax.f32 %v455, 0.0
    %v1140 = vmax.f32 %v624, 0.0
    %v1141 = vmax.f32 %v793, 0.0
    %v1142 = vmax.f32 %v962, 0.0
    %v1143 = vmax.f32 %v457, 0.0
    %v1144 = vmax.f32 %v626, 0.0
    %v1145 = vmax.f32 %v795, 0.0
    %v1146 = vmax.f32 %v964, 0.0
    %v1147 = vmax.f32 %v460, 0.0
    %v1148 = vmax.f32 %v629, 0.0
    %v1149 = vmax.f32 %v798, 0.0
    %v1150 = vmax.f32 %v967, 0.0
    %v1151 = vmax.f32 %v462, 0.0
    %v1152 = vmax.f32 %v631, 0.0
    %v1153 = vmax.f32 %v800, 0.0
    %v1154 = vmax.f32 %v969, 0.0
    %v1155 = vmax.f32 %v465, 0.0
    %v1156 = vmax.f32 %v634, 0.0
    %v1157 = vmax.f32 %v803, 0.0
    %v1158 = vmax.f32 %v972, 0.0
    %v1159 = vmax.f32 %v467, 0.0
    %v1160 = vmax.f32 %v636, 0.0
    %v1161 = vmax.f32 %v805, 0.0
    %v1162 = vmax.f32 %v974, 0.0
    %v1163 = vmax.f32 %v470, 0.0
    %v1164 = vmax.f32 %v639, 0.0
    %v1165 = vmax.f32 %v808, 0.0
    %v1166 = vmax.f32 %v977, 0.0
    %v1167 = vmax.f32 %v472, 0.0
    %v1168 = vmax.f32 %v641, 0.0
    %v1169 = vmax.f32 %v810, 0.0
    %v1170 = vmax.f32 %v979, 0.0
    %v1171 = vmax.f32 %v475, 0.0
    %v1172 = vmax.f32 %v644, 0.0
    %v1173 = vmax.f32 %v813, 0.0
    %v1174 = vmax.f32 %v982, 0.0
    %v1175 = vmax.f32 %v477, 0.0
    %v1176 = vmax.f32 %v646, 0.0
    %v1177 = vmax.f32 %v815, 0.0
    %v1178 = vmax.f32 %v984, 0.0
    %v1179 = vmax.f32 %v480, 0.0
    %v1180 = vmax.f32 %v649, 0.0
    %v1181 = vmax.f32 %v818, 0.0
    %v1182 = vmax.f32 %v987, 0.0
    %v1183 = vmax.f32 %v482, 0.0
    %v1184 = vmax.f32 %v651, 0.0
    %v1185 = vmax.f32 %v820, 0.0
    %v1186 = vmax.f32 %v989, 0.0
    %v1187 = vmax.f32 %v485, 0.0
    %v1188 = vmax.f32 %v654, 0.0
    %v1189 = vmax.f32 %v823, 0.0
    %v1190 = vmax.f32 %v992, 0.0
    %v1191 = vmax.f32 %v487, 0.0
    %v1192 = vmax.f32 %v656, 0.0
    %v1193 = vmax.f32 %v825, 0.0
    %v1194 = vmax.f32 %v994, 0.0
    %v1195 = vmax.f32 %v490, 0.0
    %v1196 = vmax.f32 %v659, 0.0
    %v1197 = vmax.f32 %v828, 0.0
    %v1198 = vmax.f32 %v997, 0.0
    %v1199 = vmax.f32 %v492, 0.0
    %v1200 = vmax.f32 %v661, 0.0
    %v1201 = vmax.f32 %v830, 0.0
    %v1202 = vmax.f32 %v999, 0.0
    %v1203 = vmax.f32 %v495, 0.0
    %v1204 = vmax.f32 %v664, 0.0
    %v1205 = vmax.f32 %v833, 0.0
    %v1206 = vmax.f32 %v1002, 0.0
    %v1207 = vmax.f32 %v497, 0.0
    %v1208 = vmax.f32 %v666, 0.0
    %v1209 = vmax.f32 %v835, 0.0
    %v1210 = vmax.f32 %v1004, 0.0
    %v1211 = vmax.f32 %v500, 0.0
    %v1212 = vmax.f32 %v669, 0.0
    %v1213 = vmax.f32 %v838, 0.0
    %v1214 = vmax.f32 %v1007, 0.0
    %v1215 = vmax.f32 %v502, 0.0
    %v1216 = vmax.f32 %v671, 0.0
    %v1217 = vmax.f32 %v840, 0.0
    %v1218 = vmax.f32 %v1009, 0.0
    %v1219 = vmax.f32 %v505, 0.0
    %v1220 = vmax.f32 %v674, 0.0
    %v1221 = vmax.f32 %v843, 0.0
    %v1222 = vmax.f32 %v1012, 0.0
    %v1223 = vmax.f32 %v507, 0.0
    %v1224 = vmax.f32 %v676, 0.0
    %v1225 = vmax.f32 %v845, 0.0
    %v1226 = vmax.f32 %v1014, 0.0
    %v1227 = vmax.f32 %v510, 0.0
    %v1228 = vmax.f32 %v679, 0.0
    %v1229 = vmax.f32 %v848, 0.0
    %v1230 = vmax.f32 %v1017, 0.0
    %v1231 = vmax.f32 %v512, 0.0
    %v1232 = vmax.f32 %v681, 0.0
    %v1233 = vmax.f32 %v850, 0.0
    %v1234 = vmax.f32 %v1019, 0.0
    %v1235 = vmax.f32 %v515, 0.0
    %v1236 = vmax.f32 %v684, 0.0
    %v1237 = vmax.f32 %v853, 0.0
    %v1238 = vmax.f32 %v1022, 0.0
    %v1239 = vmax.f32 %v517, 0.0
    %v1240 = vmax.f32 %v686, 0.0
    %v1241 = vmax.f32 %v855, 0.0
    %v1242 = vmax.f32 %v1024, 0.0
    %v1243 = vmax.f32 %v520, 0.0
    %v1244 = vmax.f32 %v689, 0.0
    %v1245 = vmax.f32 %v858, 0.0
    %v1246 = vmax.f32 %v1027, 0.0
    %v1247 = vmax.f32 %v522, 0.0
    %v1248 = vmax.f32 %v691, 0.0
    %v1249 = vmax.f32 %v860, 0.0
    %v1250 = vmax.f32 %v1029, 0.0
    %v1251 = vmax.f32 %v525, 0.0
    %v1252 = vmax.f32 %v694, 0.0
    %v1253 = vmax.f32 %v863, 0.0
    %v1254 = vmax.f32 %v1032, 0.0
    %v1255 = vmax.f32 %v527, 0.0
    %v1256 = vmax.f32 %v696, 0.0
    %v1257 = vmax.f32 %v865, 0.0
    %v1258 = vmax.f32 %v1034, 0.0
    %v1259 = vmax.f32 %v530, 0.0
    %v1260 = vmax.f32 %v699, 0.0
    %v1261 = vmax.f32 %v868, 0.0
    %v1262 = vmax.f32 %v1037, 0.0
    %v1263 = vmax.f32 %v532, 0.0
    %v1264 = vmax.f32 %v701, 0.0
    %v1265 = vmax.f32 %v870, 0.0
    %v1266 = vmax.f32 %v1039, 0.0
    %v1267 = vmax.f32 %v535, 0.0
    %v1268 = vmax.f32 %v704, 0.0
    %v1269 = vmax.f32 %v873, 0.0
    %v1270 = vmax.f32 %v1042, 0.0
    %v1271 = vmax.f32 %v537, 0.0
    %v1272 = vmax.f32 %v706, 0.0
    %v1273 = vmax.f32 %v875, 0.0
    %v1274 = vmax.f32 %v1044, 0.0
    %v1275 = vmax.f32 %v540, 0.0
    %v1276 = vmax.f32 %v709, 0.0
    %v1277 = vmax.f32 %v878, 0.0
    %v1278 = vmax.f32 %v1047, 0.0
    %v1279 = vmax.f32 %v542, 0.0
    %v1280 = vmax.f32 %v711, 0.0
    %v1281 = vmax.f32 %v880, 0.0
    %v1282 = vmax.f32 %v1049, 0.0
    %v1283 = vmax.f32 %v545, 0.0
    %v1284 = vmax.f32 %v714, 0.0
    %v1285 = vmax.f32 %v883, 0.0
    %v1286 = vmax.f32 %v1052, 0.0
    %v1287 = vmax.f32 %v547, 0.0
    %v1288 = vmax.f32 %v716, 0.0
    %v1289 = vmax.f32 %v885, 0.0
    %v1290 = vmax.f32 %v1054, 0.0
    %v1291 = vmax.f32 %v550, 0.0
    %v1292 = vmax.f32 %v719, 0.0
    %v1293 = vmax.f32 %v888, 0.0
    %v1294 = vmax.f32 %v1057, 0.0
    %v1295 = vmax.f32 %v552, 0.0
    %v1296 = vmax.f32 %v721, 0.0
    %v1297 = vmax.f32 %v890, 0.0
    %v1298 = vmax.f32 %v1059, 0.0
    %v1299 = vmax.f32 %v555, 0.0
    %v1300 = vmax.f32 %v724, 0.0
    %v1301 = vmax.f32 %v893, 0.0
    %v1302 = vmax.f32 %v1062, 0.0
    %v1303 = vmax.f32 %v557, 0.0
    %v1304 = vmax.f32 %v726, 0.0
    %v1305 = vmax.f32 %v895, 0.0
    %v1306 = vmax.f32 %v1064, 0.0
    %v1307 = vmax.f32 %v560, 0.0
    %v1308 = vmax.f32 %v729, 0.0
    %v1309 = vmax.f32 %v898, 0.0
    %v1310 = vmax.f32 %v1067, 0.0
    %v1311 = vmax.f32 %v562, 0.0
    %v1312 = vmax.f32 %v731, 0.0
    %v1313 = vmax.f32 %v900, 0.0
    %v1314 = vmax.f32 %v1069, 0.0
    %v1315 = vmax.f32 %v565, 0.0
    %v1316 = vmax.f32 %v734, 0.0
    %v1317 = vmax.f32 %v903, 0.0
    %v1318 = vmax.f32 %v1072, 0.0
    %v1319 = vmax.f32 %v567, 0.0
    %v1320 = vmax.f32 %v736, 0.0
    %v1321 = vmax.f32 %v905, 0.0
    %v1322 = vmax.f32 %v1074, 0.0
    %v1323 = vmax.f32 %v570, 0.0
    %v1324 = vmax.f32 %v739, 0.0
    %v1325 = vmax.f32 %v908, 0.0
    %v1326 = vmax.f32 %v1077, 0.0
    %v1327 = vmax.f32 %v572, 0.0
    %v1328 = vmax.f32 %v741, 0.0
    %v1329 = vmax.f32 %v910, 0.0
    %v1330 = vmax.f32 %v1079, 0.0
    %v1331 = vmax.f32 %v575, 0.0
    %v1332 = vmax.f32 %v744, 0.0
    %v1333 = vmax.f32 %v913, 0.0
    %v1334 = vmax.f32 %v1082, 0.0
    %v1335 = vmax.f32 %v577, 0.0
    %v1336 = vmax.f32 %v746, 0.0
    %v1337 = vmax.f32 %v915, 0.0
    %v1338 = vmax.f32 %v1084, 0.0
    %v1339 = vmax.f32 %v580, 0.0
    %v1340 = vmax.f32 %v749, 0.0
    %v1341 = vmax.f32 %v918, 0.0
    %v1342 = vmax.f32 %v1087, 0.0
    %v1343 = vmax.f32 %v582, 0.0
    %v1344 = vmax.f32 %v751, 0.0
    %v1345 = vmax.f32 %v920, 0.0
    %v1346 = vmax.f32 %v1089, 0.0
    %v1347 = vpack.c.bf16 %v1095, %v1091
    %v1348 = vpack.c.bf16 %v1096, %v1092
    %v1349 = vpack.c.bf16 %v1097, %v1093
    %v1350 = vpack.c.bf16 %v1098, %v1094
    %v1351 = vpack.c.bf16 %v1103, %v1099
    %v1352 = vpack.c.bf16 %v1104, %v1100
    %v1353 = vpack.c.bf16 %v1105, %v1101
    %v1354 = vpack.c.bf16 %v1106, %v1102
    %v1355 = vpack.c.bf16 %v1111, %v1107
    %v1356 = vpack.c.bf16 %v1112, %v1108
    %v1357 = vpack.c.bf16 %v1113, %v1109
    %v1358 = vpack.c.bf16 %v1114, %v1110
    %v1359 = vpack.c.bf16 %v1119, %v1115
    %v1360 = vpack.c.bf16 %v1120, %v1116
    %v1361 = vpack.c.bf16 %v1121, %v1117
    %v1362 = vpack.c.bf16 %v1122, %v1118
    %v1363 = vpack.c.bf16 %v1127, %v1123
    %v1364 = vpack.c.bf16 %v1128, %v1124
    %v1365 = vpack.c.bf16 %v1129, %v1125
    %v1366 = vpack.c.bf16 %v1130, %v1126
    %v1367 = vpack.c.bf16 %v1135, %v1131
    %v1368 = vpack.c.bf16 %v1136, %v1132
    %v1369 = vpack.c.bf16 %v1137, %v1133
    %v1370 = vpack.c.bf16 %v1138, %v1134
    %v1371 = vpack.c.bf16 %v1143, %v1139
    %v1372 = vpack.c.bf16 %v1144, %v1140
    %v1373 = vpack.c.bf16 %v1145, %v1141
    %v1374 = vpack.c.bf16 %v1146, %v1142
    %v1375 = vpack.c.bf16 %v1151, %v1147
    %v1376 = vpack.c.bf16 %v1152, %v1148
    %v1377 = vpack.c.bf16 %v1153, %v1149
    %v1378 = vpack.c.bf16 %v1154, %v1150
    %v1379 = vpack.c.bf16 %v1159, %v1155
    %v1380 = vpack.c.bf16 %v1160, %v1156
    %v1381 = vpack.c.bf16 %v1161, %v1157
    %v1382 = vpack.c.bf16 %v1162, %v1158
    %v1383 = vpack.c.bf16 %v1167, %v1163
    %v1384 = vpack.c.bf16 %v1168, %v1164
    %v1385 = vpack.c.bf16 %v1169, %v1165
    %v1386 = vpack.c.bf16 %v1170, %v1166
    %v1387 = vpack.c.bf16 %v1175, %v1171
    %v1388 = vpack.c.bf16 %v1176, %v1172
    %v1389 = vpack.c.bf16 %v1177, %v1173
    %v1390 = vpack.c.bf16 %v1178, %v1174
    %v1391 = vpack.c.bf16 %v1183, %v1179
    %v1392 = vpack.c.bf16 %v1184, %v1180
    %v1393 = vpack.c.bf16 %v1185, %v1181
    %v1394 = vpack.c.bf16 %v1186, %v1182
    %v1395 = vpack.c.bf16 %v1191, %v1187
    %v1396 = vpack.c.bf16 %v1192, %v1188
    %v1397 = vpack.c.bf16 %v1193, %v1189
    %v1398 = vpack.c.bf16 %v1194, %v1190
    %v1399 = vpack.c.bf16 %v1199, %v1195
    %v1400 = vpack.c.bf16 %v1200, %v1196
    %v1401 = vpack.c.bf16 %v1201, %v1197
    %v1402 = vpack.c.bf16 %v1202, %v1198
    %v1403 = vpack.c.bf16 %v1207, %v1203
    %v1404 = vpack.c.bf16 %v1208, %v1204
    %v1405 = vpack.c.bf16 %v1209, %v1205
    %v1406 = vpack.c.bf16 %v1210, %v1206
    %v1407 = vpack.c.bf16 %v1215, %v1211
    %v1408 = vpack.c.bf16 %v1216, %v1212
    %v1409 = vpack.c.bf16 %v1217, %v1213
    %v1410 = vpack.c.bf16 %v1218, %v1214
    %v1411 = vpack.c.bf16 %v1223, %v1219
    %v1412 = vpack.c.bf16 %v1224, %v1220
    %v1413 = vpack.c.bf16 %v1225, %v1221
    %v1414 = vpack.c.bf16 %v1226, %v1222
    %v1415 = vpack.c.bf16 %v1231, %v1227
    %v1416 = vpack.c.bf16 %v1232, %v1228
    %v1417 = vpack.c.bf16 %v1233, %v1229
    %v1418 = vpack.c.bf16 %v1234, %v1230
    %v1419 = vpack.c.bf16 %v1239, %v1235
    %v1420 = vpack.c.bf16 %v1240, %v1236
    %v1421 = vpack.c.bf16 %v1241, %v1237
    %v1422 = vpack.c.bf16 %v1242, %v1238
    %v1423 = vpack.c.bf16 %v1247, %v1243
    %v1424 = vpack.c.bf16 %v1248, %v1244
    %v1425 = vpack.c.bf16 %v1249, %v1245
    %v1426 = vpack.c.bf16 %v1250, %v1246
    %v1427 = vpack.c.bf16 %v1255, %v1251
    %v1428 = vpack.c.bf16 %v1256, %v1252
    %v1429 = vpack.c.bf16 %v1257, %v1253
    %v1430 = vpack.c.bf16 %v1258, %v1254
    %v1431 = vpack.c.bf16 %v1263, %v1259
    %v1432 = vpack.c.bf16 %v1264, %v1260
    %v1433 = vpack.c.bf16 %v1265, %v1261
    %v1434 = vpack.c.bf16 %v1266, %v1262
    %v1435 = vpack.c.bf16 %v1271, %v1267
    %v1436 = vpack.c.bf16 %v1272, %v1268
    %v1437 = vpack.c.bf16 %v1273, %v1269
    %v1438 = vpack.c.bf16 %v1274, %v1270
    %v1439 = vpack.c.bf16 %v1279, %v1275
    %v1440 = vpack.c.bf16 %v1280, %v1276
    %v1441 = vpack.c.bf16 %v1281, %v1277
    %v1442 = vpack.c.bf16 %v1282, %v1278
    %v1443 = vpack.c.bf16 %v1287, %v1283
    %v1444 = vpack.c.bf16 %v1288, %v1284
    %v1445 = vpack.c.bf16 %v1289, %v1285
    %v1446 = vpack.c.bf16 %v1290, %v1286
    %v1447 = vpack.c.bf16 %v1295, %v1291
    %v1448 = vpack.c.bf16 %v1296, %v1292
    %v1449 = vpack.c.bf16 %v1297, %v1293
    %v1450 = vpack.c.bf16 %v1298, %v1294
    %v1451 = vpack.c.bf16 %v1303, %v1299
    %v1452 = vpack.c.bf16 %v1304, %v1300
    %v1453 = vpack.c.bf16 %v1305, %v1301
    %v1454 = vpack.c.bf16 %v1306, %v1302
    %v1455 = vpack.c.bf16 %v1311, %v1307
    %v1456 = vpack.c.bf16 %v1312, %v1308
    %v1457 = vpack.c.bf16 %v1313, %v1309
    %v1458 = vpack.c.bf16 %v1314, %v1310
    %v1459 = vpack.c.bf16 %v1319, %v1315
    %v1460 = vpack.c.bf16 %v1320, %v1316
    %v1461 = vpack.c.bf16 %v1321, %v1317
    %v1462 = vpack.c.bf16 %v1322, %v1318
    %v1463 = vpack.c.bf16 %v1327, %v1323
    %v1464 = vpack.c.bf16 %v1328, %v1324
    %v1465 = vpack.c.bf16 %v1329, %v1325
    %v1466 = vpack.c.bf16 %v1330, %v1326
    %v1467 = vpack.c.bf16 %v1335, %v1331
    %v1468 = vpack.c.bf16 %v1336, %v1332
    %v1469 = vpack.c.bf16 %v1337, %v1333
    %v1470 = vpack.c.bf16 %v1338, %v1334
    %v1471 = vpack.c.bf16 %v1343, %v1339
    %v1472 = vpack.c.bf16 %v1344, %v1340
    %v1473 = vpack.c.bf16 %v1345, %v1341
    %v1474 = vpack.c.bf16 %v1346, %v1342
    %v1475 = vld [vmem:[%s3] sm:$0xff]
    %v1476 = vld [vmem:[%s3 + $0x8] sm:$0xff]
    %v1477 = vld [vmem:[%s3 + $0x10] sm:$0xff]
    %v1478 = vld [vmem:[%s3 + $0x18] sm:$0xff]
    %v1479 = vld [vmem:[%s3 + $0x20] sm:$0xff]
    %v1480 = vld [vmem:[%s3 + $0x28] sm:$0xff]
    %v1481 = vld [vmem:[%s3 + $0x30] sm:$0xff]
    %v1482 = vld [vmem:[%s3 + $0x38] sm:$0xff]
    %v1483 = vld [vmem:[%s3 + $0x40] sm:$0xff]
    %v1484 = vld [vmem:[%s3 + $0x48] sm:$0xff]
    %v1485 = vld [vmem:[%s3 + $0x50] sm:$0xff]
    %v1486 = vld [vmem:[%s3 + $0x58] sm:$0xff]
    %v1487 = vld [vmem:[%s3 + $0x60] sm:$0xff]
    %v1488 = vld [vmem:[%s3 + $0x68] sm:$0xff]
    %v1489 = vld [vmem:[%s3 + $0x70] sm:$0xff]
    %v1490 = vld [vmem:[%s3 + $0x78] sm:$0xff]
    %v1491 = vld [vmem:[%s3 + $0x80] sm:$0xff]
    %v1492 = vld [vmem:[%s3 + $0x88] sm:$0xff]
    %v1493 = vld [vmem:[%s3 + $0x90] sm:$0xff]
    %v1494 = vld [vmem:[%s3 + $0x98] sm:$0xff]
    %v1495 = vld [vmem:[%s3 + $0xa0] sm:$0xff]
    %v1496 = vld [vmem:[%s3 + $0xa8] sm:$0xff]
    %v1497 = vld [vmem:[%s3 + $0xb0] sm:$0xff]
    %v1498 = vld [vmem:[%s3 + $0xb8] sm:$0xff]
    %v1499 = vld [vmem:[%s3 + $0xc0] sm:$0xff]
    %v1500 = vld [vmem:[%s3 + $0xc8] sm:$0xff]
    %v1501 = vld [vmem:[%s3 + $0xd0] sm:$0xff]
    %v1502 = vld [vmem:[%s3 + $0xd8] sm:$0xff]
    %v1503 = vld [vmem:[%s3 + $0xe0] sm:$0xff]
    %v1504 = vld [vmem:[%s3 + $0xe8] sm:$0xff]
    %v1505 = vld [vmem:[%s3 + $0xf0] sm:$0xff]
    %v1506 = vld [vmem:[%s3 + $0xf8] sm:$0xff]
    %v1507 = vld [vmem:[%s3 + $0x100] sm:$0xff]
    %v1508 = vld [vmem:[%s3 + $0x108] sm:$0xff]
    %v1509 = vld [vmem:[%s3 + $0x110] sm:$0xff]
    %v1510 = vld [vmem:[%s3 + $0x118] sm:$0xff]
    %v1511 = vld [vmem:[%s3 + $0x120] sm:$0xff]
    %v1512 = vld [vmem:[%s3 + $0x128] sm:$0xff]
    %v1513 = vld [vmem:[%s3 + $0x130] sm:$0xff]
    %v1514 = vld [vmem:[%s3 + $0x138] sm:$0xff]
    %v1515 = vld [vmem:[%s3 + $0x140] sm:$0xff]
    %v1516 = vld [vmem:[%s3 + $0x148] sm:$0xff]
    %v1517 = vld [vmem:[%s3 + $0x150] sm:$0xff]
    %v1518 = vld [vmem:[%s3 + $0x158] sm:$0xff]
    %v1519 = vld [vmem:[%s3 + $0x160] sm:$0xff]
    %v1520 = vld [vmem:[%s3 + $0x168] sm:$0xff]
    %v1521 = vld [vmem:[%s3 + $0x170] sm:$0xff]
    %v1522 = vld [vmem:[%s3 + $0x178] sm:$0xff]
    %v1523 = vld [vmem:[%s3 + $0x180] sm:$0xff]
    %v1524 = vld [vmem:[%s3 + $0x188] sm:$0xff]
    %v1525 = vld [vmem:[%s3 + $0x190] sm:$0xff]
    %v1526 = vld [vmem:[%s3 + $0x198] sm:$0xff]
    %v1527 = vld [vmem:[%s3 + $0x1a0] sm:$0xff]
    %v1528 = vld [vmem:[%s3 + $0x1a8] sm:$0xff]
    %v1529 = vld [vmem:[%s3 + $0x1b0] sm:$0xff]
    %v1530 = vld [vmem:[%s3 + $0x1b8] sm:$0xff]
    %v1531 = vld [vmem:[%s3 + $0x1c0] sm:$0xff]
    %v1532 = vld [vmem:[%s3 + $0x1c8] sm:$0xff]
    %v1533 = vld [vmem:[%s3 + $0x1d0] sm:$0xff]
    %v1534 = vld [vmem:[%s3 + $0x1d8] sm:$0xff]
    %v1535 = vld [vmem:[%s3 + $0x1e0] sm:$0xff]
    %v1536 = vld [vmem:[%s3 + $0x1e8] sm:$0xff]
    %v1537 = vld [vmem:[%s3 + $0x1f0] sm:$0xff]
    %v1538 = vld [vmem:[%s3 + $0x1f8] sm:$0xff]
    %v1539 = vld [vmem:[%s4] sm:$0x3]
    %v1541 = vperm.slane %v1539, 0
    %v1542 = vperm.slane %v1539, 1
    %v1609 = vunpack.c.l.b16 %v1475
    %v1610 = vunpack.c.h.b16 %v1475
    %v1611 = vunpack.c.l.b16 %v1476
    %v1612 = vunpack.c.h.b16 %v1476
    %v1613 = vunpack.c.l.b16 %v1477
    %v1614 = vunpack.c.h.b16 %v1477
    %v1615 = vunpack.c.l.b16 %v1478
    %v1616 = vunpack.c.h.b16 %v1478
    %v1617 = vunpack.c.l.b16 %v1479
    %v1618 = vunpack.c.h.b16 %v1479
    %v1619 = vunpack.c.l.b16 %v1480
    %v1620 = vunpack.c.h.b16 %v1480
    %v1621 = vunpack.c.l.b16 %v1481
    %v1622 = vunpack.c.h.b16 %v1481
    %v1623 = vunpack.c.l.b16 %v1482
    %v1624 = vunpack.c.h.b16 %v1482
    %v1625 = vunpack.c.l.b16 %v1483
    %v1626 = vunpack.c.h.b16 %v1483
    %v1627 = vunpack.c.l.b16 %v1484
    %v1628 = vunpack.c.h.b16 %v1484
    %v1629 = vunpack.c.l.b16 %v1485
    %v1630 = vunpack.c.h.b16 %v1485
    %v1631 = vunpack.c.l.b16 %v1486
    %v1632 = vunpack.c.h.b16 %v1486
    %v1633 = vunpack.c.l.b16 %v1487
    %v1634 = vunpack.c.h.b16 %v1487
    %v1635 = vunpack.c.l.b16 %v1488
    %v1636 = vunpack.c.h.b16 %v1488
    %v1637 = vunpack.c.l.b16 %v1489
    %v1638 = vunpack.c.h.b16 %v1489
    %v1639 = vunpack.c.l.b16 %v1490
    %v1640 = vunpack.c.h.b16 %v1490
    %v1641 = vunpack.c.l.b16 %v1491
    %v1642 = vunpack.c.h.b16 %v1491
    %v1643 = vunpack.c.l.b16 %v1492
    %v1644 = vunpack.c.h.b16 %v1492
    %v1645 = vunpack.c.l.b16 %v1493
    %v1646 = vunpack.c.h.b16 %v1493
    %v1647 = vunpack.c.l.b16 %v1494
    %v1648 = vunpack.c.h.b16 %v1494
    %v1649 = vunpack.c.l.b16 %v1495
    %v1650 = vunpack.c.h.b16 %v1495
    %v1651 = vunpack.c.l.b16 %v1496
    %v1652 = vunpack.c.h.b16 %v1496
    %v1653 = vunpack.c.l.b16 %v1497
    %v1654 = vunpack.c.h.b16 %v1497
    %v1655 = vunpack.c.l.b16 %v1498
    %v1656 = vunpack.c.h.b16 %v1498
    %v1657 = vunpack.c.l.b16 %v1499
    %v1658 = vunpack.c.h.b16 %v1499
    %v1659 = vunpack.c.l.b16 %v1500
    %v1660 = vunpack.c.h.b16 %v1500
    %v1661 = vunpack.c.l.b16 %v1501
    %v1662 = vunpack.c.h.b16 %v1501
    %v1663 = vunpack.c.l.b16 %v1502
    %v1664 = vunpack.c.h.b16 %v1502
    %v1665 = vunpack.c.l.b16 %v1503
    %v1666 = vunpack.c.h.b16 %v1503
    %v1667 = vunpack.c.l.b16 %v1504
    %v1668 = vunpack.c.h.b16 %v1504
    %v1669 = vunpack.c.l.b16 %v1505
    %v1670 = vunpack.c.h.b16 %v1505
    %v1671 = vunpack.c.l.b16 %v1506
    %v1672 = vunpack.c.h.b16 %v1506
    %v1673 = vunpack.c.l.b16 %v1507
    %v1674 = vunpack.c.h.b16 %v1507
    %v1675 = vunpack.c.l.b16 %v1508
    %v1676 = vunpack.c.h.b16 %v1508
    %v1677 = vunpack.c.l.b16 %v1509
    %v1678 = vunpack.c.h.b16 %v1509
    %v1679 = vunpack.c.l.b16 %v1510
    %v1680 = vunpack.c.h.b16 %v1510
    %v1681 = vunpack.c.l.b16 %v1511
    %v1682 = vunpack.c.h.b16 %v1511
    %v1683 = vunpack.c.l.b16 %v1512
    %v1684 = vunpack.c.h.b16 %v1512
    %v1685 = vunpack.c.l.b16 %v1513
    %v1686 = vunpack.c.h.b16 %v1513
    %v1687 = vunpack.c.l.b16 %v1514
    %v1688 = vunpack.c.h.b16 %v1514
    %v1689 = vunpack.c.l.b16 %v1515
    %v1690 = vunpack.c.h.b16 %v1515
    %v1691 = vunpack.c.l.b16 %v1516
    %v1692 = vunpack.c.h.b16 %v1516
    %v1693 = vunpack.c.l.b16 %v1517
    %v1694 = vunpack.c.h.b16 %v1517
    %v1695 = vunpack.c.l.b16 %v1518
    %v1696 = vunpack.c.h.b16 %v1518
    %v1697 = vunpack.c.l.b16 %v1519
    %v1698 = vunpack.c.h.b16 %v1519
    %v1699 = vunpack.c.l.b16 %v1520
    %v1700 = vunpack.c.h.b16 %v1520
    %v1701 = vunpack.c.l.b16 %v1521
    %v1702 = vunpack.c.h.b16 %v1521
    %v1703 = vunpack.c.l.b16 %v1522
    %v1704 = vunpack.c.h.b16 %v1522
    %v1705 = vunpack.c.l.b16 %v1523
    %v1706 = vunpack.c.h.b16 %v1523
    %v1707 = vunpack.c.l.b16 %v1524
    %v1708 = vunpack.c.h.b16 %v1524
    %v1709 = vunpack.c.l.b16 %v1525
    %v1710 = vunpack.c.h.b16 %v1525
    %v1711 = vunpack.c.l.b16 %v1526
    %v1712 = vunpack.c.h.b16 %v1526
    %v1713 = vunpack.c.l.b16 %v1527
    %v1714 = vunpack.c.h.b16 %v1527
    %v1715 = vunpack.c.l.b16 %v1528
    %v1716 = vunpack.c.h.b16 %v1528
    %v1717 = vunpack.c.l.b16 %v1529
    %v1718 = vunpack.c.h.b16 %v1529
    %v1719 = vunpack.c.l.b16 %v1530
    %v1720 = vunpack.c.h.b16 %v1530
    %v1721 = vunpack.c.l.b16 %v1531
    %v1722 = vunpack.c.h.b16 %v1531
    %v1723 = vunpack.c.l.b16 %v1532
    %v1724 = vunpack.c.h.b16 %v1532
    %v1725 = vunpack.c.l.b16 %v1533
    %v1726 = vunpack.c.h.b16 %v1533
    %v1727 = vunpack.c.l.b16 %v1534
    %v1728 = vunpack.c.h.b16 %v1534
    %v1729 = vunpack.c.l.b16 %v1535
    %v1730 = vunpack.c.h.b16 %v1535
    %v1731 = vunpack.c.l.b16 %v1536
    %v1732 = vunpack.c.h.b16 %v1536
    %v1733 = vunpack.c.l.b16 %v1537
    %v1734 = vunpack.c.h.b16 %v1537
    %v1735 = vunpack.c.l.b16 %v1538
    %v1736 = vunpack.c.h.b16 %v1538
    %v1737 = vpack.c.b16 %v1611, %v1609
    %v1738 = vpack.c.b16 %v1612, %v1610
    %v1739 = vpack.c.b16 %v1615, %v1613
    %v1740 = vpack.c.b16 %v1616, %v1614
    %v1741 = vpack.c.b16 %v1619, %v1617
    %v1742 = vpack.c.b16 %v1620, %v1618
    %v1743 = vpack.c.b16 %v1623, %v1621
    %v1744 = vpack.c.b16 %v1624, %v1622
    %v1745 = vpack.c.b16 %v1627, %v1625
    %v1746 = vpack.c.b16 %v1628, %v1626
    %v1747 = vpack.c.b16 %v1631, %v1629
    %v1748 = vpack.c.b16 %v1632, %v1630
    %v1749 = vpack.c.b16 %v1635, %v1633
    %v1750 = vpack.c.b16 %v1636, %v1634
    %v1751 = vpack.c.b16 %v1639, %v1637
    %v1752 = vpack.c.b16 %v1640, %v1638
    %v1753 = vpack.c.b16 %v1643, %v1641
    %v1754 = vpack.c.b16 %v1644, %v1642
    %v1755 = vpack.c.b16 %v1647, %v1645
    %v1756 = vpack.c.b16 %v1648, %v1646
    %v1757 = vpack.c.b16 %v1651, %v1649
    %v1758 = vpack.c.b16 %v1652, %v1650
    %v1759 = vpack.c.b16 %v1655, %v1653
    %v1760 = vpack.c.b16 %v1656, %v1654
    %v1761 = vpack.c.b16 %v1659, %v1657
    %v1762 = vpack.c.b16 %v1660, %v1658
    %v1763 = vpack.c.b16 %v1663, %v1661
    %v1764 = vpack.c.b16 %v1664, %v1662
    %v1765 = vpack.c.b16 %v1667, %v1665
    %v1766 = vpack.c.b16 %v1668, %v1666
    %v1767 = vpack.c.b16 %v1671, %v1669
    %v1768 = vpack.c.b16 %v1672, %v1670
    %v1769 = vpack.c.b16 %v1675, %v1673
    %v1770 = vpack.c.b16 %v1676, %v1674
    %v1771 = vpack.c.b16 %v1679, %v1677
    %v1772 = vpack.c.b16 %v1680, %v1678
    %v1773 = vpack.c.b16 %v1683, %v1681
    %v1774 = vpack.c.b16 %v1684, %v1682
    %v1775 = vpack.c.b16 %v1687, %v1685
    %v1776 = vpack.c.b16 %v1688, %v1686
    %v1777 = vpack.c.b16 %v1691, %v1689
    %v1778 = vpack.c.b16 %v1692, %v1690
    %v1779 = vpack.c.b16 %v1695, %v1693
    %v1780 = vpack.c.b16 %v1696, %v1694
    %v1781 = vpack.c.b16 %v1699, %v1697
    %v1782 = vpack.c.b16 %v1700, %v1698
    %v1783 = vpack.c.b16 %v1703, %v1701
    %v1784 = vpack.c.b16 %v1704, %v1702
    %v1785 = vpack.c.b16 %v1707, %v1705
    %v1786 = vpack.c.b16 %v1708, %v1706
    %v1787 = vpack.c.b16 %v1711, %v1709
    %v1788 = vpack.c.b16 %v1712, %v1710
    %v1789 = vpack.c.b16 %v1715, %v1713
    %v1790 = vpack.c.b16 %v1716, %v1714
    %v1791 = vpack.c.b16 %v1719, %v1717
    %v1792 = vpack.c.b16 %v1720, %v1718
    %v1793 = vpack.c.b16 %v1723, %v1721
    %v1794 = vpack.c.b16 %v1724, %v1722
    %v1795 = vpack.c.b16 %v1727, %v1725
    %v1796 = vpack.c.b16 %v1728, %v1726
    %v1797 = vpack.c.b16 %v1731, %v1729
    %v1798 = vpack.c.b16 %v1732, %v1730
    %v1799 = vpack.c.b16 %v1735, %v1733
    %v1800 = vpack.c.b16 %v1736, %v1734
    %1865 = vmatpush.bf16.msra.mxu0 %v1751
    %1866 = vmatpush.bf16.msra.mxu0 %v1749
    %1867 = vmatpush.bf16.msra.mxu0 %v1747
    %1868 = vmatpush.bf16.msra.mxu0 %v1745
    %1869 = vmatpush.bf16.msra.mxu0 %v1743
    %1870 = vmatpush.bf16.msra.mxu0 %v1741
    %1871 = vmatpush.bf16.msra.mxu0 %v1739
    %1872 = vmatpush.bf16.msra.mxu0 %v1737
    %1873 = vmatmul.bf16.gmra.mxu0 %v1347
    %v1874 = vpop.f32.mrf.mxu0
    %v1875 = vadd.f32 %v1541, %v1874
    %v1876 = vpop.f32.mrf.mxu0
    %v1877 = vadd.f32 %v1541, %v1876
    %1878 = vmatmul.bf16.gmra.mxu0 %v1351
    %v1879 = vpop.f32.mrf.mxu0
    %v1880 = vadd.f32 %v1541, %v1879
    %v1881 = vpop.f32.mrf.mxu0
    %v1882 = vadd.f32 %v1541, %v1881
    %1883 = vmatmul.bf16.gmra.mxu0 %v1355
    %v1884 = vpop.f32.mrf.mxu0
    %v1885 = vadd.f32 %v1541, %v1884
    %v1886 = vpop.f32.mrf.mxu0
    %v1887 = vadd.f32 %v1541, %v1886
    %1888 = vmatmul.bf16.gmra.mxu0 %v1359
    %v1889 = vpop.f32.mrf.mxu0
    %v1890 = vadd.f32 %v1541, %v1889
    %v1891 = vpop.f32.mrf.mxu0
    %v1892 = vadd.f32 %v1541, %v1891
    %1893 = vmatmul.bf16.gmra.mxu0 %v1363
    %v1894 = vpop.f32.mrf.mxu0
    %v1895 = vadd.f32 %v1541, %v1894
    %v1896 = vpop.f32.mrf.mxu0
    %v1897 = vadd.f32 %v1541, %v1896
    %1898 = vmatmul.bf16.gmra.mxu0 %v1367
    %v1899 = vpop.f32.mrf.mxu0
    %v1900 = vadd.f32 %v1541, %v1899
    %v1901 = vpop.f32.mrf.mxu0
    %v1902 = vadd.f32 %v1541, %v1901
    %1903 = vmatmul.bf16.gmra.mxu0 %v1371
    %v1904 = vpop.f32.mrf.mxu0
    %v1905 = vadd.f32 %v1541, %v1904
    %v1906 = vpop.f32.mrf.mxu0
    %v1907 = vadd.f32 %v1541, %v1906
    %1908 = vmatmul.bf16.gmra.mxu0 %v1375
    %v1909 = vpop.f32.mrf.mxu0
    %v1910 = vadd.f32 %v1541, %v1909
    %v1911 = vpop.f32.mrf.mxu0
    %v1912 = vadd.f32 %v1541, %v1911
    %1913 = vmatmul.bf16.gmra.mxu0 %v1379
    %v1914 = vpop.f32.mrf.mxu0
    %v1915 = vadd.f32 %v1541, %v1914
    %v1916 = vpop.f32.mrf.mxu0
    %v1917 = vadd.f32 %v1541, %v1916
    %1918 = vmatmul.bf16.gmra.mxu0 %v1383
    %v1919 = vpop.f32.mrf.mxu0
    %v1920 = vadd.f32 %v1541, %v1919
    %v1921 = vpop.f32.mrf.mxu0
    %v1922 = vadd.f32 %v1541, %v1921
    %1923 = vmatmul.bf16.gmra.mxu0 %v1387
    %v1924 = vpop.f32.mrf.mxu0
    %v1925 = vadd.f32 %v1541, %v1924
    %v1926 = vpop.f32.mrf.mxu0
    %v1927 = vadd.f32 %v1541, %v1926
    %1928 = vmatmul.bf16.gmra.mxu0 %v1391
    %v1929 = vpop.f32.mrf.mxu0
    %v1930 = vadd.f32 %v1541, %v1929
    %v1931 = vpop.f32.mrf.mxu0
    %v1932 = vadd.f32 %v1541, %v1931
    %1933 = vmatmul.bf16.gmra.mxu0 %v1395
    %v1934 = vpop.f32.mrf.mxu0
    %v1935 = vadd.f32 %v1541, %v1934
    %v1936 = vpop.f32.mrf.mxu0
    %v1937 = vadd.f32 %v1541, %v1936
    %1938 = vmatmul.bf16.gmra.mxu0 %v1399
    %v1939 = vpop.f32.mrf.mxu0
    %v1940 = vadd.f32 %v1541, %v1939
    %v1941 = vpop.f32.mrf.mxu0
    %v1942 = vadd.f32 %v1541, %v1941
    %1943 = vmatmul.bf16.gmra.mxu0 %v1403
    %v1944 = vpop.f32.mrf.mxu0
    %v1945 = vadd.f32 %v1541, %v1944
    %v1946 = vpop.f32.mrf.mxu0
    %v1947 = vadd.f32 %v1541, %v1946
    %1948 = vmatmul.bf16.gmra.mxu0 %v1407
    %v1949 = vpop.f32.mrf.mxu0
    %v1950 = vadd.f32 %v1541, %v1949
    %v1951 = vpop.f32.mrf.mxu0
    %v1952 = vadd.f32 %v1541, %v1951
    %1953 = vmatmul.bf16.gmra.mxu0 %v1411
    %v1954 = vpop.f32.mrf.mxu0
    %v1955 = vadd.f32 %v1541, %v1954
    %v1956 = vpop.f32.mrf.mxu0
    %v1957 = vadd.f32 %v1541, %v1956
    %1958 = vmatmul.bf16.gmra.mxu0 %v1415
    %v1959 = vpop.f32.mrf.mxu0
    %v1960 = vadd.f32 %v1541, %v1959
    %v1961 = vpop.f32.mrf.mxu0
    %v1962 = vadd.f32 %v1541, %v1961
    %1963 = vmatmul.bf16.gmra.mxu0 %v1419
    %v1964 = vpop.f32.mrf.mxu0
    %v1965 = vadd.f32 %v1541, %v1964
    %v1966 = vpop.f32.mrf.mxu0
    %v1967 = vadd.f32 %v1541, %v1966
    %1968 = vmatmul.bf16.gmra.mxu0 %v1423
    %v1969 = vpop.f32.mrf.mxu0
    %v1970 = vadd.f32 %v1541, %v1969
    %v1971 = vpop.f32.mrf.mxu0
    %v1972 = vadd.f32 %v1541, %v1971
    %1973 = vmatmul.bf16.gmra.mxu0 %v1427
    %v1974 = vpop.f32.mrf.mxu0
    %v1975 = vadd.f32 %v1541, %v1974
    %v1976 = vpop.f32.mrf.mxu0
    %v1977 = vadd.f32 %v1541, %v1976
    %1978 = vmatmul.bf16.gmra.mxu0 %v1431
    %v1979 = vpop.f32.mrf.mxu0
    %v1980 = vadd.f32 %v1541, %v1979
    %v1981 = vpop.f32.mrf.mxu0
    %v1982 = vadd.f32 %v1541, %v1981
    %1983 = vmatmul.bf16.gmra.mxu0 %v1435
    %v1984 = vpop.f32.mrf.mxu0
    %v1985 = vadd.f32 %v1541, %v1984
    %v1986 = vpop.f32.mrf.mxu0
    %v1987 = vadd.f32 %v1541, %v1986
    %1988 = vmatmul.bf16.gmra.mxu0 %v1439
    %v1989 = vpop.f32.mrf.mxu0
    %v1990 = vadd.f32 %v1541, %v1989
    %v1991 = vpop.f32.mrf.mxu0
    %v1992 = vadd.f32 %v1541, %v1991
    %1993 = vmatmul.bf16.gmra.mxu0 %v1443
    %v1994 = vpop.f32.mrf.mxu0
    %v1995 = vadd.f32 %v1541, %v1994
    %v1996 = vpop.f32.mrf.mxu0
    %v1997 = vadd.f32 %v1541, %v1996
    %1998 = vmatmul.bf16.gmra.mxu0 %v1447
    %v1999 = vpop.f32.mrf.mxu0
    %v2000 = vadd.f32 %v1541, %v1999
    %v2001 = vpop.f32.mrf.mxu0
    %v2002 = vadd.f32 %v1541, %v2001
    %2003 = vmatmul.bf16.gmra.mxu0 %v1451
    %v2004 = vpop.f32.mrf.mxu0
    %v2005 = vadd.f32 %v1541, %v2004
    %v2006 = vpop.f32.mrf.mxu0
    %v2007 = vadd.f32 %v1541, %v2006
    %2008 = vmatmul.bf16.gmra.mxu0 %v1455
    %v2009 = vpop.f32.mrf.mxu0
    %v2010 = vadd.f32 %v1541, %v2009
    %v2011 = vpop.f32.mrf.mxu0
    %v2012 = vadd.f32 %v1541, %v2011
    %2013 = vmatmul.bf16.gmra.mxu0 %v1459
    %v2014 = vpop.f32.mrf.mxu0
    %v2015 = vadd.f32 %v1541, %v2014
    %v2016 = vpop.f32.mrf.mxu0
    %v2017 = vadd.f32 %v1541, %v2016
    %2018 = vmatmul.bf16.gmra.mxu0 %v1463
    %v2019 = vpop.f32.mrf.mxu0
    %v2020 = vadd.f32 %v1541, %v2019
    %v2021 = vpop.f32.mrf.mxu0
    %v2022 = vadd.f32 %v1541, %v2021
    %2023 = vmatmul.bf16.gmra.mxu0 %v1467
    %v2024 = vpop.f32.mrf.mxu0
    %v2025 = vadd.f32 %v1541, %v2024
    %v2026 = vpop.f32.mrf.mxu0
    %v2027 = vadd.f32 %v1541, %v2026
    %2028 = vmatmul.bf16.gmra.mxu0 %v1471
    %v2029 = vpop.f32.mrf.mxu0
    %v2030 = vadd.f32 %v1541, %v2029
    %v2031 = vpop.f32.mrf.mxu0
    %v2032 = vadd.f32 %v1541, %v2031
    %2033 = vdwg.mxu0
    %2034 = vmatpush.bf16.msra.mxu0 %v1767
    %2035 = vmatpush.bf16.msra.mxu0 %v1765
    %2036 = vmatpush.bf16.msra.mxu0 %v1763
    %2037 = vmatpush.bf16.msra.mxu0 %v1761
    %2038 = vmatpush.bf16.msra.mxu0 %v1759
    %2039 = vmatpush.bf16.msra.mxu0 %v1757
    %2040 = vmatpush.bf16.msra.mxu0 %v1755
    %2041 = vmatpush.bf16.msra.mxu0 %v1753
    %2042 = vmatmul.bf16.gmra.mxu0 %v1348
    %v2043 = vpop.f32.mrf.mxu0
    %v2044 = vadd.f32 %v1875, %v2043
    %v2045 = vpop.f32.mrf.mxu0
    %v2046 = vadd.f32 %v1877, %v2045
    %2047 = vmatmul.bf16.gmra.mxu0 %v1352
    %v2048 = vpop.f32.mrf.mxu0
    %v2049 = vadd.f32 %v1880, %v2048
    %v2050 = vpop.f32.mrf.mxu0
    %v2051 = vadd.f32 %v1882, %v2050
    %2052 = vmatmul.bf16.gmra.mxu0 %v1356
    %v2053 = vpop.f32.mrf.mxu0
    %v2054 = vadd.f32 %v1885, %v2053
    %v2055 = vpop.f32.mrf.mxu0
    %v2056 = vadd.f32 %v1887, %v2055
    %2057 = vmatmul.bf16.gmra.mxu0 %v1360
    %v2058 = vpop.f32.mrf.mxu0
    %v2059 = vadd.f32 %v1890, %v2058
    %v2060 = vpop.f32.mrf.mxu0
    %v2061 = vadd.f32 %v1892, %v2060
    %2062 = vmatmul.bf16.gmra.mxu0 %v1364
    %v2063 = vpop.f32.mrf.mxu0
    %v2064 = vadd.f32 %v1895, %v2063
    %v2065 = vpop.f32.mrf.mxu0
    %v2066 = vadd.f32 %v1897, %v2065
    %2067 = vmatmul.bf16.gmra.mxu0 %v1368
    %v2068 = vpop.f32.mrf.mxu0
    %v2069 = vadd.f32 %v1900, %v2068
    %v2070 = vpop.f32.mrf.mxu0
    %v2071 = vadd.f32 %v1902, %v2070
    %2072 = vmatmul.bf16.gmra.mxu0 %v1372
    %v2073 = vpop.f32.mrf.mxu0
    %v2074 = vadd.f32 %v1905, %v2073
    %v2075 = vpop.f32.mrf.mxu0
    %v2076 = vadd.f32 %v1907, %v2075
    %2077 = vmatmul.bf16.gmra.mxu0 %v1376
    %v2078 = vpop.f32.mrf.mxu0
    %v2079 = vadd.f32 %v1910, %v2078
    %v2080 = vpop.f32.mrf.mxu0
    %v2081 = vadd.f32 %v1912, %v2080
    %2082 = vmatmul.bf16.gmra.mxu0 %v1380
    %v2083 = vpop.f32.mrf.mxu0
    %v2084 = vadd.f32 %v1915, %v2083
    %v2085 = vpop.f32.mrf.mxu0
    %v2086 = vadd.f32 %v1917, %v2085
    %2087 = vmatmul.bf16.gmra.mxu0 %v1384
    %v2088 = vpop.f32.mrf.mxu0
    %v2089 = vadd.f32 %v1920, %v2088
    %v2090 = vpop.f32.mrf.mxu0
    %v2091 = vadd.f32 %v1922, %v2090
    %2092 = vmatmul.bf16.gmra.mxu0 %v1388
    %v2093 = vpop.f32.mrf.mxu0
    %v2094 = vadd.f32 %v1925, %v2093
    %v2095 = vpop.f32.mrf.mxu0
    %v2096 = vadd.f32 %v1927, %v2095
    %2097 = vmatmul.bf16.gmra.mxu0 %v1392
    %v2098 = vpop.f32.mrf.mxu0
    %v2099 = vadd.f32 %v1930, %v2098
    %v2100 = vpop.f32.mrf.mxu0
    %v2101 = vadd.f32 %v1932, %v2100
    %2102 = vmatmul.bf16.gmra.mxu0 %v1396
    %v2103 = vpop.f32.mrf.mxu0
    %v2104 = vadd.f32 %v1935, %v2103
    %v2105 = vpop.f32.mrf.mxu0
    %v2106 = vadd.f32 %v1937, %v2105
    %2107 = vmatmul.bf16.gmra.mxu0 %v1400
    %v2108 = vpop.f32.mrf.mxu0
    %v2109 = vadd.f32 %v1940, %v2108
    %v2110 = vpop.f32.mrf.mxu0
    %v2111 = vadd.f32 %v1942, %v2110
    %2112 = vmatmul.bf16.gmra.mxu0 %v1404
    %v2113 = vpop.f32.mrf.mxu0
    %v2114 = vadd.f32 %v1945, %v2113
    %v2115 = vpop.f32.mrf.mxu0
    %v2116 = vadd.f32 %v1947, %v2115
    %2117 = vmatmul.bf16.gmra.mxu0 %v1408
    %v2118 = vpop.f32.mrf.mxu0
    %v2119 = vadd.f32 %v1950, %v2118
    %v2120 = vpop.f32.mrf.mxu0
    %v2121 = vadd.f32 %v1952, %v2120
    %2122 = vmatmul.bf16.gmra.mxu0 %v1412
    %v2123 = vpop.f32.mrf.mxu0
    %v2124 = vadd.f32 %v1955, %v2123
    %v2125 = vpop.f32.mrf.mxu0
    %v2126 = vadd.f32 %v1957, %v2125
    %2127 = vmatmul.bf16.gmra.mxu0 %v1416
    %v2128 = vpop.f32.mrf.mxu0
    %v2129 = vadd.f32 %v1960, %v2128
    %v2130 = vpop.f32.mrf.mxu0
    %v2131 = vadd.f32 %v1962, %v2130
    %2132 = vmatmul.bf16.gmra.mxu0 %v1420
    %v2133 = vpop.f32.mrf.mxu0
    %v2134 = vadd.f32 %v1965, %v2133
    %v2135 = vpop.f32.mrf.mxu0
    %v2136 = vadd.f32 %v1967, %v2135
    %2137 = vmatmul.bf16.gmra.mxu0 %v1424
    %v2138 = vpop.f32.mrf.mxu0
    %v2139 = vadd.f32 %v1970, %v2138
    %v2140 = vpop.f32.mrf.mxu0
    %v2141 = vadd.f32 %v1972, %v2140
    %2142 = vmatmul.bf16.gmra.mxu0 %v1428
    %v2143 = vpop.f32.mrf.mxu0
    %v2144 = vadd.f32 %v1975, %v2143
    %v2145 = vpop.f32.mrf.mxu0
    %v2146 = vadd.f32 %v1977, %v2145
    %2147 = vmatmul.bf16.gmra.mxu0 %v1432
    %v2148 = vpop.f32.mrf.mxu0
    %v2149 = vadd.f32 %v1980, %v2148
    %v2150 = vpop.f32.mrf.mxu0
    %v2151 = vadd.f32 %v1982, %v2150
    %2152 = vmatmul.bf16.gmra.mxu0 %v1436
    %v2153 = vpop.f32.mrf.mxu0
    %v2154 = vadd.f32 %v1985, %v2153
    %v2155 = vpop.f32.mrf.mxu0
    %v2156 = vadd.f32 %v1987, %v2155
    %2157 = vmatmul.bf16.gmra.mxu0 %v1440
    %v2158 = vpop.f32.mrf.mxu0
    %v2159 = vadd.f32 %v1990, %v2158
    %v2160 = vpop.f32.mrf.mxu0
    %v2161 = vadd.f32 %v1992, %v2160
    %2162 = vmatmul.bf16.gmra.mxu0 %v1444
    %v2163 = vpop.f32.mrf.mxu0
    %v2164 = vadd.f32 %v1995, %v2163
    %v2165 = vpop.f32.mrf.mxu0
    %v2166 = vadd.f32 %v1997, %v2165
    %2167 = vmatmul.bf16.gmra.mxu0 %v1448
    %v2168 = vpop.f32.mrf.mxu0
    %v2169 = vadd.f32 %v2000, %v2168
    %v2170 = vpop.f32.mrf.mxu0
    %v2171 = vadd.f32 %v2002, %v2170
    %2172 = vmatmul.bf16.gmra.mxu0 %v1452
    %v2173 = vpop.f32.mrf.mxu0
    %v2174 = vadd.f32 %v2005, %v2173
    %v2175 = vpop.f32.mrf.mxu0
    %v2176 = vadd.f32 %v2007, %v2175
    %2177 = vmatmul.bf16.gmra.mxu0 %v1456
    %v2178 = vpop.f32.mrf.mxu0
    %v2179 = vadd.f32 %v2010, %v2178
    %v2180 = vpop.f32.mrf.mxu0
    %v2181 = vadd.f32 %v2012, %v2180
    %2182 = vmatmul.bf16.gmra.mxu0 %v1460
    %v2183 = vpop.f32.mrf.mxu0
    %v2184 = vadd.f32 %v2015, %v2183
    %v2185 = vpop.f32.mrf.mxu0
    %v2186 = vadd.f32 %v2017, %v2185
    %2187 = vmatmul.bf16.gmra.mxu0 %v1464
    %v2188 = vpop.f32.mrf.mxu0
    %v2189 = vadd.f32 %v2020, %v2188
    %v2190 = vpop.f32.mrf.mxu0
    %v2191 = vadd.f32 %v2022, %v2190
    %2192 = vmatmul.bf16.gmra.mxu0 %v1468
    %v2193 = vpop.f32.mrf.mxu0
    %v2194 = vadd.f32 %v2025, %v2193
    %v2195 = vpop.f32.mrf.mxu0
    %v2196 = vadd.f32 %v2027, %v2195
    %2197 = vmatmul.bf16.gmra.mxu0 %v1472
    %v2198 = vpop.f32.mrf.mxu0
    %v2199 = vadd.f32 %v2030, %v2198
    %v2200 = vpop.f32.mrf.mxu0
    %v2201 = vadd.f32 %v2032, %v2200
    %2202 = vdwg.mxu0
    %2203 = vmatpush.bf16.msra.mxu0 %v1783
    %2204 = vmatpush.bf16.msra.mxu0 %v1781
    %2205 = vmatpush.bf16.msra.mxu0 %v1779
    %2206 = vmatpush.bf16.msra.mxu0 %v1777
    %2207 = vmatpush.bf16.msra.mxu0 %v1775
    %2208 = vmatpush.bf16.msra.mxu0 %v1773
    %2209 = vmatpush.bf16.msra.mxu0 %v1771
    %2210 = vmatpush.bf16.msra.mxu0 %v1769
    %2211 = vmatmul.bf16.gmra.mxu0 %v1349
    %v2212 = vpop.f32.mrf.mxu0
    %v2213 = vadd.f32 %v2044, %v2212
    %v2214 = vpop.f32.mrf.mxu0
    %v2215 = vadd.f32 %v2046, %v2214
    %2216 = vmatmul.bf16.gmra.mxu0 %v1353
    %v2217 = vpop.f32.mrf.mxu0
    %v2218 = vadd.f32 %v2049, %v2217
    %v2219 = vpop.f32.mrf.mxu0
    %v2220 = vadd.f32 %v2051, %v2219
    %2221 = vmatmul.bf16.gmra.mxu0 %v1357
    %v2222 = vpop.f32.mrf.mxu0
    %v2223 = vadd.f32 %v2054, %v2222
    %v2224 = vpop.f32.mrf.mxu0
    %v2225 = vadd.f32 %v2056, %v2224
    %2226 = vmatmul.bf16.gmra.mxu0 %v1361
    %v2227 = vpop.f32.mrf.mxu0
    %v2228 = vadd.f32 %v2059, %v2227
    %v2229 = vpop.f32.mrf.mxu0
    %v2230 = vadd.f32 %v2061, %v2229
    %2231 = vmatmul.bf16.gmra.mxu0 %v1365
    %v2232 = vpop.f32.mrf.mxu0
    %v2233 = vadd.f32 %v2064, %v2232
    %v2234 = vpop.f32.mrf.mxu0
    %v2235 = vadd.f32 %v2066, %v2234
    %2236 = vmatmul.bf16.gmra.mxu0 %v1369
    %v2237 = vpop.f32.mrf.mxu0
    %v2238 = vadd.f32 %v2069, %v2237
    %v2239 = vpop.f32.mrf.mxu0
    %v2240 = vadd.f32 %v2071, %v2239
    %2241 = vmatmul.bf16.gmra.mxu0 %v1373
    %v2242 = vpop.f32.mrf.mxu0
    %v2243 = vadd.f32 %v2074, %v2242
    %v2244 = vpop.f32.mrf.mxu0
    %v2245 = vadd.f32 %v2076, %v2244
    %2246 = vmatmul.bf16.gmra.mxu0 %v1377
    %v2247 = vpop.f32.mrf.mxu0
    %v2248 = vadd.f32 %v2079, %v2247
    %v2249 = vpop.f32.mrf.mxu0
    %v2250 = vadd.f32 %v2081, %v2249
    %2251 = vmatmul.bf16.gmra.mxu0 %v1381
    %v2252 = vpop.f32.mrf.mxu0
    %v2253 = vadd.f32 %v2084, %v2252
    %v2254 = vpop.f32.mrf.mxu0
    %v2255 = vadd.f32 %v2086, %v2254
    %2256 = vmatmul.bf16.gmra.mxu0 %v1385
    %v2257 = vpop.f32.mrf.mxu0
    %v2258 = vadd.f32 %v2089, %v2257
    %v2259 = vpop.f32.mrf.mxu0
    %v2260 = vadd.f32 %v2091, %v2259
    %2261 = vmatmul.bf16.gmra.mxu0 %v1389
    %v2262 = vpop.f32.mrf.mxu0
    %v2263 = vadd.f32 %v2094, %v2262
    %v2264 = vpop.f32.mrf.mxu0
    %v2265 = vadd.f32 %v2096, %v2264
    %2266 = vmatmul.bf16.gmra.mxu0 %v1393
    %v2267 = vpop.f32.mrf.mxu0
    %v2268 = vadd.f32 %v2099, %v2267
    %v2269 = vpop.f32.mrf.mxu0
    %v2270 = vadd.f32 %v2101, %v2269
    %2271 = vmatmul.bf16.gmra.mxu0 %v1397
    %v2272 = vpop.f32.mrf.mxu0
    %v2273 = vadd.f32 %v2104, %v2272
    %v2274 = vpop.f32.mrf.mxu0
    %v2275 = vadd.f32 %v2106, %v2274
    %2276 = vmatmul.bf16.gmra.mxu0 %v1401
    %v2277 = vpop.f32.mrf.mxu0
    %v2278 = vadd.f32 %v2109, %v2277
    %v2279 = vpop.f32.mrf.mxu0
    %v2280 = vadd.f32 %v2111, %v2279
    %2281 = vmatmul.bf16.gmra.mxu0 %v1405
    %v2282 = vpop.f32.mrf.mxu0
    %v2283 = vadd.f32 %v2114, %v2282
    %v2284 = vpop.f32.mrf.mxu0
    %v2285 = vadd.f32 %v2116, %v2284
    %2286 = vmatmul.bf16.gmra.mxu0 %v1409
    %v2287 = vpop.f32.mrf.mxu0
    %v2288 = vadd.f32 %v2119, %v2287
    %v2289 = vpop.f32.mrf.mxu0
    %v2290 = vadd.f32 %v2121, %v2289
    %2291 = vmatmul.bf16.gmra.mxu0 %v1413
    %v2292 = vpop.f32.mrf.mxu0
    %v2293 = vadd.f32 %v2124, %v2292
    %v2294 = vpop.f32.mrf.mxu0
    %v2295 = vadd.f32 %v2126, %v2294
    %2296 = vmatmul.bf16.gmra.mxu0 %v1417
    %v2297 = vpop.f32.mrf.mxu0
    %v2298 = vadd.f32 %v2129, %v2297
    %v2299 = vpop.f32.mrf.mxu0
    %v2300 = vadd.f32 %v2131, %v2299
    %2301 = vmatmul.bf16.gmra.mxu0 %v1421
    %v2302 = vpop.f32.mrf.mxu0
    %v2303 = vadd.f32 %v2134, %v2302
    %v2304 = vpop.f32.mrf.mxu0
    %v2305 = vadd.f32 %v2136, %v2304
    %2306 = vmatmul.bf16.gmra.mxu0 %v1425
    %v2307 = vpop.f32.mrf.mxu0
    %v2308 = vadd.f32 %v2139, %v2307
    %v2309 = vpop.f32.mrf.mxu0
    %v2310 = vadd.f32 %v2141, %v2309
    %2311 = vmatmul.bf16.gmra.mxu0 %v1429
    %v2312 = vpop.f32.mrf.mxu0
    %v2313 = vadd.f32 %v2144, %v2312
    %v2314 = vpop.f32.mrf.mxu0
    %v2315 = vadd.f32 %v2146, %v2314
    %2316 = vmatmul.bf16.gmra.mxu0 %v1433
    %v2317 = vpop.f32.mrf.mxu0
    %v2318 = vadd.f32 %v2149, %v2317
    %v2319 = vpop.f32.mrf.mxu0
    %v2320 = vadd.f32 %v2151, %v2319
    %2321 = vmatmul.bf16.gmra.mxu0 %v1437
    %v2322 = vpop.f32.mrf.mxu0
    %v2323 = vadd.f32 %v2154, %v2322
    %v2324 = vpop.f32.mrf.mxu0
    %v2325 = vadd.f32 %v2156, %v2324
    %2326 = vmatmul.bf16.gmra.mxu0 %v1441
    %v2327 = vpop.f32.mrf.mxu0
    %v2328 = vadd.f32 %v2159, %v2327
    %v2329 = vpop.f32.mrf.mxu0
    %v2330 = vadd.f32 %v2161, %v2329
    %2331 = vmatmul.bf16.gmra.mxu0 %v1445
    %v2332 = vpop.f32.mrf.mxu0
    %v2333 = vadd.f32 %v2164, %v2332
    %v2334 = vpop.f32.mrf.mxu0
    %v2335 = vadd.f32 %v2166, %v2334
    %2336 = vmatmul.bf16.gmra.mxu0 %v1449
    %v2337 = vpop.f32.mrf.mxu0
    %v2338 = vadd.f32 %v2169, %v2337
    %v2339 = vpop.f32.mrf.mxu0
    %v2340 = vadd.f32 %v2171, %v2339
    %2341 = vmatmul.bf16.gmra.mxu0 %v1453
    %v2342 = vpop.f32.mrf.mxu0
    %v2343 = vadd.f32 %v2174, %v2342
    %v2344 = vpop.f32.mrf.mxu0
    %v2345 = vadd.f32 %v2176, %v2344
    %2346 = vmatmul.bf16.gmra.mxu0 %v1457
    %v2347 = vpop.f32.mrf.mxu0
    %v2348 = vadd.f32 %v2179, %v2347
    %v2349 = vpop.f32.mrf.mxu0
    %v2350 = vadd.f32 %v2181, %v2349
    %2351 = vmatmul.bf16.gmra.mxu0 %v1461
    %v2352 = vpop.f32.mrf.mxu0
    %v2353 = vadd.f32 %v2184, %v2352
    %v2354 = vpop.f32.mrf.mxu0
    %v2355 = vadd.f32 %v2186, %v2354
    %2356 = vmatmul.bf16.gmra.mxu0 %v1465
    %v2357 = vpop.f32.mrf.mxu0
    %v2358 = vadd.f32 %v2189, %v2357
    %v2359 = vpop.f32.mrf.mxu0
    %v2360 = vadd.f32 %v2191, %v2359
    %2361 = vmatmul.bf16.gmra.mxu0 %v1469
    %v2362 = vpop.f32.mrf.mxu0
    %v2363 = vadd.f32 %v2194, %v2362
    %v2364 = vpop.f32.mrf.mxu0
    %v2365 = vadd.f32 %v2196, %v2364
    %2366 = vmatmul.bf16.gmra.mxu0 %v1473
    %v2367 = vpop.f32.mrf.mxu0
    %v2368 = vadd.f32 %v2199, %v2367
    %v2369 = vpop.f32.mrf.mxu0
    %v2370 = vadd.f32 %v2201, %v2369
    %2371 = vdwg.mxu0
    %2372 = vmatpush.bf16.msra.mxu0 %v1799
    %2373 = vmatpush.bf16.msra.mxu0 %v1797
    %2374 = vmatpush.bf16.msra.mxu0 %v1795
    %2375 = vmatpush.bf16.msra.mxu0 %v1793
    %2376 = vmatpush.bf16.msra.mxu0 %v1791
    %2377 = vmatpush.bf16.msra.mxu0 %v1789
    %2378 = vmatpush.bf16.msra.mxu0 %v1787
    %2379 = vmatpush.bf16.msra.mxu0 %v1785
    %2380 = vmatmul.bf16.gmra.mxu0 %v1350
    %v2381 = vpop.f32.mrf.mxu0
    %v2382 = vadd.f32 %v2213, %v2381
    %v2383 = vpop.f32.mrf.mxu0
    %v2384 = vadd.f32 %v2215, %v2383
    %2385 = vmatmul.bf16.gmra.mxu0 %v1354
    %v2386 = vpop.f32.mrf.mxu0
    %v2387 = vadd.f32 %v2218, %v2386
    %v2388 = vpop.f32.mrf.mxu0
    %v2389 = vadd.f32 %v2220, %v2388
    %2390 = vmatmul.bf16.gmra.mxu0 %v1358
    %v2391 = vpop.f32.mrf.mxu0
    %v2392 = vadd.f32 %v2223, %v2391
    %v2393 = vpop.f32.mrf.mxu0
    %v2394 = vadd.f32 %v2225, %v2393
    %2395 = vmatmul.bf16.gmra.mxu0 %v1362
    %v2396 = vpop.f32.mrf.mxu0
    %v2397 = vadd.f32 %v2228, %v2396
    %v2398 = vpop.f32.mrf.mxu0
    %v2399 = vadd.f32 %v2230, %v2398
    %2400 = vmatmul.bf16.gmra.mxu0 %v1366
    %v2401 = vpop.f32.mrf.mxu0
    %v2402 = vadd.f32 %v2233, %v2401
    %v2403 = vpop.f32.mrf.mxu0
    %v2404 = vadd.f32 %v2235, %v2403
    %2405 = vmatmul.bf16.gmra.mxu0 %v1370
    %v2406 = vpop.f32.mrf.mxu0
    %v2407 = vadd.f32 %v2238, %v2406
    %v2408 = vpop.f32.mrf.mxu0
    %v2409 = vadd.f32 %v2240, %v2408
    %2410 = vmatmul.bf16.gmra.mxu0 %v1374
    %v2411 = vpop.f32.mrf.mxu0
    %v2412 = vadd.f32 %v2243, %v2411
    %v2413 = vpop.f32.mrf.mxu0
    %v2414 = vadd.f32 %v2245, %v2413
    %2415 = vmatmul.bf16.gmra.mxu0 %v1378
    %v2416 = vpop.f32.mrf.mxu0
    %v2417 = vadd.f32 %v2248, %v2416
    %v2418 = vpop.f32.mrf.mxu0
    %v2419 = vadd.f32 %v2250, %v2418
    %2420 = vmatmul.bf16.gmra.mxu0 %v1382
    %v2421 = vpop.f32.mrf.mxu0
    %v2422 = vadd.f32 %v2253, %v2421
    %v2423 = vpop.f32.mrf.mxu0
    %v2424 = vadd.f32 %v2255, %v2423
    %2425 = vmatmul.bf16.gmra.mxu0 %v1386
    %v2426 = vpop.f32.mrf.mxu0
    %v2427 = vadd.f32 %v2258, %v2426
    %v2428 = vpop.f32.mrf.mxu0
    %v2429 = vadd.f32 %v2260, %v2428
    %2430 = vmatmul.bf16.gmra.mxu0 %v1390
    %v2431 = vpop.f32.mrf.mxu0
    %v2432 = vadd.f32 %v2263, %v2431
    %v2433 = vpop.f32.mrf.mxu0
    %v2434 = vadd.f32 %v2265, %v2433
    %2435 = vmatmul.bf16.gmra.mxu0 %v1394
    %v2436 = vpop.f32.mrf.mxu0
    %v2437 = vadd.f32 %v2268, %v2436
    %v2438 = vpop.f32.mrf.mxu0
    %v2439 = vadd.f32 %v2270, %v2438
    %2440 = vmatmul.bf16.gmra.mxu0 %v1398
    %v2441 = vpop.f32.mrf.mxu0
    %v2442 = vadd.f32 %v2273, %v2441
    %v2443 = vpop.f32.mrf.mxu0
    %v2444 = vadd.f32 %v2275, %v2443
    %2445 = vmatmul.bf16.gmra.mxu0 %v1402
    %v2446 = vpop.f32.mrf.mxu0
    %v2447 = vadd.f32 %v2278, %v2446
    %v2448 = vpop.f32.mrf.mxu0
    %v2449 = vadd.f32 %v2280, %v2448
    %2450 = vmatmul.bf16.gmra.mxu0 %v1406
    %v2451 = vpop.f32.mrf.mxu0
    %v2452 = vadd.f32 %v2283, %v2451
    %v2453 = vpop.f32.mrf.mxu0
    %v2454 = vadd.f32 %v2285, %v2453
    %2455 = vmatmul.bf16.gmra.mxu0 %v1410
    %v2456 = vpop.f32.mrf.mxu0
    %v2457 = vadd.f32 %v2288, %v2456
    %v2458 = vpop.f32.mrf.mxu0
    %v2459 = vadd.f32 %v2290, %v2458
    %2460 = vmatmul.bf16.gmra.mxu0 %v1414
    %v2461 = vpop.f32.mrf.mxu0
    %v2462 = vadd.f32 %v2293, %v2461
    %v2463 = vpop.f32.mrf.mxu0
    %v2464 = vadd.f32 %v2295, %v2463
    %2465 = vmatmul.bf16.gmra.mxu0 %v1418
    %v2466 = vpop.f32.mrf.mxu0
    %v2467 = vadd.f32 %v2298, %v2466
    %v2468 = vpop.f32.mrf.mxu0
    %v2469 = vadd.f32 %v2300, %v2468
    %2470 = vmatmul.bf16.gmra.mxu0 %v1422
    %v2471 = vpop.f32.mrf.mxu0
    %v2472 = vadd.f32 %v2303, %v2471
    %v2473 = vpop.f32.mrf.mxu0
    %v2474 = vadd.f32 %v2305, %v2473
    %2475 = vmatmul.bf16.gmra.mxu0 %v1426
    %v2476 = vpop.f32.mrf.mxu0
    %v2477 = vadd.f32 %v2308, %v2476
    %v2478 = vpop.f32.mrf.mxu0
    %v2479 = vadd.f32 %v2310, %v2478
    %2480 = vmatmul.bf16.gmra.mxu0 %v1430
    %v2481 = vpop.f32.mrf.mxu0
    %v2482 = vadd.f32 %v2313, %v2481
    %v2483 = vpop.f32.mrf.mxu0
    %v2484 = vadd.f32 %v2315, %v2483
    %2485 = vmatmul.bf16.gmra.mxu0 %v1434
    %v2486 = vpop.f32.mrf.mxu0
    %v2487 = vadd.f32 %v2318, %v2486
    %v2488 = vpop.f32.mrf.mxu0
    %v2489 = vadd.f32 %v2320, %v2488
    %2490 = vmatmul.bf16.gmra.mxu0 %v1438
    %v2491 = vpop.f32.mrf.mxu0
    %v2492 = vadd.f32 %v2323, %v2491
    %v2493 = vpop.f32.mrf.mxu0
    %v2494 = vadd.f32 %v2325, %v2493
    %2495 = vmatmul.bf16.gmra.mxu0 %v1442
    %v2496 = vpop.f32.mrf.mxu0
    %v2497 = vadd.f32 %v2328, %v2496
    %v2498 = vpop.f32.mrf.mxu0
    %v2499 = vadd.f32 %v2330, %v2498
    %2500 = vmatmul.bf16.gmra.mxu0 %v1446
    %v2501 = vpop.f32.mrf.mxu0
    %v2502 = vadd.f32 %v2333, %v2501
    %v2503 = vpop.f32.mrf.mxu0
    %v2504 = vadd.f32 %v2335, %v2503
    %2505 = vmatmul.bf16.gmra.mxu0 %v1450
    %v2506 = vpop.f32.mrf.mxu0
    %v2507 = vadd.f32 %v2338, %v2506
    %v2508 = vpop.f32.mrf.mxu0
    %v2509 = vadd.f32 %v2340, %v2508
    %2510 = vmatmul.bf16.gmra.mxu0 %v1454
    %v2511 = vpop.f32.mrf.mxu0
    %v2512 = vadd.f32 %v2343, %v2511
    %v2513 = vpop.f32.mrf.mxu0
    %v2514 = vadd.f32 %v2345, %v2513
    %2515 = vmatmul.bf16.gmra.mxu0 %v1458
    %v2516 = vpop.f32.mrf.mxu0
    %v2517 = vadd.f32 %v2348, %v2516
    %v2518 = vpop.f32.mrf.mxu0
    %v2519 = vadd.f32 %v2350, %v2518
    %2520 = vmatmul.bf16.gmra.mxu0 %v1462
    %v2521 = vpop.f32.mrf.mxu0
    %v2522 = vadd.f32 %v2353, %v2521
    %v2523 = vpop.f32.mrf.mxu0
    %v2524 = vadd.f32 %v2355, %v2523
    %2525 = vmatmul.bf16.gmra.mxu0 %v1466
    %v2526 = vpop.f32.mrf.mxu0
    %v2527 = vadd.f32 %v2358, %v2526
    %v2528 = vpop.f32.mrf.mxu0
    %v2529 = vadd.f32 %v2360, %v2528
    %2530 = vmatmul.bf16.gmra.mxu0 %v1470
    %v2531 = vpop.f32.mrf.mxu0
    %v2532 = vadd.f32 %v2363, %v2531
    %v2533 = vpop.f32.mrf.mxu0
    %v2534 = vadd.f32 %v2365, %v2533
    %2535 = vmatmul.bf16.gmra.mxu0 %v1474
    %v2536 = vpop.f32.mrf.mxu0
    %v2537 = vadd.f32 %v2368, %v2536
    %v2538 = vpop.f32.mrf.mxu0
    %v2539 = vadd.f32 %v2370, %v2538
    %2540 = vdwg.mxu0
    %2541 = vmatpush.bf16.msra.mxu0 %v1752
    %2542 = vmatpush.bf16.msra.mxu0 %v1750
    %2543 = vmatpush.bf16.msra.mxu0 %v1748
    %2544 = vmatpush.bf16.msra.mxu0 %v1746
    %2545 = vmatpush.bf16.msra.mxu0 %v1744
    %2546 = vmatpush.bf16.msra.mxu0 %v1742
    %2547 = vmatpush.bf16.msra.mxu0 %v1740
    %2548 = vmatpush.bf16.msra.mxu0 %v1738
    %2549 = vmatmul.bf16.gmra.mxu0 %v1347
    %v2550 = vpop.f32.mrf.mxu0
    %v2551 = vadd.f32 %v1542, %v2550
    %v2552 = vpop.f32.mrf.mxu0
    %v2553 = vadd.f32 %v1542, %v2552
    %2554 = vmatmul.bf16.gmra.mxu0 %v1351
    %v2555 = vpop.f32.mrf.mxu0
    %v2556 = vadd.f32 %v1542, %v2555
    %v2557 = vpop.f32.mrf.mxu0
    %v2558 = vadd.f32 %v1542, %v2557
    %2559 = vmatmul.bf16.gmra.mxu0 %v1355
    %v2560 = vpop.f32.mrf.mxu0
    %v2561 = vadd.f32 %v1542, %v2560
    %v2562 = vpop.f32.mrf.mxu0
    %v2563 = vadd.f32 %v1542, %v2562
    %2564 = vmatmul.bf16.gmra.mxu0 %v1359
    %v2565 = vpop.f32.mrf.mxu0
    %v2566 = vadd.f32 %v1542, %v2565
    %v2567 = vpop.f32.mrf.mxu0
    %v2568 = vadd.f32 %v1542, %v2567
    %2569 = vmatmul.bf16.gmra.mxu0 %v1363
    %v2570 = vpop.f32.mrf.mxu0
    %v2571 = vadd.f32 %v1542, %v2570
    %v2572 = vpop.f32.mrf.mxu0
    %v2573 = vadd.f32 %v1542, %v2572
    %2574 = vmatmul.bf16.gmra.mxu0 %v1367
    %v2575 = vpop.f32.mrf.mxu0
    %v2576 = vadd.f32 %v1542, %v2575
    %v2577 = vpop.f32.mrf.mxu0
    %v2578 = vadd.f32 %v1542, %v2577
    %2579 = vmatmul.bf16.gmra.mxu0 %v1371
    %v2580 = vpop.f32.mrf.mxu0
    %v2581 = vadd.f32 %v1542, %v2580
    %v2582 = vpop.f32.mrf.mxu0
    %v2583 = vadd.f32 %v1542, %v2582
    %2584 = vmatmul.bf16.gmra.mxu0 %v1375
    %v2585 = vpop.f32.mrf.mxu0
    %v2586 = vadd.f32 %v1542, %v2585
    %v2587 = vpop.f32.mrf.mxu0
    %v2588 = vadd.f32 %v1542, %v2587
    %2589 = vmatmul.bf16.gmra.mxu0 %v1379
    %v2590 = vpop.f32.mrf.mxu0
    %v2591 = vadd.f32 %v1542, %v2590
    %v2592 = vpop.f32.mrf.mxu0
    %v2593 = vadd.f32 %v1542, %v2592
    %2594 = vmatmul.bf16.gmra.mxu0 %v1383
    %v2595 = vpop.f32.mrf.mxu0
    %v2596 = vadd.f32 %v1542, %v2595
    %v2597 = vpop.f32.mrf.mxu0
    %v2598 = vadd.f32 %v1542, %v2597
    %2599 = vmatmul.bf16.gmra.mxu0 %v1387
    %v2600 = vpop.f32.mrf.mxu0
    %v2601 = vadd.f32 %v1542, %v2600
    %v2602 = vpop.f32.mrf.mxu0
    %v2603 = vadd.f32 %v1542, %v2602
    %2604 = vmatmul.bf16.gmra.mxu0 %v1391
    %v2605 = vpop.f32.mrf.mxu0
    %v2606 = vadd.f32 %v1542, %v2605
    %v2607 = vpop.f32.mrf.mxu0
    %v2608 = vadd.f32 %v1542, %v2607
    %2609 = vmatmul.bf16.gmra.mxu0 %v1395
    %v2610 = vpop.f32.mrf.mxu0
    %v2611 = vadd.f32 %v1542, %v2610
    %v2612 = vpop.f32.mrf.mxu0
    %v2613 = vadd.f32 %v1542, %v2612
    %2614 = vmatmul.bf16.gmra.mxu0 %v1399
    %v2615 = vpop.f32.mrf.mxu0
    %v2616 = vadd.f32 %v1542, %v2615
    %v2617 = vpop.f32.mrf.mxu0
    %v2618 = vadd.f32 %v1542, %v2617
    %2619 = vmatmul.bf16.gmra.mxu0 %v1403
    %v2620 = vpop.f32.mrf.mxu0
    %v2621 = vadd.f32 %v1542, %v2620
    %v2622 = vpop.f32.mrf.mxu0
    %v2623 = vadd.f32 %v1542, %v2622
    %2624 = vmatmul.bf16.gmra.mxu0 %v1407
    %v2625 = vpop.f32.mrf.mxu0
    %v2626 = vadd.f32 %v1542, %v2625
    %v2627 = vpop.f32.mrf.mxu0
    %v2628 = vadd.f32 %v1542, %v2627
    %2629 = vmatmul.bf16.gmra.mxu0 %v1411
    %v2630 = vpop.f32.mrf.mxu0
    %v2631 = vadd.f32 %v1542, %v2630
    %v2632 = vpop.f32.mrf.mxu0
    %v2633 = vadd.f32 %v1542, %v2632
    %2634 = vmatmul.bf16.gmra.mxu0 %v1415
    %v2635 = vpop.f32.mrf.mxu0
    %v2636 = vadd.f32 %v1542, %v2635
    %v2637 = vpop.f32.mrf.mxu0
    %v2638 = vadd.f32 %v1542, %v2637
    %2639 = vmatmul.bf16.gmra.mxu0 %v1419
    %v2640 = vpop.f32.mrf.mxu0
    %v2641 = vadd.f32 %v1542, %v2640
    %v2642 = vpop.f32.mrf.mxu0
    %v2643 = vadd.f32 %v1542, %v2642
    %2644 = vmatmul.bf16.gmra.mxu0 %v1423
    %v2645 = vpop.f32.mrf.mxu0
    %v2646 = vadd.f32 %v1542, %v2645
    %v2647 = vpop.f32.mrf.mxu0
    %v2648 = vadd.f32 %v1542, %v2647
    %2649 = vmatmul.bf16.gmra.mxu0 %v1427
    %v2650 = vpop.f32.mrf.mxu0
    %v2651 = vadd.f32 %v1542, %v2650
    %v2652 = vpop.f32.mrf.mxu0
    %v2653 = vadd.f32 %v1542, %v2652
    %2654 = vmatmul.bf16.gmra.mxu0 %v1431
    %v2655 = vpop.f32.mrf.mxu0
    %v2656 = vadd.f32 %v1542, %v2655
    %v2657 = vpop.f32.mrf.mxu0
    %v2658 = vadd.f32 %v1542, %v2657
    %2659 = vmatmul.bf16.gmra.mxu0 %v1435
    %v2660 = vpop.f32.mrf.mxu0
    %v2661 = vadd.f32 %v1542, %v2660
    %v2662 = vpop.f32.mrf.mxu0
    %v2663 = vadd.f32 %v1542, %v2662
    %2664 = vmatmul.bf16.gmra.mxu0 %v1439
    %v2665 = vpop.f32.mrf.mxu0
    %v2666 = vadd.f32 %v1542, %v2665
    %v2667 = vpop.f32.mrf.mxu0
    %v2668 = vadd.f32 %v1542, %v2667
    %2669 = vmatmul.bf16.gmra.mxu0 %v1443
    %v2670 = vpop.f32.mrf.mxu0
    %v2671 = vadd.f32 %v1542, %v2670
    %v2672 = vpop.f32.mrf.mxu0
    %v2673 = vadd.f32 %v1542, %v2672
    %2674 = vmatmul.bf16.gmra.mxu0 %v1447
    %v2675 = vpop.f32.mrf.mxu0
    %v2676 = vadd.f32 %v1542, %v2675
    %v2677 = vpop.f32.mrf.mxu0
    %v2678 = vadd.f32 %v1542, %v2677
    %2679 = vmatmul.bf16.gmra.mxu0 %v1451
    %v2680 = vpop.f32.mrf.mxu0
    %v2681 = vadd.f32 %v1542, %v2680
    %v2682 = vpop.f32.mrf.mxu0
    %v2683 = vadd.f32 %v1542, %v2682
    %2684 = vmatmul.bf16.gmra.mxu0 %v1455
    %v2685 = vpop.f32.mrf.mxu0
    %v2686 = vadd.f32 %v1542, %v2685
    %v2687 = vpop.f32.mrf.mxu0
    %v2688 = vadd.f32 %v1542, %v2687
    %2689 = vmatmul.bf16.gmra.mxu0 %v1459
    %v2690 = vpop.f32.mrf.mxu0
    %v2691 = vadd.f32 %v1542, %v2690
    %v2692 = vpop.f32.mrf.mxu0
    %v2693 = vadd.f32 %v1542, %v2692
    %2694 = vmatmul.bf16.gmra.mxu0 %v1463
    %v2695 = vpop.f32.mrf.mxu0
    %v2696 = vadd.f32 %v1542, %v2695
    %v2697 = vpop.f32.mrf.mxu0
    %v2698 = vadd.f32 %v1542, %v2697
    %2699 = vmatmul.bf16.gmra.mxu0 %v1467
    %v2700 = vpop.f32.mrf.mxu0
    %v2701 = vadd.f32 %v1542, %v2700
    %v2702 = vpop.f32.mrf.mxu0
    %v2703 = vadd.f32 %v1542, %v2702
    %2704 = vmatmul.bf16.gmra.mxu0 %v1471
    %v2705 = vpop.f32.mrf.mxu0
    %v2706 = vadd.f32 %v1542, %v2705
    %v2707 = vpop.f32.mrf.mxu0
    %v2708 = vadd.f32 %v1542, %v2707
    %2709 = vdwg.mxu0
    %2710 = vmatpush.bf16.msra.mxu0 %v1768
    %2711 = vmatpush.bf16.msra.mxu0 %v1766
    %2712 = vmatpush.bf16.msra.mxu0 %v1764
    %2713 = vmatpush.bf16.msra.mxu0 %v1762
    %2714 = vmatpush.bf16.msra.mxu0 %v1760
    %2715 = vmatpush.bf16.msra.mxu0 %v1758
    %2716 = vmatpush.bf16.msra.mxu0 %v1756
    %2717 = vmatpush.bf16.msra.mxu0 %v1754
    %2718 = vmatmul.bf16.gmra.mxu0 %v1348
    %v2719 = vpop.f32.mrf.mxu0
    %v2720 = vadd.f32 %v2551, %v2719
    %v2721 = vpop.f32.mrf.mxu0
    %v2722 = vadd.f32 %v2553, %v2721
    %2723 = vmatmul.bf16.gmra.mxu0 %v1352
    %v2724 = vpop.f32.mrf.mxu0
    %v2725 = vadd.f32 %v2556, %v2724
    %v2726 = vpop.f32.mrf.mxu0
    %v2727 = vadd.f32 %v2558, %v2726
    %2728 = vmatmul.bf16.gmra.mxu0 %v1356
    %v2729 = vpop.f32.mrf.mxu0
    %v2730 = vadd.f32 %v2561, %v2729
    %v2731 = vpop.f32.mrf.mxu0
    %v2732 = vadd.f32 %v2563, %v2731
    %2733 = vmatmul.bf16.gmra.mxu0 %v1360
    %v2734 = vpop.f32.mrf.mxu0
    %v2735 = vadd.f32 %v2566, %v2734
    %v2736 = vpop.f32.mrf.mxu0
    %v2737 = vadd.f32 %v2568, %v2736
    %2738 = vmatmul.bf16.gmra.mxu0 %v1364
    %v2739 = vpop.f32.mrf.mxu0
    %v2740 = vadd.f32 %v2571, %v2739
    %v2741 = vpop.f32.mrf.mxu0
    %v2742 = vadd.f32 %v2573, %v2741
    %2743 = vmatmul.bf16.gmra.mxu0 %v1368
    %v2744 = vpop.f32.mrf.mxu0
    %v2745 = vadd.f32 %v2576, %v2744
    %v2746 = vpop.f32.mrf.mxu0
    %v2747 = vadd.f32 %v2578, %v2746
    %2748 = vmatmul.bf16.gmra.mxu0 %v1372
    %v2749 = vpop.f32.mrf.mxu0
    %v2750 = vadd.f32 %v2581, %v2749
    %v2751 = vpop.f32.mrf.mxu0
    %v2752 = vadd.f32 %v2583, %v2751
    %2753 = vmatmul.bf16.gmra.mxu0 %v1376
    %v2754 = vpop.f32.mrf.mxu0
    %v2755 = vadd.f32 %v2586, %v2754
    %v2756 = vpop.f32.mrf.mxu0
    %v2757 = vadd.f32 %v2588, %v2756
    %2758 = vmatmul.bf16.gmra.mxu0 %v1380
    %v2759 = vpop.f32.mrf.mxu0
    %v2760 = vadd.f32 %v2591, %v2759
    %v2761 = vpop.f32.mrf.mxu0
    %v2762 = vadd.f32 %v2593, %v2761
    %2763 = vmatmul.bf16.gmra.mxu0 %v1384
    %v2764 = vpop.f32.mrf.mxu0
    %v2765 = vadd.f32 %v2596, %v2764
    %v2766 = vpop.f32.mrf.mxu0
    %v2767 = vadd.f32 %v2598, %v2766
    %2768 = vmatmul.bf16.gmra.mxu0 %v1388
    %v2769 = vpop.f32.mrf.mxu0
    %v2770 = vadd.f32 %v2601, %v2769
    %v2771 = vpop.f32.mrf.mxu0
    %v2772 = vadd.f32 %v2603, %v2771
    %2773 = vmatmul.bf16.gmra.mxu0 %v1392
    %v2774 = vpop.f32.mrf.mxu0
    %v2775 = vadd.f32 %v2606, %v2774
    %v2776 = vpop.f32.mrf.mxu0
    %v2777 = vadd.f32 %v2608, %v2776
    %2778 = vmatmul.bf16.gmra.mxu0 %v1396
    %v2779 = vpop.f32.mrf.mxu0
    %v2780 = vadd.f32 %v2611, %v2779
    %v2781 = vpop.f32.mrf.mxu0
    %v2782 = vadd.f32 %v2613, %v2781
    %2783 = vmatmul.bf16.gmra.mxu0 %v1400
    %v2784 = vpop.f32.mrf.mxu0
    %v2785 = vadd.f32 %v2616, %v2784
    %v2786 = vpop.f32.mrf.mxu0
    %v2787 = vadd.f32 %v2618, %v2786
    %2788 = vmatmul.bf16.gmra.mxu0 %v1404
    %v2789 = vpop.f32.mrf.mxu0
    %v2790 = vadd.f32 %v2621, %v2789
    %v2791 = vpop.f32.mrf.mxu0
    %v2792 = vadd.f32 %v2623, %v2791
    %2793 = vmatmul.bf16.gmra.mxu0 %v1408
    %v2794 = vpop.f32.mrf.mxu0
    %v2795 = vadd.f32 %v2626, %v2794
    %v2796 = vpop.f32.mrf.mxu0
    %v2797 = vadd.f32 %v2628, %v2796
    %2798 = vmatmul.bf16.gmra.mxu0 %v1412
    %v2799 = vpop.f32.mrf.mxu0
    %v2800 = vadd.f32 %v2631, %v2799
    %v2801 = vpop.f32.mrf.mxu0
    %v2802 = vadd.f32 %v2633, %v2801
    %2803 = vmatmul.bf16.gmra.mxu0 %v1416
    %v2804 = vpop.f32.mrf.mxu0
    %v2805 = vadd.f32 %v2636, %v2804
    %v2806 = vpop.f32.mrf.mxu0
    %v2807 = vadd.f32 %v2638, %v2806
    %2808 = vmatmul.bf16.gmra.mxu0 %v1420
    %v2809 = vpop.f32.mrf.mxu0
    %v2810 = vadd.f32 %v2641, %v2809
    %v2811 = vpop.f32.mrf.mxu0
    %v2812 = vadd.f32 %v2643, %v2811
    %2813 = vmatmul.bf16.gmra.mxu0 %v1424
    %v2814 = vpop.f32.mrf.mxu0
    %v2815 = vadd.f32 %v2646, %v2814
    %v2816 = vpop.f32.mrf.mxu0
    %v2817 = vadd.f32 %v2648, %v2816
    %2818 = vmatmul.bf16.gmra.mxu0 %v1428
    %v2819 = vpop.f32.mrf.mxu0
    %v2820 = vadd.f32 %v2651, %v2819
    %v2821 = vpop.f32.mrf.mxu0
    %v2822 = vadd.f32 %v2653, %v2821
    %2823 = vmatmul.bf16.gmra.mxu0 %v1432
    %v2824 = vpop.f32.mrf.mxu0
    %v2825 = vadd.f32 %v2656, %v2824
    %v2826 = vpop.f32.mrf.mxu0
    %v2827 = vadd.f32 %v2658, %v2826
    %2828 = vmatmul.bf16.gmra.mxu0 %v1436
    %v2829 = vpop.f32.mrf.mxu0
    %v2830 = vadd.f32 %v2661, %v2829
    %v2831 = vpop.f32.mrf.mxu0
    %v2832 = vadd.f32 %v2663, %v2831
    %2833 = vmatmul.bf16.gmra.mxu0 %v1440
    %v2834 = vpop.f32.mrf.mxu0
    %v2835 = vadd.f32 %v2666, %v2834
    %v2836 = vpop.f32.mrf.mxu0
    %v2837 = vadd.f32 %v2668, %v2836
    %2838 = vmatmul.bf16.gmra.mxu0 %v1444
    %v2839 = vpop.f32.mrf.mxu0
    %v2840 = vadd.f32 %v2671, %v2839
    %v2841 = vpop.f32.mrf.mxu0
    %v2842 = vadd.f32 %v2673, %v2841
    %2843 = vmatmul.bf16.gmra.mxu0 %v1448
    %v2844 = vpop.f32.mrf.mxu0
    %v2845 = vadd.f32 %v2676, %v2844
    %v2846 = vpop.f32.mrf.mxu0
    %v2847 = vadd.f32 %v2678, %v2846
    %2848 = vmatmul.bf16.gmra.mxu0 %v1452
    %v2849 = vpop.f32.mrf.mxu0
    %v2850 = vadd.f32 %v2681, %v2849
    %v2851 = vpop.f32.mrf.mxu0
    %v2852 = vadd.f32 %v2683, %v2851
    %2853 = vmatmul.bf16.gmra.mxu0 %v1456
    %v2854 = vpop.f32.mrf.mxu0
    %v2855 = vadd.f32 %v2686, %v2854
    %v2856 = vpop.f32.mrf.mxu0
    %v2857 = vadd.f32 %v2688, %v2856
    %2858 = vmatmul.bf16.gmra.mxu0 %v1460
    %v2859 = vpop.f32.mrf.mxu0
    %v2860 = vadd.f32 %v2691, %v2859
    %v2861 = vpop.f32.mrf.mxu0
    %v2862 = vadd.f32 %v2693, %v2861
    %2863 = vmatmul.bf16.gmra.mxu0 %v1464
    %v2864 = vpop.f32.mrf.mxu0
    %v2865 = vadd.f32 %v2696, %v2864
    %v2866 = vpop.f32.mrf.mxu0
    %v2867 = vadd.f32 %v2698, %v2866
    %2868 = vmatmul.bf16.gmra.mxu0 %v1468
    %v2869 = vpop.f32.mrf.mxu0
    %v2870 = vadd.f32 %v2701, %v2869
    %v2871 = vpop.f32.mrf.mxu0
    %v2872 = vadd.f32 %v2703, %v2871
    %2873 = vmatmul.bf16.gmra.mxu0 %v1472
    %v2874 = vpop.f32.mrf.mxu0
    %v2875 = vadd.f32 %v2706, %v2874
    %v2876 = vpop.f32.mrf.mxu0
    %v2877 = vadd.f32 %v2708, %v2876
    %2878 = vdwg.mxu0
    %2879 = vmatpush.bf16.msra.mxu0 %v1784
    %2880 = vmatpush.bf16.msra.mxu0 %v1782
    %2881 = vmatpush.bf16.msra.mxu0 %v1780
    %2882 = vmatpush.bf16.msra.mxu0 %v1778
    %2883 = vmatpush.bf16.msra.mxu0 %v1776
    %2884 = vmatpush.bf16.msra.mxu0 %v1774
    %2885 = vmatpush.bf16.msra.mxu0 %v1772
    %2886 = vmatpush.bf16.msra.mxu0 %v1770
    %2887 = vmatmul.bf16.gmra.mxu0 %v1349
    %v2888 = vpop.f32.mrf.mxu0
    %v2889 = vadd.f32 %v2720, %v2888
    %v2890 = vpop.f32.mrf.mxu0
    %v2891 = vadd.f32 %v2722, %v2890
    %2892 = vmatmul.bf16.gmra.mxu0 %v1353
    %v2893 = vpop.f32.mrf.mxu0
    %v2894 = vadd.f32 %v2725, %v2893
    %v2895 = vpop.f32.mrf.mxu0
    %v2896 = vadd.f32 %v2727, %v2895
    %2897 = vmatmul.bf16.gmra.mxu0 %v1357
    %v2898 = vpop.f32.mrf.mxu0
    %v2899 = vadd.f32 %v2730, %v2898
    %v2900 = vpop.f32.mrf.mxu0
    %v2901 = vadd.f32 %v2732, %v2900
    %2902 = vmatmul.bf16.gmra.mxu0 %v1361
    %v2903 = vpop.f32.mrf.mxu0
    %v2904 = vadd.f32 %v2735, %v2903
    %v2905 = vpop.f32.mrf.mxu0
    %v2906 = vadd.f32 %v2737, %v2905
    %2907 = vmatmul.bf16.gmra.mxu0 %v1365
    %v2908 = vpop.f32.mrf.mxu0
    %v2909 = vadd.f32 %v2740, %v2908
    %v2910 = vpop.f32.mrf.mxu0
    %v2911 = vadd.f32 %v2742, %v2910
    %2912 = vmatmul.bf16.gmra.mxu0 %v1369
    %v2913 = vpop.f32.mrf.mxu0
    %v2914 = vadd.f32 %v2745, %v2913
    %v2915 = vpop.f32.mrf.mxu0
    %v2916 = vadd.f32 %v2747, %v2915
    %2917 = vmatmul.bf16.gmra.mxu0 %v1373
    %v2918 = vpop.f32.mrf.mxu0
    %v2919 = vadd.f32 %v2750, %v2918
    %v2920 = vpop.f32.mrf.mxu0
    %v2921 = vadd.f32 %v2752, %v2920
    %2922 = vmatmul.bf16.gmra.mxu0 %v1377
    %v2923 = vpop.f32.mrf.mxu0
    %v2924 = vadd.f32 %v2755, %v2923
    %v2925 = vpop.f32.mrf.mxu0
    %v2926 = vadd.f32 %v2757, %v2925
    %2927 = vmatmul.bf16.gmra.mxu0 %v1381
    %v2928 = vpop.f32.mrf.mxu0
    %v2929 = vadd.f32 %v2760, %v2928
    %v2930 = vpop.f32.mrf.mxu0
    %v2931 = vadd.f32 %v2762, %v2930
    %2932 = vmatmul.bf16.gmra.mxu0 %v1385
    %v2933 = vpop.f32.mrf.mxu0
    %v2934 = vadd.f32 %v2765, %v2933
    %v2935 = vpop.f32.mrf.mxu0
    %v2936 = vadd.f32 %v2767, %v2935
    %2937 = vmatmul.bf16.gmra.mxu0 %v1389
    %v2938 = vpop.f32.mrf.mxu0
    %v2939 = vadd.f32 %v2770, %v2938
    %v2940 = vpop.f32.mrf.mxu0
    %v2941 = vadd.f32 %v2772, %v2940
    %2942 = vmatmul.bf16.gmra.mxu0 %v1393
    %v2943 = vpop.f32.mrf.mxu0
    %v2944 = vadd.f32 %v2775, %v2943
    %v2945 = vpop.f32.mrf.mxu0
    %v2946 = vadd.f32 %v2777, %v2945
    %2947 = vmatmul.bf16.gmra.mxu0 %v1397
    %v2948 = vpop.f32.mrf.mxu0
    %v2949 = vadd.f32 %v2780, %v2948
    %v2950 = vpop.f32.mrf.mxu0
    %v2951 = vadd.f32 %v2782, %v2950
    %2952 = vmatmul.bf16.gmra.mxu0 %v1401
    %v2953 = vpop.f32.mrf.mxu0
    %v2954 = vadd.f32 %v2785, %v2953
    %v2955 = vpop.f32.mrf.mxu0
    %v2956 = vadd.f32 %v2787, %v2955
    %2957 = vmatmul.bf16.gmra.mxu0 %v1405
    %v2958 = vpop.f32.mrf.mxu0
    %v2959 = vadd.f32 %v2790, %v2958
    %v2960 = vpop.f32.mrf.mxu0
    %v2961 = vadd.f32 %v2792, %v2960
    %2962 = vmatmul.bf16.gmra.mxu0 %v1409
    %v2963 = vpop.f32.mrf.mxu0
    %v2964 = vadd.f32 %v2795, %v2963
    %v2965 = vpop.f32.mrf.mxu0
    %v2966 = vadd.f32 %v2797, %v2965
    %2967 = vmatmul.bf16.gmra.mxu0 %v1413
    %v2968 = vpop.f32.mrf.mxu0
    %v2969 = vadd.f32 %v2800, %v2968
    %v2970 = vpop.f32.mrf.mxu0
    %v2971 = vadd.f32 %v2802, %v2970
    %2972 = vmatmul.bf16.gmra.mxu0 %v1417
    %v2973 = vpop.f32.mrf.mxu0
    %v2974 = vadd.f32 %v2805, %v2973
    %v2975 = vpop.f32.mrf.mxu0
    %v2976 = vadd.f32 %v2807, %v2975
    %2977 = vmatmul.bf16.gmra.mxu0 %v1421
    %v2978 = vpop.f32.mrf.mxu0
    %v2979 = vadd.f32 %v2810, %v2978
    %v2980 = vpop.f32.mrf.mxu0
    %v2981 = vadd.f32 %v2812, %v2980
    %2982 = vmatmul.bf16.gmra.mxu0 %v1425
    %v2983 = vpop.f32.mrf.mxu0
    %v2984 = vadd.f32 %v2815, %v2983
    %v2985 = vpop.f32.mrf.mxu0
    %v2986 = vadd.f32 %v2817, %v2985
    %2987 = vmatmul.bf16.gmra.mxu0 %v1429
    %v2988 = vpop.f32.mrf.mxu0
    %v2989 = vadd.f32 %v2820, %v2988
    %v2990 = vpop.f32.mrf.mxu0
    %v2991 = vadd.f32 %v2822, %v2990
    %2992 = vmatmul.bf16.gmra.mxu0 %v1433
    %v2993 = vpop.f32.mrf.mxu0
    %v2994 = vadd.f32 %v2825, %v2993
    %v2995 = vpop.f32.mrf.mxu0
    %v2996 = vadd.f32 %v2827, %v2995
    %2997 = vmatmul.bf16.gmra.mxu0 %v1437
    %v2998 = vpop.f32.mrf.mxu0
    %v2999 = vadd.f32 %v2830, %v2998
    %v3000 = vpop.f32.mrf.mxu0
    %v3001 = vadd.f32 %v2832, %v3000
    %3002 = vmatmul.bf16.gmra.mxu0 %v1441
    %v3003 = vpop.f32.mrf.mxu0
    %v3004 = vadd.f32 %v2835, %v3003
    %v3005 = vpop.f32.mrf.mxu0
    %v3006 = vadd.f32 %v2837, %v3005
    %3007 = vmatmul.bf16.gmra.mxu0 %v1445
    %v3008 = vpop.f32.mrf.mxu0
    %v3009 = vadd.f32 %v2840, %v3008
    %v3010 = vpop.f32.mrf.mxu0
    %v3011 = vadd.f32 %v2842, %v3010
    %3012 = vmatmul.bf16.gmra.mxu0 %v1449
    %v3013 = vpop.f32.mrf.mxu0
    %v3014 = vadd.f32 %v2845, %v3013
    %v3015 = vpop.f32.mrf.mxu0
    %v3016 = vadd.f32 %v2847, %v3015
    %3017 = vmatmul.bf16.gmra.mxu0 %v1453
    %v3018 = vpop.f32.mrf.mxu0
    %v3019 = vadd.f32 %v2850, %v3018
    %v3020 = vpop.f32.mrf.mxu0
    %v3021 = vadd.f32 %v2852, %v3020
    %3022 = vmatmul.bf16.gmra.mxu0 %v1457
    %v3023 = vpop.f32.mrf.mxu0
    %v3024 = vadd.f32 %v2855, %v3023
    %v3025 = vpop.f32.mrf.mxu0
    %v3026 = vadd.f32 %v2857, %v3025
    %3027 = vmatmul.bf16.gmra.mxu0 %v1461
    %v3028 = vpop.f32.mrf.mxu0
    %v3029 = vadd.f32 %v2860, %v3028
    %v3030 = vpop.f32.mrf.mxu0
    %v3031 = vadd.f32 %v2862, %v3030
    %3032 = vmatmul.bf16.gmra.mxu0 %v1465
    %v3033 = vpop.f32.mrf.mxu0
    %v3034 = vadd.f32 %v2865, %v3033
    %v3035 = vpop.f32.mrf.mxu0
    %v3036 = vadd.f32 %v2867, %v3035
    %3037 = vmatmul.bf16.gmra.mxu0 %v1469
    %v3038 = vpop.f32.mrf.mxu0
    %v3039 = vadd.f32 %v2870, %v3038
    %v3040 = vpop.f32.mrf.mxu0
    %v3041 = vadd.f32 %v2872, %v3040
    %3042 = vmatmul.bf16.gmra.mxu0 %v1473
    %v3043 = vpop.f32.mrf.mxu0
    %v3044 = vadd.f32 %v2875, %v3043
    %v3045 = vpop.f32.mrf.mxu0
    %v3046 = vadd.f32 %v2877, %v3045
    %3047 = vdwg.mxu0
    %3048 = vmatpush.bf16.msra.mxu0 %v1800
    %3049 = vmatpush.bf16.msra.mxu0 %v1798
    %3050 = vmatpush.bf16.msra.mxu0 %v1796
    %3051 = vmatpush.bf16.msra.mxu0 %v1794
    %3052 = vmatpush.bf16.msra.mxu0 %v1792
    %3053 = vmatpush.bf16.msra.mxu0 %v1790
    %3054 = vmatpush.bf16.msra.mxu0 %v1788
    %3055 = vmatpush.bf16.msra.mxu0 %v1786
    %3056 = vmatmul.bf16.gmra.mxu0 %v1350
    %v3057 = vpop.f32.mrf.mxu0
    %v3058 = vadd.f32 %v2889, %v3057
    %v3059 = vpop.f32.mrf.mxu0
    %v3060 = vadd.f32 %v2891, %v3059
    %3061 = vmatmul.bf16.gmra.mxu0 %v1354
    %v3062 = vpop.f32.mrf.mxu0
    %v3063 = vadd.f32 %v2894, %v3062
    %v3064 = vpop.f32.mrf.mxu0
    %v3065 = vadd.f32 %v2896, %v3064
    %3066 = vmatmul.bf16.gmra.mxu0 %v1358
    %v3067 = vpop.f32.mrf.mxu0
    %v3068 = vadd.f32 %v2899, %v3067
    %v3069 = vpop.f32.mrf.mxu0
    %v3070 = vadd.f32 %v2901, %v3069
    %3071 = vmatmul.bf16.gmra.mxu0 %v1362
    %v3072 = vpop.f32.mrf.mxu0
    %v3073 = vadd.f32 %v2904, %v3072
    %v3074 = vpop.f32.mrf.mxu0
    %v3075 = vadd.f32 %v2906, %v3074
    %3076 = vmatmul.bf16.gmra.mxu0 %v1366
    %v3077 = vpop.f32.mrf.mxu0
    %v3078 = vadd.f32 %v2909, %v3077
    %v3079 = vpop.f32.mrf.mxu0
    %v3080 = vadd.f32 %v2911, %v3079
    %3081 = vmatmul.bf16.gmra.mxu0 %v1370
    %v3082 = vpop.f32.mrf.mxu0
    %v3083 = vadd.f32 %v2914, %v3082
    %v3084 = vpop.f32.mrf.mxu0
    %v3085 = vadd.f32 %v2916, %v3084
    %3086 = vmatmul.bf16.gmra.mxu0 %v1374
    %v3087 = vpop.f32.mrf.mxu0
    %v3088 = vadd.f32 %v2919, %v3087
    %v3089 = vpop.f32.mrf.mxu0
    %v3090 = vadd.f32 %v2921, %v3089
    %3091 = vmatmul.bf16.gmra.mxu0 %v1378
    %v3092 = vpop.f32.mrf.mxu0
    %v3093 = vadd.f32 %v2924, %v3092
    %v3094 = vpop.f32.mrf.mxu0
    %v3095 = vadd.f32 %v2926, %v3094
    %3096 = vmatmul.bf16.gmra.mxu0 %v1382
    %v3097 = vpop.f32.mrf.mxu0
    %v3098 = vadd.f32 %v2929, %v3097
    %v3099 = vpop.f32.mrf.mxu0
    %v3100 = vadd.f32 %v2931, %v3099
    %3101 = vmatmul.bf16.gmra.mxu0 %v1386
    %v3102 = vpop.f32.mrf.mxu0
    %v3103 = vadd.f32 %v2934, %v3102
    %v3104 = vpop.f32.mrf.mxu0
    %v3105 = vadd.f32 %v2936, %v3104
    %3106 = vmatmul.bf16.gmra.mxu0 %v1390
    %v3107 = vpop.f32.mrf.mxu0
    %v3108 = vadd.f32 %v2939, %v3107
    %v3109 = vpop.f32.mrf.mxu0
    %v3110 = vadd.f32 %v2941, %v3109
    %3111 = vmatmul.bf16.gmra.mxu0 %v1394
    %v3112 = vpop.f32.mrf.mxu0
    %v3113 = vadd.f32 %v2944, %v3112
    %v3114 = vpop.f32.mrf.mxu0
    %v3115 = vadd.f32 %v2946, %v3114
    %3116 = vmatmul.bf16.gmra.mxu0 %v1398
    %v3117 = vpop.f32.mrf.mxu0
    %v3118 = vadd.f32 %v2949, %v3117
    %v3119 = vpop.f32.mrf.mxu0
    %v3120 = vadd.f32 %v2951, %v3119
    %3121 = vmatmul.bf16.gmra.mxu0 %v1402
    %v3122 = vpop.f32.mrf.mxu0
    %v3123 = vadd.f32 %v2954, %v3122
    %v3124 = vpop.f32.mrf.mxu0
    %v3125 = vadd.f32 %v2956, %v3124
    %3126 = vmatmul.bf16.gmra.mxu0 %v1406
    %v3127 = vpop.f32.mrf.mxu0
    %v3128 = vadd.f32 %v2959, %v3127
    %v3129 = vpop.f32.mrf.mxu0
    %v3130 = vadd.f32 %v2961, %v3129
    %3131 = vmatmul.bf16.gmra.mxu0 %v1410
    %v3132 = vpop.f32.mrf.mxu0
    %v3133 = vadd.f32 %v2964, %v3132
    %v3134 = vpop.f32.mrf.mxu0
    %v3135 = vadd.f32 %v2966, %v3134
    %3136 = vmatmul.bf16.gmra.mxu0 %v1414
    %v3137 = vpop.f32.mrf.mxu0
    %v3138 = vadd.f32 %v2969, %v3137
    %v3139 = vpop.f32.mrf.mxu0
    %v3140 = vadd.f32 %v2971, %v3139
    %3141 = vmatmul.bf16.gmra.mxu0 %v1418
    %v3142 = vpop.f32.mrf.mxu0
    %v3143 = vadd.f32 %v2974, %v3142
    %v3144 = vpop.f32.mrf.mxu0
    %v3145 = vadd.f32 %v2976, %v3144
    %3146 = vmatmul.bf16.gmra.mxu0 %v1422
    %v3147 = vpop.f32.mrf.mxu0
    %v3148 = vadd.f32 %v2979, %v3147
    %v3149 = vpop.f32.mrf.mxu0
    %v3150 = vadd.f32 %v2981, %v3149
    %3151 = vmatmul.bf16.gmra.mxu0 %v1426
    %v3152 = vpop.f32.mrf.mxu0
    %v3153 = vadd.f32 %v2984, %v3152
    %v3154 = vpop.f32.mrf.mxu0
    %v3155 = vadd.f32 %v2986, %v3154
    %3156 = vmatmul.bf16.gmra.mxu0 %v1430
    %v3157 = vpop.f32.mrf.mxu0
    %v3158 = vadd.f32 %v2989, %v3157
    %v3159 = vpop.f32.mrf.mxu0
    %v3160 = vadd.f32 %v2991, %v3159
    %3161 = vmatmul.bf16.gmra.mxu0 %v1434
    %v3162 = vpop.f32.mrf.mxu0
    %v3163 = vadd.f32 %v2994, %v3162
    %v3164 = vpop.f32.mrf.mxu0
    %v3165 = vadd.f32 %v2996, %v3164
    %3166 = vmatmul.bf16.gmra.mxu0 %v1438
    %v3167 = vpop.f32.mrf.mxu0
    %v3168 = vadd.f32 %v2999, %v3167
    %v3169 = vpop.f32.mrf.mxu0
    %v3170 = vadd.f32 %v3001, %v3169
    %3171 = vmatmul.bf16.gmra.mxu0 %v1442
    %v3172 = vpop.f32.mrf.mxu0
    %v3173 = vadd.f32 %v3004, %v3172
    %v3174 = vpop.f32.mrf.mxu0
    %v3175 = vadd.f32 %v3006, %v3174
    %3176 = vmatmul.bf16.gmra.mxu0 %v1446
    %v3177 = vpop.f32.mrf.mxu0
    %v3178 = vadd.f32 %v3009, %v3177
    %v3179 = vpop.f32.mrf.mxu0
    %v3180 = vadd.f32 %v3011, %v3179
    %3181 = vmatmul.bf16.gmra.mxu0 %v1450
    %v3182 = vpop.f32.mrf.mxu0
    %v3183 = vadd.f32 %v3014, %v3182
    %v3184 = vpop.f32.mrf.mxu0
    %v3185 = vadd.f32 %v3016, %v3184
    %3186 = vmatmul.bf16.gmra.mxu0 %v1454
    %v3187 = vpop.f32.mrf.mxu0
    %v3188 = vadd.f32 %v3019, %v3187
    %v3189 = vpop.f32.mrf.mxu0
    %v3190 = vadd.f32 %v3021, %v3189
    %3191 = vmatmul.bf16.gmra.mxu0 %v1458
    %v3192 = vpop.f32.mrf.mxu0
    %v3193 = vadd.f32 %v3024, %v3192
    %v3194 = vpop.f32.mrf.mxu0
    %v3195 = vadd.f32 %v3026, %v3194
    %3196 = vmatmul.bf16.gmra.mxu0 %v1462
    %v3197 = vpop.f32.mrf.mxu0
    %v3198 = vadd.f32 %v3029, %v3197
    %v3199 = vpop.f32.mrf.mxu0
    %v3200 = vadd.f32 %v3031, %v3199
    %3201 = vmatmul.bf16.gmra.mxu0 %v1466
    %v3202 = vpop.f32.mrf.mxu0
    %v3203 = vadd.f32 %v3034, %v3202
    %v3204 = vpop.f32.mrf.mxu0
    %v3205 = vadd.f32 %v3036, %v3204
    %3206 = vmatmul.bf16.gmra.mxu0 %v1470
    %v3207 = vpop.f32.mrf.mxu0
    %v3208 = vadd.f32 %v3039, %v3207
    %v3209 = vpop.f32.mrf.mxu0
    %v3210 = vadd.f32 %v3041, %v3209
    %3211 = vmatmul.bf16.gmra.mxu0 %v1474
    %v3212 = vpop.f32.mrf.mxu0
    %v3213 = vadd.f32 %v3044, %v3212
    %v3214 = vpop.f32.mrf.mxu0
    %v3215 = vadd.f32 %v3046, %v3214
    %3216 = vdwg.mxu0
    %v3217 = vmax.f32 %v2382, 0.0
    %v3218 = vmax.f32 %v3058, 0.0
    %v3219 = vmax.f32 %v2384, 0.0
    %v3220 = vmax.f32 %v3060, 0.0
    %v3221 = vmax.f32 %v2387, 0.0
    %v3222 = vmax.f32 %v3063, 0.0
    %v3223 = vmax.f32 %v2389, 0.0
    %v3224 = vmax.f32 %v3065, 0.0
    %v3225 = vmax.f32 %v2392, 0.0
    %v3226 = vmax.f32 %v3068, 0.0
    %v3227 = vmax.f32 %v2394, 0.0
    %v3228 = vmax.f32 %v3070, 0.0
    %v3229 = vmax.f32 %v2397, 0.0
    %v3230 = vmax.f32 %v3073, 0.0
    %v3231 = vmax.f32 %v2399, 0.0
    %v3232 = vmax.f32 %v3075, 0.0
    %v3233 = vmax.f32 %v2402, 0.0
    %v3234 = vmax.f32 %v3078, 0.0
    %v3235 = vmax.f32 %v2404, 0.0
    %v3236 = vmax.f32 %v3080, 0.0
    %v3237 = vmax.f32 %v2407, 0.0
    %v3238 = vmax.f32 %v3083, 0.0
    %v3239 = vmax.f32 %v2409, 0.0
    %v3240 = vmax.f32 %v3085, 0.0
    %v3241 = vmax.f32 %v2412, 0.0
    %v3242 = vmax.f32 %v3088, 0.0
    %v3243 = vmax.f32 %v2414, 0.0
    %v3244 = vmax.f32 %v3090, 0.0
    %v3245 = vmax.f32 %v2417, 0.0
    %v3246 = vmax.f32 %v3093, 0.0
    %v3247 = vmax.f32 %v2419, 0.0
    %v3248 = vmax.f32 %v3095, 0.0
    %v3249 = vmax.f32 %v2422, 0.0
    %v3250 = vmax.f32 %v3098, 0.0
    %v3251 = vmax.f32 %v2424, 0.0
    %v3252 = vmax.f32 %v3100, 0.0
    %v3253 = vmax.f32 %v2427, 0.0
    %v3254 = vmax.f32 %v3103, 0.0
    %v3255 = vmax.f32 %v2429, 0.0
    %v3256 = vmax.f32 %v3105, 0.0
    %v3257 = vmax.f32 %v2432, 0.0
    %v3258 = vmax.f32 %v3108, 0.0
    %v3259 = vmax.f32 %v2434, 0.0
    %v3260 = vmax.f32 %v3110, 0.0
    %v3261 = vmax.f32 %v2437, 0.0
    %v3262 = vmax.f32 %v3113, 0.0
    %v3263 = vmax.f32 %v2439, 0.0
    %v3264 = vmax.f32 %v3115, 0.0
    %v3265 = vmax.f32 %v2442, 0.0
    %v3266 = vmax.f32 %v3118, 0.0
    %v3267 = vmax.f32 %v2444, 0.0
    %v3268 = vmax.f32 %v3120, 0.0
    %v3269 = vmax.f32 %v2447, 0.0
    %v3270 = vmax.f32 %v3123, 0.0
    %v3271 = vmax.f32 %v2449, 0.0
    %v3272 = vmax.f32 %v3125, 0.0
    %v3273 = vmax.f32 %v2452, 0.0
    %v3274 = vmax.f32 %v3128, 0.0
    %v3275 = vmax.f32 %v2454, 0.0
    %v3276 = vmax.f32 %v3130, 0.0
    %v3277 = vmax.f32 %v2457, 0.0
    %v3278 = vmax.f32 %v3133, 0.0
    %v3279 = vmax.f32 %v2459, 0.0
    %v3280 = vmax.f32 %v3135, 0.0
    %v3281 = vmax.f32 %v2462, 0.0
    %v3282 = vmax.f32 %v3138, 0.0
    %v3283 = vmax.f32 %v2464, 0.0
    %v3284 = vmax.f32 %v3140, 0.0
    %v3285 = vmax.f32 %v2467, 0.0
    %v3286 = vmax.f32 %v3143, 0.0
    %v3287 = vmax.f32 %v2469, 0.0
    %v3288 = vmax.f32 %v3145, 0.0
    %v3289 = vmax.f32 %v2472, 0.0
    %v3290 = vmax.f32 %v3148, 0.0
    %v3291 = vmax.f32 %v2474, 0.0
    %v3292 = vmax.f32 %v3150, 0.0
    %v3293 = vmax.f32 %v2477, 0.0
    %v3294 = vmax.f32 %v3153, 0.0
    %v3295 = vmax.f32 %v2479, 0.0
    %v3296 = vmax.f32 %v3155, 0.0
    %v3297 = vmax.f32 %v2482, 0.0
    %v3298 = vmax.f32 %v3158, 0.0
    %v3299 = vmax.f32 %v2484, 0.0
    %v3300 = vmax.f32 %v3160, 0.0
    %v3301 = vmax.f32 %v2487, 0.0
    %v3302 = vmax.f32 %v3163, 0.0
    %v3303 = vmax.f32 %v2489, 0.0
    %v3304 = vmax.f32 %v3165, 0.0
    %v3305 = vmax.f32 %v2492, 0.0
    %v3306 = vmax.f32 %v3168, 0.0
    %v3307 = vmax.f32 %v2494, 0.0
    %v3308 = vmax.f32 %v3170, 0.0
    %v3309 = vmax.f32 %v2497, 0.0
    %v3310 = vmax.f32 %v3173, 0.0
    %v3311 = vmax.f32 %v2499, 0.0
    %v3312 = vmax.f32 %v3175, 0.0
    %v3313 = vmax.f32 %v2502, 0.0
    %v3314 = vmax.f32 %v3178, 0.0
    %v3315 = vmax.f32 %v2504, 0.0
    %v3316 = vmax.f32 %v3180, 0.0
    %v3317 = vmax.f32 %v2507, 0.0
    %v3318 = vmax.f32 %v3183, 0.0
    %v3319 = vmax.f32 %v2509, 0.0
    %v3320 = vmax.f32 %v3185, 0.0
    %v3321 = vmax.f32 %v2512, 0.0
    %v3322 = vmax.f32 %v3188, 0.0
    %v3323 = vmax.f32 %v2514, 0.0
    %v3324 = vmax.f32 %v3190, 0.0
    %v3325 = vmax.f32 %v2517, 0.0
    %v3326 = vmax.f32 %v3193, 0.0
    %v3327 = vmax.f32 %v2519, 0.0
    %v3328 = vmax.f32 %v3195, 0.0
    %v3329 = vmax.f32 %v2522, 0.0
    %v3330 = vmax.f32 %v3198, 0.0
    %v3331 = vmax.f32 %v2524, 0.0
    %v3332 = vmax.f32 %v3200, 0.0
    %v3333 = vmax.f32 %v2527, 0.0
    %v3334 = vmax.f32 %v3203, 0.0
    %v3335 = vmax.f32 %v2529, 0.0
    %v3336 = vmax.f32 %v3205, 0.0
    %v3337 = vmax.f32 %v2532, 0.0
    %v3338 = vmax.f32 %v3208, 0.0
    %v3339 = vmax.f32 %v2534, 0.0
    %v3340 = vmax.f32 %v3210, 0.0
    %v3341 = vmax.f32 %v2537, 0.0
    %v3342 = vmax.f32 %v3213, 0.0
    %v3343 = vmax.f32 %v2539, 0.0
    %v3344 = vmax.f32 %v3215, 0.0
    %v3345 = vpack.c.bf16 %v3219, %v3217
    %v3346 = vpack.c.bf16 %v3220, %v3218
    %v3347 = vpack.c.bf16 %v3223, %v3221
    %v3348 = vpack.c.bf16 %v3224, %v3222
    %v3349 = vpack.c.bf16 %v3227, %v3225
    %v3350 = vpack.c.bf16 %v3228, %v3226
    %v3351 = vpack.c.bf16 %v3231, %v3229
    %v3352 = vpack.c.bf16 %v3232, %v3230
    %v3353 = vpack.c.bf16 %v3235, %v3233
    %v3354 = vpack.c.bf16 %v3236, %v3234
    %v3355 = vpack.c.bf16 %v3239, %v3237
    %v3356 = vpack.c.bf16 %v3240, %v3238
    %v3357 = vpack.c.bf16 %v3243, %v3241
    %v3358 = vpack.c.bf16 %v3244, %v3242
    %v3359 = vpack.c.bf16 %v3247, %v3245
    %v3360 = vpack.c.bf16 %v3248, %v3246
    %v3361 = vpack.c.bf16 %v3251, %v3249
    %v3362 = vpack.c.bf16 %v3252, %v3250
    %v3363 = vpack.c.bf16 %v3255, %v3253
    %v3364 = vpack.c.bf16 %v3256, %v3254
    %v3365 = vpack.c.bf16 %v3259, %v3257
    %v3366 = vpack.c.bf16 %v3260, %v3258
    %v3367 = vpack.c.bf16 %v3263, %v3261
    %v3368 = vpack.c.bf16 %v3264, %v3262
    %v3369 = vpack.c.bf16 %v3267, %v3265
    %v3370 = vpack.c.bf16 %v3268, %v3266
    %v3371 = vpack.c.bf16 %v3271, %v3269
    %v3372 = vpack.c.bf16 %v3272, %v3270
    %v3373 = vpack.c.bf16 %v3275, %v3273
    %v3374 = vpack.c.bf16 %v3276, %v3274
    %v3375 = vpack.c.bf16 %v3279, %v3277
    %v3376 = vpack.c.bf16 %v3280, %v3278
    %v3377 = vpack.c.bf16 %v3283, %v3281
    %v3378 = vpack.c.bf16 %v3284, %v3282
    %v3379 = vpack.c.bf16 %v3287, %v3285
    %v3380 = vpack.c.bf16 %v3288, %v3286
    %v3381 = vpack.c.bf16 %v3291, %v3289
    %v3382 = vpack.c.bf16 %v3292, %v3290
    %v3383 = vpack.c.bf16 %v3295, %v3293
    %v3384 = vpack.c.bf16 %v3296, %v3294
    %v3385 = vpack.c.bf16 %v3299, %v3297
    %v3386 = vpack.c.bf16 %v3300, %v3298
    %v3387 = vpack.c.bf16 %v3303, %v3301
    %v3388 = vpack.c.bf16 %v3304, %v3302
    %v3389 = vpack.c.bf16 %v3307, %v3305
    %v3390 = vpack.c.bf16 %v3308, %v3306
    %v3391 = vpack.c.bf16 %v3311, %v3309
    %v3392 = vpack.c.bf16 %v3312, %v3310
    %v3393 = vpack.c.bf16 %v3315, %v3313
    %v3394 = vpack.c.bf16 %v3316, %v3314
    %v3395 = vpack.c.bf16 %v3319, %v3317
    %v3396 = vpack.c.bf16 %v3320, %v3318
    %v3397 = vpack.c.bf16 %v3323, %v3321
    %v3398 = vpack.c.bf16 %v3324, %v3322
    %v3399 = vpack.c.bf16 %v3327, %v3325
    %v3400 = vpack.c.bf16 %v3328, %v3326
    %v3401 = vpack.c.bf16 %v3331, %v3329
    %v3402 = vpack.c.bf16 %v3332, %v3330
    %v3403 = vpack.c.bf16 %v3335, %v3333
    %v3404 = vpack.c.bf16 %v3336, %v3334
    %v3405 = vpack.c.bf16 %v3339, %v3337
    %v3406 = vpack.c.bf16 %v3340, %v3338
    %v3407 = vpack.c.bf16 %v3343, %v3341
    %v3408 = vpack.c.bf16 %v3344, %v3342
    %v3409 = vld [vmem:[%s5] sm:$0xf]
    %v3410 = vld [vmem:[%s5 + $0x4] sm:$0xf]
    %v3411 = vld [vmem:[%s5 + $0x8] sm:$0xf]
    %v3412 = vld [vmem:[%s5 + $0xc] sm:$0xf]
    %v3413 = vld [vmem:[%s5 + $0x10] sm:$0xf]
    %v3414 = vld [vmem:[%s5 + $0x14] sm:$0xf]
    %v3415 = vld [vmem:[%s5 + $0x18] sm:$0xf]
    %v3416 = vld [vmem:[%s5 + $0x1c] sm:$0xf]
    %v3417 = vld [vmem:[%s5 + $0x20] sm:$0xf]
    %v3418 = vld [vmem:[%s5 + $0x24] sm:$0xf]
    %v3419 = vld [vmem:[%s5 + $0x28] sm:$0xf]
    %v3420 = vld [vmem:[%s5 + $0x2c] sm:$0xf]
    %v3421 = vld [vmem:[%s5 + $0x30] sm:$0xf]
    %v3422 = vld [vmem:[%s5 + $0x34] sm:$0xf]
    %v3423 = vld [vmem:[%s5 + $0x38] sm:$0xf]
    %v3424 = vld [vmem:[%s5 + $0x3c] sm:$0xf]
    %v3425 = vld [vmem:[%s5 + $0x40] sm:$0xf]
    %v3426 = vld [vmem:[%s5 + $0x44] sm:$0xf]
    %v3427 = vld [vmem:[%s5 + $0x48] sm:$0xf]
    %v3428 = vld [vmem:[%s5 + $0x4c] sm:$0xf]
    %v3429 = vld [vmem:[%s5 + $0x50] sm:$0xf]
    %v3430 = vld [vmem:[%s5 + $0x54] sm:$0xf]
    %v3431 = vld [vmem:[%s5 + $0x58] sm:$0xf]
    %v3432 = vld [vmem:[%s5 + $0x5c] sm:$0xf]
    %v3433 = vld [vmem:[%s5 + $0x60] sm:$0xf]
    %v3434 = vld [vmem:[%s5 + $0x64] sm:$0xf]
    %v3435 = vld [vmem:[%s5 + $0x68] sm:$0xf]
    %v3436 = vld [vmem:[%s5 + $0x6c] sm:$0xf]
    %v3437 = vld [vmem:[%s5 + $0x70] sm:$0xf]
    %v3438 = vld [vmem:[%s5 + $0x74] sm:$0xf]
    %v3439 = vld [vmem:[%s5 + $0x78] sm:$0xf]
    %v3440 = vld [vmem:[%s5 + $0x7c] sm:$0xf]
    %v3441 = vld [vmem:[%s6] sm:$0x1]
    %v3443 = vperm.slane %v3441, 0
    %v3477 = vunpack.c.l.b16 %v3409
    %v3478 = vunpack.c.l.b16 %v3410
    %v3479 = vunpack.c.l.b16 %v3411
    %v3480 = vunpack.c.l.b16 %v3412
    %v3481 = vunpack.c.l.b16 %v3413
    %v3482 = vunpack.c.l.b16 %v3414
    %v3483 = vunpack.c.l.b16 %v3415
    %v3484 = vunpack.c.l.b16 %v3416
    %v3485 = vunpack.c.l.b16 %v3417
    %v3486 = vunpack.c.l.b16 %v3418
    %v3487 = vunpack.c.l.b16 %v3419
    %v3488 = vunpack.c.l.b16 %v3420
    %v3489 = vunpack.c.l.b16 %v3421
    %v3490 = vunpack.c.l.b16 %v3422
    %v3491 = vunpack.c.l.b16 %v3423
    %v3492 = vunpack.c.l.b16 %v3424
    %v3493 = vunpack.c.l.b16 %v3425
    %v3494 = vunpack.c.l.b16 %v3426
    %v3495 = vunpack.c.l.b16 %v3427
    %v3496 = vunpack.c.l.b16 %v3428
    %v3497 = vunpack.c.l.b16 %v3429
    %v3498 = vunpack.c.l.b16 %v3430
    %v3499 = vunpack.c.l.b16 %v3431
    %v3500 = vunpack.c.l.b16 %v3432
    %v3501 = vunpack.c.l.b16 %v3433
    %v3502 = vunpack.c.l.b16 %v3434
    %v3503 = vunpack.c.l.b16 %v3435
    %v3504 = vunpack.c.l.b16 %v3436
    %v3505 = vunpack.c.l.b16 %v3437
    %v3506 = vunpack.c.l.b16 %v3438
    %v3507 = vunpack.c.l.b16 %v3439
    %v3508 = vunpack.c.l.b16 %v3440
    %v3509 = vpack.c.b16 %v3478, %v3477
    %v3510 = vpack.c.b16 %v3480, %v3479
    %v3511 = vpack.c.b16 %v3482, %v3481
    %v3512 = vpack.c.b16 %v3484, %v3483
    %v3513 = vpack.c.b16 %v3486, %v3485
    %v3514 = vpack.c.b16 %v3488, %v3487
    %v3515 = vpack.c.b16 %v3490, %v3489
    %v3516 = vpack.c.b16 %v3492, %v3491
    %v3517 = vpack.c.b16 %v3494, %v3493
    %v3518 = vpack.c.b16 %v3496, %v3495
    %v3519 = vpack.c.b16 %v3498, %v3497
    %v3520 = vpack.c.b16 %v3500, %v3499
    %v3521 = vpack.c.b16 %v3502, %v3501
    %v3522 = vpack.c.b16 %v3504, %v3503
    %v3523 = vpack.c.b16 %v3506, %v3505
    %v3524 = vpack.c.b16 %v3508, %v3507
    %3541 = vmatpush.bf16.msra.mxu0 %v3516
    %3542 = vmatpush.bf16.msra.mxu0 %v3515
    %3543 = vmatpush.bf16.msra.mxu0 %v3514
    %3544 = vmatpush.bf16.msra.mxu0 %v3513
    %3545 = vmatpush.bf16.msra.mxu0 %v3512
    %3546 = vmatpush.bf16.msra.mxu0 %v3511
    %3547 = vmatpush.bf16.msra.mxu0 %v3510
    %3548 = vmatpush.bf16.msra.mxu0 %v3509
    %3549 = vmatmul.bf16.gmra.mxu0 %v3345
    %v3550 = vpop.f32.mrf.mxu0
    %v3551 = vadd.f32 %v3443, %v3550
    %v3552 = vpop.f32.mrf.mxu0
    %v3553 = vadd.f32 %v3443, %v3552
    %3554 = vmatmul.bf16.gmra.mxu0 %v3347
    %v3555 = vpop.f32.mrf.mxu0
    %v3556 = vadd.f32 %v3443, %v3555
    %v3557 = vpop.f32.mrf.mxu0
    %v3558 = vadd.f32 %v3443, %v3557
    %3559 = vmatmul.bf16.gmra.mxu0 %v3349
    %v3560 = vpop.f32.mrf.mxu0
    %v3561 = vadd.f32 %v3443, %v3560
    %v3562 = vpop.f32.mrf.mxu0
    %v3563 = vadd.f32 %v3443, %v3562
    %3564 = vmatmul.bf16.gmra.mxu0 %v3351
    %v3565 = vpop.f32.mrf.mxu0
    %v3566 = vadd.f32 %v3443, %v3565
    %v3567 = vpop.f32.mrf.mxu0
    %v3568 = vadd.f32 %v3443, %v3567
    %3569 = vmatmul.bf16.gmra.mxu0 %v3353
    %v3570 = vpop.f32.mrf.mxu0
    %v3571 = vadd.f32 %v3443, %v3570
    %v3572 = vpop.f32.mrf.mxu0
    %v3573 = vadd.f32 %v3443, %v3572
    %3574 = vmatmul.bf16.gmra.mxu0 %v3355
    %v3575 = vpop.f32.mrf.mxu0
    %v3576 = vadd.f32 %v3443, %v3575
    %v3577 = vpop.f32.mrf.mxu0
    %v3578 = vadd.f32 %v3443, %v3577
    %3579 = vmatmul.bf16.gmra.mxu0 %v3357
    %v3580 = vpop.f32.mrf.mxu0
    %v3581 = vadd.f32 %v3443, %v3580
    %v3582 = vpop.f32.mrf.mxu0
    %v3583 = vadd.f32 %v3443, %v3582
    %3584 = vmatmul.bf16.gmra.mxu0 %v3359
    %v3585 = vpop.f32.mrf.mxu0
    %v3586 = vadd.f32 %v3443, %v3585
    %v3587 = vpop.f32.mrf.mxu0
    %v3588 = vadd.f32 %v3443, %v3587
    %3589 = vmatmul.bf16.gmra.mxu0 %v3361
    %v3590 = vpop.f32.mrf.mxu0
    %v3591 = vadd.f32 %v3443, %v3590
    %v3592 = vpop.f32.mrf.mxu0
    %v3593 = vadd.f32 %v3443, %v3592
    %3594 = vmatmul.bf16.gmra.mxu0 %v3363
    %v3595 = vpop.f32.mrf.mxu0
    %v3596 = vadd.f32 %v3443, %v3595
    %v3597 = vpop.f32.mrf.mxu0
    %v3598 = vadd.f32 %v3443, %v3597
    %3599 = vmatmul.bf16.gmra.mxu0 %v3365
    %v3600 = vpop.f32.mrf.mxu0
    %v3601 = vadd.f32 %v3443, %v3600
    %v3602 = vpop.f32.mrf.mxu0
    %v3603 = vadd.f32 %v3443, %v3602
    %3604 = vmatmul.bf16.gmra.mxu0 %v3367
    %v3605 = vpop.f32.mrf.mxu0
    %v3606 = vadd.f32 %v3443, %v3605
    %v3607 = vpop.f32.mrf.mxu0
    %v3608 = vadd.f32 %v3443, %v3607
    %3609 = vmatmul.bf16.gmra.mxu0 %v3369
    %v3610 = vpop.f32.mrf.mxu0
    %v3611 = vadd.f32 %v3443, %v3610
    %v3612 = vpop.f32.mrf.mxu0
    %v3613 = vadd.f32 %v3443, %v3612
    %3614 = vmatmul.bf16.gmra.mxu0 %v3371
    %v3615 = vpop.f32.mrf.mxu0
    %v3616 = vadd.f32 %v3443, %v3615
    %v3617 = vpop.f32.mrf.mxu0
    %v3618 = vadd.f32 %v3443, %v3617
    %3619 = vmatmul.bf16.gmra.mxu0 %v3373
    %v3620 = vpop.f32.mrf.mxu0
    %v3621 = vadd.f32 %v3443, %v3620
    %v3622 = vpop.f32.mrf.mxu0
    %v3623 = vadd.f32 %v3443, %v3622
    %3624 = vmatmul.bf16.gmra.mxu0 %v3375
    %v3625 = vpop.f32.mrf.mxu0
    %v3626 = vadd.f32 %v3443, %v3625
    %v3627 = vpop.f32.mrf.mxu0
    %v3628 = vadd.f32 %v3443, %v3627
    %3629 = vmatmul.bf16.gmra.mxu0 %v3377
    %v3630 = vpop.f32.mrf.mxu0
    %v3631 = vadd.f32 %v3443, %v3630
    %v3632 = vpop.f32.mrf.mxu0
    %v3633 = vadd.f32 %v3443, %v3632
    %3634 = vmatmul.bf16.gmra.mxu0 %v3379
    %v3635 = vpop.f32.mrf.mxu0
    %v3636 = vadd.f32 %v3443, %v3635
    %v3637 = vpop.f32.mrf.mxu0
    %v3638 = vadd.f32 %v3443, %v3637
    %3639 = vmatmul.bf16.gmra.mxu0 %v3381
    %v3640 = vpop.f32.mrf.mxu0
    %v3641 = vadd.f32 %v3443, %v3640
    %v3642 = vpop.f32.mrf.mxu0
    %v3643 = vadd.f32 %v3443, %v3642
    %3644 = vmatmul.bf16.gmra.mxu0 %v3383
    %v3645 = vpop.f32.mrf.mxu0
    %v3646 = vadd.f32 %v3443, %v3645
    %v3647 = vpop.f32.mrf.mxu0
    %v3648 = vadd.f32 %v3443, %v3647
    %3649 = vmatmul.bf16.gmra.mxu0 %v3385
    %v3650 = vpop.f32.mrf.mxu0
    %v3651 = vadd.f32 %v3443, %v3650
    %v3652 = vpop.f32.mrf.mxu0
    %v3653 = vadd.f32 %v3443, %v3652
    %3654 = vmatmul.bf16.gmra.mxu0 %v3387
    %v3655 = vpop.f32.mrf.mxu0
    %v3656 = vadd.f32 %v3443, %v3655
    %v3657 = vpop.f32.mrf.mxu0
    %v3658 = vadd.f32 %v3443, %v3657
    %3659 = vmatmul.bf16.gmra.mxu0 %v3389
    %v3660 = vpop.f32.mrf.mxu0
    %v3661 = vadd.f32 %v3443, %v3660
    %v3662 = vpop.f32.mrf.mxu0
    %v3663 = vadd.f32 %v3443, %v3662
    %3664 = vmatmul.bf16.gmra.mxu0 %v3391
    %v3665 = vpop.f32.mrf.mxu0
    %v3666 = vadd.f32 %v3443, %v3665
    %v3667 = vpop.f32.mrf.mxu0
    %v3668 = vadd.f32 %v3443, %v3667
    %3669 = vmatmul.bf16.gmra.mxu0 %v3393
    %v3670 = vpop.f32.mrf.mxu0
    %v3671 = vadd.f32 %v3443, %v3670
    %v3672 = vpop.f32.mrf.mxu0
    %v3673 = vadd.f32 %v3443, %v3672
    %3674 = vmatmul.bf16.gmra.mxu0 %v3395
    %v3675 = vpop.f32.mrf.mxu0
    %v3676 = vadd.f32 %v3443, %v3675
    %v3677 = vpop.f32.mrf.mxu0
    %v3678 = vadd.f32 %v3443, %v3677
    %3679 = vmatmul.bf16.gmra.mxu0 %v3397
    %v3680 = vpop.f32.mrf.mxu0
    %v3681 = vadd.f32 %v3443, %v3680
    %v3682 = vpop.f32.mrf.mxu0
    %v3683 = vadd.f32 %v3443, %v3682
    %3684 = vmatmul.bf16.gmra.mxu0 %v3399
    %v3685 = vpop.f32.mrf.mxu0
    %v3686 = vadd.f32 %v3443, %v3685
    %v3687 = vpop.f32.mrf.mxu0
    %v3688 = vadd.f32 %v3443, %v3687
    %3689 = vmatmul.bf16.gmra.mxu0 %v3401
    %v3690 = vpop.f32.mrf.mxu0
    %v3691 = vadd.f32 %v3443, %v3690
    %v3692 = vpop.f32.mrf.mxu0
    %v3693 = vadd.f32 %v3443, %v3692
    %3694 = vmatmul.bf16.gmra.mxu0 %v3403
    %v3695 = vpop.f32.mrf.mxu0
    %v3696 = vadd.f32 %v3443, %v3695
    %v3697 = vpop.f32.mrf.mxu0
    %v3698 = vadd.f32 %v3443, %v3697
    %3699 = vmatmul.bf16.gmra.mxu0 %v3405
    %v3700 = vpop.f32.mrf.mxu0
    %v3701 = vadd.f32 %v3443, %v3700
    %v3702 = vpop.f32.mrf.mxu0
    %v3703 = vadd.f32 %v3443, %v3702
    %3704 = vmatmul.bf16.gmra.mxu0 %v3407
    %v3705 = vpop.f32.mrf.mxu0
    %v3706 = vadd.f32 %v3443, %v3705
    %v3707 = vpop.f32.mrf.mxu0
    %v3708 = vadd.f32 %v3443, %v3707
    %3709 = vdwg.mxu0
    %3710 = vmatpush.bf16.msra.mxu0 %v3524
    %3711 = vmatpush.bf16.msra.mxu0 %v3523
    %3712 = vmatpush.bf16.msra.mxu0 %v3522
    %3713 = vmatpush.bf16.msra.mxu0 %v3521
    %3714 = vmatpush.bf16.msra.mxu0 %v3520
    %3715 = vmatpush.bf16.msra.mxu0 %v3519
    %3716 = vmatpush.bf16.msra.mxu0 %v3518
    %3717 = vmatpush.bf16.msra.mxu0 %v3517
    %3718 = vmatmul.bf16.gmra.mxu0 %v3346
    %v3719 = vpop.f32.mrf.mxu0
    %v3720 = vadd.f32 %v3551, %v3719
    %v3721 = vpop.f32.mrf.mxu0
    %v3722 = vadd.f32 %v3553, %v3721
    %3723 = vmatmul.bf16.gmra.mxu0 %v3348
    %v3724 = vpop.f32.mrf.mxu0
    %v3725 = vadd.f32 %v3556, %v3724
    %v3726 = vpop.f32.mrf.mxu0
    %v3727 = vadd.f32 %v3558, %v3726
    %3728 = vmatmul.bf16.gmra.mxu0 %v3350
    %v3729 = vpop.f32.mrf.mxu0
    %v3730 = vadd.f32 %v3561, %v3729
    %v3731 = vpop.f32.mrf.mxu0
    %v3732 = vadd.f32 %v3563, %v3731
    %3733 = vmatmul.bf16.gmra.mxu0 %v3352
    %v3734 = vpop.f32.mrf.mxu0
    %v3735 = vadd.f32 %v3566, %v3734
    %v3736 = vpop.f32.mrf.mxu0
    %v3737 = vadd.f32 %v3568, %v3736
    %3738 = vmatmul.bf16.gmra.mxu0 %v3354
    %v3739 = vpop.f32.mrf.mxu0
    %v3740 = vadd.f32 %v3571, %v3739
    %v3741 = vpop.f32.mrf.mxu0
    %v3742 = vadd.f32 %v3573, %v3741
    %3743 = vmatmul.bf16.gmra.mxu0 %v3356
    %v3744 = vpop.f32.mrf.mxu0
    %v3745 = vadd.f32 %v3576, %v3744
    %v3746 = vpop.f32.mrf.mxu0
    %v3747 = vadd.f32 %v3578, %v3746
    %3748 = vmatmul.bf16.gmra.mxu0 %v3358
    %v3749 = vpop.f32.mrf.mxu0
    %v3750 = vadd.f32 %v3581, %v3749
    %v3751 = vpop.f32.mrf.mxu0
    %v3752 = vadd.f32 %v3583, %v3751
    %3753 = vmatmul.bf16.gmra.mxu0 %v3360
    %v3754 = vpop.f32.mrf.mxu0
    %v3755 = vadd.f32 %v3586, %v3754
    %v3756 = vpop.f32.mrf.mxu0
    %v3757 = vadd.f32 %v3588, %v3756
    %3758 = vmatmul.bf16.gmra.mxu0 %v3362
    %v3759 = vpop.f32.mrf.mxu0
    %v3760 = vadd.f32 %v3591, %v3759
    %v3761 = vpop.f32.mrf.mxu0
    %v3762 = vadd.f32 %v3593, %v3761
    %3763 = vmatmul.bf16.gmra.mxu0 %v3364
    %v3764 = vpop.f32.mrf.mxu0
    %v3765 = vadd.f32 %v3596, %v3764
    %v3766 = vpop.f32.mrf.mxu0
    %v3767 = vadd.f32 %v3598, %v3766
    %3768 = vmatmul.bf16.gmra.mxu0 %v3366
    %v3769 = vpop.f32.mrf.mxu0
    %v3770 = vadd.f32 %v3601, %v3769
    %v3771 = vpop.f32.mrf.mxu0
    %v3772 = vadd.f32 %v3603, %v3771
    %3773 = vmatmul.bf16.gmra.mxu0 %v3368
    %v3774 = vpop.f32.mrf.mxu0
    %v3775 = vadd.f32 %v3606, %v3774
    %v3776 = vpop.f32.mrf.mxu0
    %v3777 = vadd.f32 %v3608, %v3776
    %3778 = vmatmul.bf16.gmra.mxu0 %v3370
    %v3779 = vpop.f32.mrf.mxu0
    %v3780 = vadd.f32 %v3611, %v3779
    %v3781 = vpop.f32.mrf.mxu0
    %v3782 = vadd.f32 %v3613, %v3781
    %3783 = vmatmul.bf16.gmra.mxu0 %v3372
    %v3784 = vpop.f32.mrf.mxu0
    %v3785 = vadd.f32 %v3616, %v3784
    %v3786 = vpop.f32.mrf.mxu0
    %v3787 = vadd.f32 %v3618, %v3786
    %3788 = vmatmul.bf16.gmra.mxu0 %v3374
    %v3789 = vpop.f32.mrf.mxu0
    %v3790 = vadd.f32 %v3621, %v3789
    %v3791 = vpop.f32.mrf.mxu0
    %v3792 = vadd.f32 %v3623, %v3791
    %3793 = vmatmul.bf16.gmra.mxu0 %v3376
    %v3794 = vpop.f32.mrf.mxu0
    %v3795 = vadd.f32 %v3626, %v3794
    %v3796 = vpop.f32.mrf.mxu0
    %v3797 = vadd.f32 %v3628, %v3796
    %3798 = vmatmul.bf16.gmra.mxu0 %v3378
    %v3799 = vpop.f32.mrf.mxu0
    %v3800 = vadd.f32 %v3631, %v3799
    %v3801 = vpop.f32.mrf.mxu0
    %v3802 = vadd.f32 %v3633, %v3801
    %3803 = vmatmul.bf16.gmra.mxu0 %v3380
    %v3804 = vpop.f32.mrf.mxu0
    %v3805 = vadd.f32 %v3636, %v3804
    %v3806 = vpop.f32.mrf.mxu0
    %v3807 = vadd.f32 %v3638, %v3806
    %3808 = vmatmul.bf16.gmra.mxu0 %v3382
    %v3809 = vpop.f32.mrf.mxu0
    %v3810 = vadd.f32 %v3641, %v3809
    %v3811 = vpop.f32.mrf.mxu0
    %v3812 = vadd.f32 %v3643, %v3811
    %3813 = vmatmul.bf16.gmra.mxu0 %v3384
    %v3814 = vpop.f32.mrf.mxu0
    %v3815 = vadd.f32 %v3646, %v3814
    %v3816 = vpop.f32.mrf.mxu0
    %v3817 = vadd.f32 %v3648, %v3816
    %3818 = vmatmul.bf16.gmra.mxu0 %v3386
    %v3819 = vpop.f32.mrf.mxu0
    %v3820 = vadd.f32 %v3651, %v3819
    %v3821 = vpop.f32.mrf.mxu0
    %v3822 = vadd.f32 %v3653, %v3821
    %3823 = vmatmul.bf16.gmra.mxu0 %v3388
    %v3824 = vpop.f32.mrf.mxu0
    %v3825 = vadd.f32 %v3656, %v3824
    %v3826 = vpop.f32.mrf.mxu0
    %v3827 = vadd.f32 %v3658, %v3826
    %3828 = vmatmul.bf16.gmra.mxu0 %v3390
    %v3829 = vpop.f32.mrf.mxu0
    %v3830 = vadd.f32 %v3661, %v3829
    %v3831 = vpop.f32.mrf.mxu0
    %v3832 = vadd.f32 %v3663, %v3831
    %3833 = vmatmul.bf16.gmra.mxu0 %v3392
    %v3834 = vpop.f32.mrf.mxu0
    %v3835 = vadd.f32 %v3666, %v3834
    %v3836 = vpop.f32.mrf.mxu0
    %v3837 = vadd.f32 %v3668, %v3836
    %3838 = vmatmul.bf16.gmra.mxu0 %v3394
    %v3839 = vpop.f32.mrf.mxu0
    %v3840 = vadd.f32 %v3671, %v3839
    %v3841 = vpop.f32.mrf.mxu0
    %v3842 = vadd.f32 %v3673, %v3841
    %3843 = vmatmul.bf16.gmra.mxu0 %v3396
    %v3844 = vpop.f32.mrf.mxu0
    %v3845 = vadd.f32 %v3676, %v3844
    %v3846 = vpop.f32.mrf.mxu0
    %v3847 = vadd.f32 %v3678, %v3846
    %3848 = vmatmul.bf16.gmra.mxu0 %v3398
    %v3849 = vpop.f32.mrf.mxu0
    %v3850 = vadd.f32 %v3681, %v3849
    %v3851 = vpop.f32.mrf.mxu0
    %v3852 = vadd.f32 %v3683, %v3851
    %3853 = vmatmul.bf16.gmra.mxu0 %v3400
    %v3854 = vpop.f32.mrf.mxu0
    %v3855 = vadd.f32 %v3686, %v3854
    %v3856 = vpop.f32.mrf.mxu0
    %v3857 = vadd.f32 %v3688, %v3856
    %3858 = vmatmul.bf16.gmra.mxu0 %v3402
    %v3859 = vpop.f32.mrf.mxu0
    %v3860 = vadd.f32 %v3691, %v3859
    %v3861 = vpop.f32.mrf.mxu0
    %v3862 = vadd.f32 %v3693, %v3861
    %3863 = vmatmul.bf16.gmra.mxu0 %v3404
    %v3864 = vpop.f32.mrf.mxu0
    %v3865 = vadd.f32 %v3696, %v3864
    %v3866 = vpop.f32.mrf.mxu0
    %v3867 = vadd.f32 %v3698, %v3866
    %3868 = vmatmul.bf16.gmra.mxu0 %v3406
    %v3869 = vpop.f32.mrf.mxu0
    %v3870 = vadd.f32 %v3701, %v3869
    %v3871 = vpop.f32.mrf.mxu0
    %v3872 = vadd.f32 %v3703, %v3871
    %3873 = vmatmul.bf16.gmra.mxu0 %v3408
    %v3874 = vpop.f32.mrf.mxu0
    %v3875 = vadd.f32 %v3706, %v3874
    %v3876 = vpop.f32.mrf.mxu0
    %v3877 = vadd.f32 %v3708, %v3876
    %3878 = vdwg.mxu0
    %vm3879 = vcmask 15360
    %3880 = vst.msk [vmem:[%s7] sm:$0xff] %vm3879, %v3720
    %3881 = vst.msk [vmem:[%s7 + $0x8] sm:$0xff] %vm3879, %v3722
    %3882 = vst.msk [vmem:[%s7 + $0x10] sm:$0xff] %vm3879, %v3725
    %3883 = vst.msk [vmem:[%s7 + $0x18] sm:$0xff] %vm3879, %v3727
    %3884 = vst.msk [vmem:[%s7 + $0x20] sm:$0xff] %vm3879, %v3730
    %3885 = vst.msk [vmem:[%s7 + $0x28] sm:$0xff] %vm3879, %v3732
    %3886 = vst.msk [vmem:[%s7 + $0x30] sm:$0xff] %vm3879, %v3735
    %3887 = vst.msk [vmem:[%s7 + $0x38] sm:$0xff] %vm3879, %v3737
    %3888 = vst.msk [vmem:[%s7 + $0x40] sm:$0xff] %vm3879, %v3740
    %3889 = vst.msk [vmem:[%s7 + $0x48] sm:$0xff] %vm3879, %v3742
    %3890 = vst.msk [vmem:[%s7 + $0x50] sm:$0xff] %vm3879, %v3745
    %3891 = vst.msk [vmem:[%s7 + $0x58] sm:$0xff] %vm3879, %v3747
    %3892 = vst.msk [vmem:[%s7 + $0x60] sm:$0xff] %vm3879, %v3750
    %3893 = vst.msk [vmem:[%s7 + $0x68] sm:$0xff] %vm3879, %v3752
    %3894 = vst.msk [vmem:[%s7 + $0x70] sm:$0xff] %vm3879, %v3755
    %3895 = vst.msk [vmem:[%s7 + $0x78] sm:$0xff] %vm3879, %v3757
    %3896 = vst.msk [vmem:[%s7 + $0x80] sm:$0xff] %vm3879, %v3760
    %3897 = vst.msk [vmem:[%s7 + $0x88] sm:$0xff] %vm3879, %v3762
    %3898 = vst.msk [vmem:[%s7 + $0x90] sm:$0xff] %vm3879, %v3765
    %3899 = vst.msk [vmem:[%s7 + $0x98] sm:$0xff] %vm3879, %v3767
    %3900 = vst.msk [vmem:[%s7 + $0xa0] sm:$0xff] %vm3879, %v3770
    %3901 = vst.msk [vmem:[%s7 + $0xa8] sm:$0xff] %vm3879, %v3772
    %3902 = vst.msk [vmem:[%s7 + $0xb0] sm:$0xff] %vm3879, %v3775
    %3903 = vst.msk [vmem:[%s7 + $0xb8] sm:$0xff] %vm3879, %v3777
    %3904 = vst.msk [vmem:[%s7 + $0xc0] sm:$0xff] %vm3879, %v3780
    %3905 = vst.msk [vmem:[%s7 + $0xc8] sm:$0xff] %vm3879, %v3782
    %3906 = vst.msk [vmem:[%s7 + $0xd0] sm:$0xff] %vm3879, %v3785
    %3907 = vst.msk [vmem:[%s7 + $0xd8] sm:$0xff] %vm3879, %v3787
    %3908 = vst.msk [vmem:[%s7 + $0xe0] sm:$0xff] %vm3879, %v3790
    %3909 = vst.msk [vmem:[%s7 + $0xe8] sm:$0xff] %vm3879, %v3792
    %3910 = vst.msk [vmem:[%s7 + $0xf0] sm:$0xff] %vm3879, %v3795
    %3911 = vst.msk [vmem:[%s7 + $0xf8] sm:$0xff] %vm3879, %v3797
    %3912 = vst.msk [vmem:[%s7 + $0x100] sm:$0xff] %vm3879, %v3800
    %3913 = vst.msk [vmem:[%s7 + $0x108] sm:$0xff] %vm3879, %v3802
    %3914 = vst.msk [vmem:[%s7 + $0x110] sm:$0xff] %vm3879, %v3805
    %3915 = vst.msk [vmem:[%s7 + $0x118] sm:$0xff] %vm3879, %v3807
    %3916 = vst.msk [vmem:[%s7 + $0x120] sm:$0xff] %vm3879, %v3810
    %3917 = vst.msk [vmem:[%s7 + $0x128] sm:$0xff] %vm3879, %v3812
    %3918 = vst.msk [vmem:[%s7 + $0x130] sm:$0xff] %vm3879, %v3815
    %3919 = vst.msk [vmem:[%s7 + $0x138] sm:$0xff] %vm3879, %v3817
    %3920 = vst.msk [vmem:[%s7 + $0x140] sm:$0xff] %vm3879, %v3820
    %3921 = vst.msk [vmem:[%s7 + $0x148] sm:$0xff] %vm3879, %v3822
    %3922 = vst.msk [vmem:[%s7 + $0x150] sm:$0xff] %vm3879, %v3825
    %3923 = vst.msk [vmem:[%s7 + $0x158] sm:$0xff] %vm3879, %v3827
    %3924 = vst.msk [vmem:[%s7 + $0x160] sm:$0xff] %vm3879, %v3830
    %3925 = vst.msk [vmem:[%s7 + $0x168] sm:$0xff] %vm3879, %v3832
    %3926 = vst.msk [vmem:[%s7 + $0x170] sm:$0xff] %vm3879, %v3835
    %3927 = vst.msk [vmem:[%s7 + $0x178] sm:$0xff] %vm3879, %v3837
    %3928 = vst.msk [vmem:[%s7 + $0x180] sm:$0xff] %vm3879, %v3840
    %3929 = vst.msk [vmem:[%s7 + $0x188] sm:$0xff] %vm3879, %v3842
    %3930 = vst.msk [vmem:[%s7 + $0x190] sm:$0xff] %vm3879, %v3845
    %3931 = vst.msk [vmem:[%s7 + $0x198] sm:$0xff] %vm3879, %v3847
    %3932 = vst.msk [vmem:[%s7 + $0x1a0] sm:$0xff] %vm3879, %v3850
    %3933 = vst.msk [vmem:[%s7 + $0x1a8] sm:$0xff] %vm3879, %v3852
    %3934 = vst.msk [vmem:[%s7 + $0x1b0] sm:$0xff] %vm3879, %v3855
    %3935 = vst.msk [vmem:[%s7 + $0x1b8] sm:$0xff] %vm3879, %v3857
    %3936 = vst.msk [vmem:[%s7 + $0x1c0] sm:$0xff] %vm3879, %v3860
    %3937 = vst.msk [vmem:[%s7 + $0x1c8] sm:$0xff] %vm3879, %v3862
    %3938 = vst.msk [vmem:[%s7 + $0x1d0] sm:$0xff] %vm3879, %v3865
    %3939 = vst.msk [vmem:[%s7 + $0x1d8] sm:$0xff] %vm3879, %v3867
    %3940 = vst.msk [vmem:[%s7 + $0x1e0] sm:$0xff] %vm3879, %v3870
    %3941 = vst.msk [vmem:[%s7 + $0x1e8] sm:$0xff] %vm3879, %v3872
    %3942 = vst.msk [vmem:[%s7 + $0x1f0] sm:$0xff] %vm3879, %v3875
    %3943 = vst.msk [vmem:[%s7 + $0x1f8] sm:$0xff] %vm3879, %v3877
    // Predicated region
    $region34: #{model_nonlinear_forward.1} parent=1 // pred_check
      _
    $region35: #{model_nonlinear_forward.1} parent=1 // pred_check_branch
      %3945 = sbr.rel (0) target = $region37
    $region36: #{model_nonlinear_forward.1} parent=1 // pred_region
      _
    $region37: #{model_nonlinear_forward.1} parent=1 // pred_fallthru
      _
    // Predicated region
    $region38: #{model_nonlinear_forward.1} parent=1 // pred_check
      _
    $region39: #{model_nonlinear_forward.1} parent=1 // pred_check_branch
      %3947 = sbr.rel (0) target = $region41
    $region40: #{model_nonlinear_forward.1} parent=1 // pred_region
      _
    $region41: #{model_nonlinear_forward.1} parent=1 // pred_fallthru
      _
    %3948 = vsyncpa [#allocation3], 1

</llo_original>
